<compile_context>
chip_gen: v5e
topology: v5e:2x2
jax: 0.10.0
libtpu: 0.0.40
codegen_flags: <defaults>
</compile_context>

<pallas_src>
import jax
import jax.numpy as jnp
from jax.experimental import pallas as pl
from jax.experimental.pallas import tpu as pltpu

# ---- model dims (x_dim is fixed to 9*25*25 by the decoder's .view) ----
X_DIM = 9 * 25 * 25        # 5625
H_DIM1 = 64
H_DIM2 = 32
Z_DIM = 8

_NCHUNK = 9                # softmax groups (channel axis of the 9x25x25 view)
_CHUNK = 25 * 25           # 625 real elements per group
_CHUNK_P = 640             # 5 * 128 lane-aligned padded group width
X_PAD = _NCHUNK * _CHUNK_P  # 5760 = 45 * 128

BATCH = 64                 # demo batch
TILE_B = 8                 # rows per grid step (>=8 fills the sublanes; up to
                           # ~128 still fits comfortably in scoped VMEM)


def _cvae_kernel(
    x_ref, eps_ref,
    w1_ref, b1_ref, w2_ref, b2_ref, w3_ref, b3_ref,
    w4_ref, b4_ref, w5_ref, b5_ref, w6_ref, b6_ref,
    recon_ref, mulv_ref,
    logits_ref,
):
    f32 = jnp.float32
    bf16 = jnp.bfloat16

    # ---------------- encoder ----------------
    # Big matmul: bf16 operands to the MXU, accumulate in f32.  K=5625 is
    # unaligned; the MXU/compiler handles the ragged contraction internally.
    x16 = x_ref[...].astype(bf16)
    h = jnp.dot(x16, w1_ref[...], preferred_element_type=f32) + b1_ref[...]
    h = jnp.maximum(h, 0.0)
    h = jnp.dot(h, w2_ref[...], preferred_element_type=f32) + b2_ref[...]
    h = jnp.maximum(h, 0.0)

    # fc31 | fc32 fused into one (H2, 2*Z) matmul -> packed [mu, log_var].
    mulv = jnp.dot(h, w3_ref[...], preferred_element_type=f32) + b3_ref[...]
    mulv_ref[...] = mulv
    mu = mulv[:, :Z_DIM]
    logvar = mulv[:, Z_DIM:]

    # ---------------- sampling (reparameterization) ----------------
    z = eps_ref[...] * jnp.exp(0.5 * logvar) + mu

    # ---------------- decoder ----------------
    d = jnp.dot(z, w4_ref[...], preferred_element_type=f32) + b4_ref[...]
    d = jnp.maximum(d, 0.0)
    d = jnp.dot(d, w5_ref[...], preferred_element_type=f32) + b5_ref[...]
    d = jnp.maximum(d, 0.0)
    d16 = d.astype(bf16)

    # fc6 + softmax over the 9 "channel" groups (logits.view(-1,9,25,25), dim=1).
    # Group c occupies lane-aligned columns [c*640, (c+1)*640); the softmax is
    # elementwise across the 9 groups at each lane position.  Pad lanes
    # (625:640) only interact with other pad lanes (w6/b6 pads are zero) and are
    # discarded by the wrapper.
    #
    # Pass 1: logits in 3 wide (TB,64)x(64,1920) dots, staged into the f32 VMEM
    # scratch; running per-lane max over the 9 groups.
    GW = 3 * _CHUNK_P
    mx = None
    for g in range(3):
        lo = g * GW
        lg = (jnp.dot(d16, w6_ref[:, lo:lo + GW], preferred_element_type=f32)
              + b6_ref[:, lo:lo + GW])
        logits_ref[:, lo:lo + GW] = lg
        for c in range(3):
            sl = lg[:, c * _CHUNK_P:(c + 1) * _CHUNK_P]
            mx = sl if mx is None else jnp.maximum(mx, sl)

    # Pass 2: exp stored in-place into the scratch while accumulating the denom.
    denom = jnp.zeros_like(mx)
    for c in range(_NCHUNK):
        lo = c * _CHUNK_P
        e = jnp.exp(logits_ref[:, lo:lo + _CHUNK_P] - mx)
        logits_ref[:, lo:lo + _CHUNK_P] = e
        denom = denom + e

    inv = 1.0 / denom          # exact divide (groups sum to 1 exactly in f32)

    # Pass 3: normalize and write bf16 recon.
    for c in range(_NCHUNK):
        lo = c * _CHUNK_P
        recon_ref[:, lo:lo + _CHUNK_P] = (
            logits_ref[:, lo:lo + _CHUNK_P] * inv).astype(recon_ref.dtype)


def _pad_chunks(a, axis):
    """Pad the 9x625 structure along `axis` to 9x640 (zeros)."""
    shape = list(a.shape)
    assert shape[axis] == X_DIM
    new_shape = shape[:axis] + [_NCHUNK, _CHUNK] + shape[axis + 1:]
    pad = [(0, 0)] * len(new_shape)
    pad[axis + 1] = (0, _CHUNK_P - _CHUNK)
    out_shape = shape[:axis] + [X_PAD] + shape[axis + 1:]
    return jnp.pad(a.reshape(new_shape), pad).reshape(out_shape)


def prepare_params(p):
    """One-time conversion of nn.Linear-style params into the kernel layout."""
    return dict(
        w1=p["w1"].astype(jnp.bfloat16),                         # (5625, 64) bf16
        b1=p["b1"],
        w2=p["w2"], b2=p["b2"],
        w3=jnp.concatenate([p["w31"], p["w32"]], axis=1),        # (32, 16)
        b3=jnp.concatenate([p["b31"], p["b32"]], axis=1),        # (1, 16)
        w4=p["w4"], b4=p["b4"],
        w5=p["w5"], b5=p["b5"],
        w6=_pad_chunks(p["w6"], axis=1).astype(jnp.bfloat16),    # (64, 5760) bf16
        b6=_pad_chunks(p["b6"], axis=1),                         # (1, 5760) f32
    )


def cvae_forward(x, eps, kp, *, tb=TILE_B):
    """Whole CVAE forward in one Pallas kernel with a pipelined batch grid.

    x:   (B, X_DIM) float32
    eps: (B, Z_DIM) float32   (the torch.randn_like noise)
    kp:  output of prepare_params()
    """
    B = x.shape[0]
    if B % tb:                                 # pad batch to a tile multiple
        pad = tb - B % tb
        x = jnp.pad(x, ((0, pad), (0, 0)))
        eps = jnp.pad(eps, ((0, pad), (0, 0)))
    Bp = x.shape[0]
    nb = Bp // tb

    def batch_spec(ncols):
        return pl.BlockSpec((tb, ncols), lambda b: (b, 0))

    def const_spec(shape):
        # Constant index_map => block is invariant across the grid: weights are
        # DMA'd once and stay resident in VMEM for all batch tiles.
        return pl.BlockSpec(shape, lambda b: (0,) * len(shape))

    in_specs = [
        batch_spec(X_DIM),                      # x (unpadded K=5625)
        batch_spec(Z_DIM),                      # eps
        const_spec(kp["w1"].shape), const_spec(kp["b1"].shape),
        const_spec(kp["w2"].shape), const_spec(kp["b2"].shape),
        const_spec(kp["w3"].shape), const_spec(kp["b3"].shape),
        const_spec(kp["w4"].shape), const_spec(kp["b4"].shape),
        const_spec(kp["w5"].shape), const_spec(kp["b5"].shape),
        const_spec(kp["w6"].shape), const_spec(kp["b6"].shape),
    ]
    out_specs = (batch_spec(X_PAD), batch_spec(2 * Z_DIM))

    recon_pad, mulv = pl.pallas_call(
        _cvae_kernel,
        grid=(nb,),
        out_shape=(
            jax.ShapeDtypeStruct((Bp, X_PAD), jnp.bfloat16),     # padded recon
            jax.ShapeDtypeStruct((Bp, 2 * Z_DIM), jnp.float32),  # [mu | log_var]
        ),
        in_specs=in_specs,
        out_specs=out_specs,
        scratch_shapes=[pltpu.VMEM((tb, X_PAD), jnp.float32)],   # softmax staging
        compiler_params=pltpu.CompilerParams(
            # Batch tiles are independent -> shard across v7x's 2 TensorCores.
            dimension_semantics=("parallel",),
            # Resident weights (~1.5 MB) + double-buffered tiles (~2 MB at tb=8,
            # ~16 MB at tb=128) fit comfortably; safe on v5e/v6e/v7x.
            vmem_limit_bytes=32 << 20,
        ),
    )(
        x, eps,
        kp["w1"], kp["b1"], kp["w2"], kp["b2"], kp["w3"], kp["b3"],
        kp["w4"], kp["b4"], kp["w5"], kp["b5"], kp["w6"], kp["b6"],
    )

    # Drop the 15 pad lanes per group (and any batch padding), back to f32.
    recon = (recon_pad.reshape(Bp, _NCHUNK, _CHUNK_P)[:B, :, :_CHUNK]
             .astype(jnp.float32).reshape(B, X_DIM))
    mulv = mulv[:B]
    return recon, mulv[:, :Z_DIM], mulv[:, Z_DIM:]


def init_params(key):
    """Deterministic synthetic parameters (shapes match the nn.Linear layers)."""
    def linear(k, fan_in, fan_out, scale=0.05):
        kw, kb = jax.random.split(k)
        w = scale * jax.random.normal(kw, (fan_in, fan_out), jnp.float32)
        b = scale * jax.random.normal(kb, (1, fan_out), jnp.float32)
        return w, b

    keys = jax.random.split(key, 7)
    p = {}
    p["w1"], p["b1"] = linear(keys[0], X_DIM, H_DIM1)
    p["w2"], p["b2"] = linear(keys[1], H_DIM1, H_DIM2)
    p["w31"], p["b31"] = linear(keys[2], H_DIM2, Z_DIM)
    p["w32"], p["b32"] = linear(keys[3], H_DIM2, Z_DIM)
    p["w4"], p["b4"] = linear(keys[4], Z_DIM, H_DIM2)
    p["w5"], p["b5"] = linear(keys[5], H_DIM2, H_DIM1)
    p["w6"], p["b6"] = linear(keys[6], H_DIM1, X_DIM)
    return p


def cvae_forward_ref(x, eps, p):
    """Pure-JAX reference mirroring the PyTorch forward (bf16-rounded big weights)."""
    w1 = p["w1"].astype(jnp.bfloat16).astype(jnp.float32)
    w6 = p["w6"].astype(jnp.bfloat16).astype(jnp.float32)
    h = jax.nn.relu(x @ w1 + p["b1"])
    h = jax.nn.relu(h @ p["w2"] + p["b2"])
    mu = h @ p["w31"] + p["b31"]
    logvar = h @ p["w32"] + p["b32"]
    z = eps * jnp.exp(0.5 * logvar) + mu
    d = jax.nn.relu(z @ p["w4"] + p["b4"])
    d = jax.nn.relu(d @ p["w5"] + p["b5"])
    logits = d @ w6 + p["b6"]
    recon = jax.nn.softmax(logits.reshape(-1, 9, 25, 25), axis=1).reshape(-1, X_DIM)
    return recon, mu, logvar


if __name__ == "__main__":
    key = jax.random.PRNGKey(0)
    kx, keps, kparams = jax.random.split(key, 3)

    x = jax.random.uniform(kx, (BATCH, X_DIM), jnp.float32)
    eps = jax.random.normal(keps, (BATCH, Z_DIM), jnp.float32)  # torch.randn_like(std)
    params = init_params(kparams)
    kernel_params = prepare_params(params)

    recon, mu, logvar = cvae_forward(x, eps, kernel_params)
    jax.block_until_ready((recon, mu, logvar))

    # correctness check vs. pure-JAX reference (tolerances account for bf16
    # activations fed to the MXU and the bf16 recon writeback).
    r_ref, mu_ref, lv_ref = cvae_forward_ref(x, eps, params)
    assert jnp.allclose(mu, mu_ref, atol=5e-3, rtol=1e-2)
    assert jnp.allclose(logvar, lv_ref, atol=5e-3, rtol=1e-2)
    assert jnp.allclose(recon, r_ref, atol=1e-2, rtol=5e-2)
    # softmax over the 9 channel groups sums to ~1 per (batch, 25, 25) position
    assert jnp.allclose(recon.reshape(BATCH, 9, _CHUNK).sum(axis=1), 1.0, atol=1e-2)

    print("KERNEL_OK")
</pallas_src>

<mosaic_0001>
module attributes {stable_mosaic.version = 11 : i64} {
  func.func @_cvae_kernel(%arg0: i32, %arg1: memref<8x5625xf32, #tpu.memory_space<vmem>>, %arg2: memref<8x8xf32, #tpu.memory_space<vmem>>, %arg3: memref<5625x64xbf16, #tpu.memory_space<vmem>>, %arg4: memref<1x64xf32, #tpu.memory_space<vmem>>, %arg5: memref<64x32xf32, #tpu.memory_space<vmem>>, %arg6: memref<1x32xf32, #tpu.memory_space<vmem>>, %arg7: memref<32x16xf32, #tpu.memory_space<vmem>>, %arg8: memref<1x16xf32, #tpu.memory_space<vmem>>, %arg9: memref<8x32xf32, #tpu.memory_space<vmem>>, %arg10: memref<1x32xf32, #tpu.memory_space<vmem>>, %arg11: memref<32x64xf32, #tpu.memory_space<vmem>>, %arg12: memref<1x64xf32, #tpu.memory_space<vmem>>, %arg13: memref<64x5760xbf16, #tpu.memory_space<vmem>>, %arg14: memref<1x5760xf32, #tpu.memory_space<vmem>>, %arg15: memref<8x5760xbf16, #tpu.memory_space<vmem>>, %arg16: memref<8x16xf32, #tpu.memory_space<vmem>>, %arg17: memref<8x5760xf32, #tpu.memory_space<vmem>>) attributes {dimension_semantics = [#tpu.dimension_semantics<parallel>], iteration_bounds = array<i64: 8>, scalar_prefetch = 0 : i64, scratch_operands = 1 : i64, tpu.core_type = #tpu.core_type<tc>, window_params = [{transform_indices = @transform_0, window_bounds = array<i64: 8, 5625>}, {transform_indices = @transform_1, window_bounds = array<i64: 8, 8>}, {pipeline_mode = #tpu.pipeline_mode<synchronous>, transform_indices = @transform_2, window_bounds = array<i64: 5625, 64>}, {pipeline_mode = #tpu.pipeline_mode<synchronous>, transform_indices = @transform_3, window_bounds = array<i64: 1, 64>}, {pipeline_mode = #tpu.pipeline_mode<synchronous>, transform_indices = @transform_4, window_bounds = array<i64: 64, 32>}, {pipeline_mode = #tpu.pipeline_mode<synchronous>, transform_indices = @transform_5, window_bounds = array<i64: 1, 32>}, {pipeline_mode = #tpu.pipeline_mode<synchronous>, transform_indices = @transform_6, window_bounds = array<i64: 32, 16>}, {pipeline_mode = #tpu.pipeline_mode<synchronous>, transform_indices = @transform_7, window_bounds = array<i64: 1, 16>}, {pipeline_mode = #tpu.pipeline_mode<synchronous>, transform_indices = @transform_8, window_bounds = array<i64: 8, 32>}, {pipeline_mode = #tpu.pipeline_mode<synchronous>, transform_indices = @transform_9, window_bounds = array<i64: 1, 32>}, {pipeline_mode = #tpu.pipeline_mode<synchronous>, transform_indices = @transform_10, window_bounds = array<i64: 32, 64>}, {pipeline_mode = #tpu.pipeline_mode<synchronous>, transform_indices = @transform_11, window_bounds = array<i64: 1, 64>}, {pipeline_mode = #tpu.pipeline_mode<synchronous>, transform_indices = @transform_12, window_bounds = array<i64: 64, 5760>}, {pipeline_mode = #tpu.pipeline_mode<synchronous>, transform_indices = @transform_13, window_bounds = array<i64: 1, 5760>}, {transform_indices = @transform_14, window_bounds = array<i64: 8, 5760>}, {transform_indices = @transform_15, window_bounds = array<i64: 8, 16>}]} {
    %c0 = arith.constant 0 : index
    %c0_0 = arith.constant 0 : index
    %0 = vector.load %arg1[%c0, %c0_0] : memref<8x5625xf32, #tpu.memory_space<vmem>>, vector<8x5625xf32>
    %1 = arith.truncf %0 : vector<8x5625xf32> to vector<8x5625xbf16>
    %c0_1 = arith.constant 0 : index
    %c0_2 = arith.constant 0 : index
    %2 = vector.load %arg3[%c0_1, %c0_2] : memref<5625x64xbf16, #tpu.memory_space<vmem>>, vector<5625x64xbf16>
    %cst = arith.constant dense<0.000000e+00> : vector<8x64xf32>
    %3 = tpu.matmul %1, %2, %cst {dimension_numbers = #tpu.dot_dimension_numbers<[1], [0], [0], [1], [0, 0, 1, 1], [], []>} : vector<8x5625xbf16>, vector<5625x64xbf16>, vector<8x64xf32> -> vector<8x64xf32>
    %c0_3 = arith.constant 0 : index
    %c0_4 = arith.constant 0 : index
    %4 = vector.load %arg4[%c0_3, %c0_4] : memref<1x64xf32, #tpu.memory_space<vmem>>, vector<1x64xf32>
    %5 = vector.broadcast %4 : vector<1x64xf32> to vector<8x64xf32>
    %6 = arith.addf %3, %5 : vector<8x64xf32>
    %cst_5 = arith.constant 0.000000e+00 : f32
    %7 = vector.broadcast %cst_5 : f32 to vector<8x64xf32>
    %8 = arith.maximumf %6, %7 : vector<8x64xf32>
    %c0_6 = arith.constant 0 : index
    %c0_7 = arith.constant 0 : index
    %9 = vector.load %arg5[%c0_6, %c0_7] : memref<64x32xf32, #tpu.memory_space<vmem>>, vector<64x32xf32>
    %cst_8 = arith.constant dense<0.000000e+00> : vector<8x32xf32>
    %10 = tpu.matmul %8, %9, %cst_8 {dimension_numbers = #tpu.dot_dimension_numbers<[1], [0], [0], [1], [0, 0, 1, 1], [], []>} : vector<8x64xf32>, vector<64x32xf32>, vector<8x32xf32> -> vector<8x32xf32>
    %c0_9 = arith.constant 0 : index
    %c0_10 = arith.constant 0 : index
    %11 = vector.load %arg6[%c0_9, %c0_10] : memref<1x32xf32, #tpu.memory_space<vmem>>, vector<1x32xf32>
    %12 = vector.broadcast %11 : vector<1x32xf32> to vector<8x32xf32>
    %13 = arith.addf %10, %12 : vector<8x32xf32>
    %cst_11 = arith.constant 0.000000e+00 : f32
    %14 = vector.broadcast %cst_11 : f32 to vector<8x32xf32>
    %15 = arith.maximumf %13, %14 : vector<8x32xf32>
    %c0_12 = arith.constant 0 : index
    %c0_13 = arith.constant 0 : index
    %16 = vector.load %arg7[%c0_12, %c0_13] : memref<32x16xf32, #tpu.memory_space<vmem>>, vector<32x16xf32>
    %cst_14 = arith.constant dense<0.000000e+00> : vector<8x16xf32>
    %17 = tpu.matmul %15, %16, %cst_14 {dimension_numbers = #tpu.dot_dimension_numbers<[1], [0], [0], [1], [0, 0, 1, 1], [], []>} : vector<8x32xf32>, vector<32x16xf32>, vector<8x16xf32> -> vector<8x16xf32>
    %c0_15 = arith.constant 0 : index
    %c0_16 = arith.constant 0 : index
    %18 = vector.load %arg8[%c0_15, %c0_16] : memref<1x16xf32, #tpu.memory_space<vmem>>, vector<1x16xf32>
    %19 = vector.broadcast %18 : vector<1x16xf32> to vector<8x16xf32>
    %20 = arith.addf %17, %19 : vector<8x16xf32>
    %c0_17 = arith.constant 0 : index
    %c0_18 = arith.constant 0 : index
    %21 = vector.load %arg16[%c0_17, %c0_18] : memref<8x16xf32, #tpu.memory_space<vmem>>, vector<8x16xf32>
    tpu.vector_store %arg16[%c0_17, %c0_18], %20 {strides = array<i32>} : memref<8x16xf32, #tpu.memory_space<vmem>>, vector<8x16xf32>,
    %22 = vector.extract_strided_slice %20 {offsets = [0, 0], sizes = [8, 8], strides = [1, 1]} : vector<8x16xf32> to vector<8x8xf32>
    %23 = vector.extract_strided_slice %20 {offsets = [0, 8], sizes = [8, 8], strides = [1, 1]} : vector<8x16xf32> to vector<8x8xf32>
    %c0_19 = arith.constant 0 : index
    %c0_20 = arith.constant 0 : index
    %24 = vector.load %arg2[%c0_19, %c0_20] : memref<8x8xf32, #tpu.memory_space<vmem>>, vector<8x8xf32>
    %cst_21 = arith.constant 5.000000e-01 : f32
    %25 = vector.broadcast %cst_21 : f32 to vector<8x8xf32>
    %26 = arith.mulf %25, %23 : vector<8x8xf32>
    %27 = math.exp %26 : vector<8x8xf32>
    %28 = arith.mulf %24, %27 : vector<8x8xf32>
    %29 = arith.addf %28, %22 : vector<8x8xf32>
    %c0_22 = arith.constant 0 : index
    %c0_23 = arith.constant 0 : index
    %30 = vector.load %arg9[%c0_22, %c0_23] : memref<8x32xf32, #tpu.memory_space<vmem>>, vector<8x32xf32>
    %cst_24 = arith.constant dense<0.000000e+00> : vector<8x32xf32>
    %31 = tpu.matmul %29, %30, %cst_24 {dimension_numbers = #tpu.dot_dimension_numbers<[1], [0], [0], [1], [0, 0, 1, 1], [], []>} : vector<8x8xf32>, vector<8x32xf32>, vector<8x32xf32> -> vector<8x32xf32>
    %c0_25 = arith.constant 0 : index
    %c0_26 = arith.constant 0 : index
    %32 = vector.load %arg10[%c0_25, %c0_26] : memref<1x32xf32, #tpu.memory_space<vmem>>, vector<1x32xf32>
    %33 = vector.broadcast %32 : vector<1x32xf32> to vector<8x32xf32>
    %34 = arith.addf %31, %33 : vector<8x32xf32>
    %cst_27 = arith.constant 0.000000e+00 : f32
    %35 = vector.broadcast %cst_27 : f32 to vector<8x32xf32>
    %36 = arith.maximumf %34, %35 : vector<8x32xf32>
    %c0_28 = arith.constant 0 : index
    %c0_29 = arith.constant 0 : index
    %37 = vector.load %arg11[%c0_28, %c0_29] : memref<32x64xf32, #tpu.memory_space<vmem>>, vector<32x64xf32>
    %cst_30 = arith.constant dense<0.000000e+00> : vector<8x64xf32>
    %38 = tpu.matmul %36, %37, %cst_30 {dimension_numbers = #tpu.dot_dimension_numbers<[1], [0], [0], [1], [0, 0, 1, 1], [], []>} : vector<8x32xf32>, vector<32x64xf32>, vector<8x64xf32> -> vector<8x64xf32>
    %c0_31 = arith.constant 0 : index
    %c0_32 = arith.constant 0 : index
    %39 = vector.load %arg12[%c0_31, %c0_32] : memref<1x64xf32, #tpu.memory_space<vmem>>, vector<1x64xf32>
    %40 = vector.broadcast %39 : vector<1x64xf32> to vector<8x64xf32>
    %41 = arith.addf %38, %40 : vector<8x64xf32>
    %cst_33 = arith.constant 0.000000e+00 : f32
    %42 = vector.broadcast %cst_33 : f32 to vector<8x64xf32>
    %43 = arith.maximumf %41, %42 : vector<8x64xf32>
    %44 = arith.truncf %43 : vector<8x64xf32> to vector<8x64xbf16>
    %c0_34 = arith.constant 0 : index
    %c0_35 = arith.constant 0 : index
    %45 = vector.load %arg13[%c0_34, %c0_35] : memref<64x5760xbf16, #tpu.memory_space<vmem>>, vector<64x1920xbf16>
    %cst_36 = arith.constant dense<0.000000e+00> : vector<8x1920xf32>
    %46 = tpu.matmul %44, %45, %cst_36 {dimension_numbers = #tpu.dot_dimension_numbers<[1], [0], [0], [1], [0, 0, 1, 1], [], []>} : vector<8x64xbf16>, vector<64x1920xbf16>, vector<8x1920xf32> -> vector<8x1920xf32>
    %c0_37 = arith.constant 0 : index
    %c0_38 = arith.constant 0 : index
    %47 = vector.load %arg14[%c0_37, %c0_38] : memref<1x5760xf32, #tpu.memory_space<vmem>>, vector<1x1920xf32>
    %48 = vector.broadcast %47 : vector<1x1920xf32> to vector<8x1920xf32>
    %49 = arith.addf %46, %48 : vector<8x1920xf32>
    %c0_39 = arith.constant 0 : index
    %c0_40 = arith.constant 0 : index
    %50 = vector.load %arg17[%c0_39, %c0_40] : memref<8x5760xf32, #tpu.memory_space<vmem>>, vector<8x1920xf32>
    tpu.vector_store %arg17[%c0_39, %c0_40], %49 {strides = array<i32>} : memref<8x5760xf32, #tpu.memory_space<vmem>>, vector<8x1920xf32>,
    %51 = vector.extract_strided_slice %49 {offsets = [0, 0], sizes = [8, 640], strides = [1, 1]} : vector<8x1920xf32> to vector<8x640xf32>
    %52 = vector.extract_strided_slice %49 {offsets = [0, 640], sizes = [8, 640], strides = [1, 1]} : vector<8x1920xf32> to vector<8x640xf32>
    %53 = arith.maximumf %51, %52 : vector<8x640xf32>
    %54 = vector.extract_strided_slice %49 {offsets = [0, 1280], sizes = [8, 640], strides = [1, 1]} : vector<8x1920xf32> to vector<8x640xf32>
    %55 = arith.maximumf %53, %54 : vector<8x640xf32>
    %c0_41 = arith.constant 0 : index
    %c1920 = arith.constant 1920 : index
    %56 = vector.load %arg13[%c0_41, %c1920] : memref<64x5760xbf16, #tpu.memory_space<vmem>>, vector<64x1920xbf16>
    %cst_42 = arith.constant dense<0.000000e+00> : vector<8x1920xf32>
    %57 = tpu.matmul %44, %56, %cst_42 {dimension_numbers = #tpu.dot_dimension_numbers<[1], [0], [0], [1], [0, 0, 1, 1], [], []>} : vector<8x64xbf16>, vector<64x1920xbf16>, vector<8x1920xf32> -> vector<8x1920xf32>
    %c0_43 = arith.constant 0 : index
    %c1920_44 = arith.constant 1920 : index
    %58 = vector.load %arg14[%c0_43, %c1920_44] : memref<1x5760xf32, #tpu.memory_space<vmem>>, vector<1x1920xf32>
    %59 = vector.broadcast %58 : vector<1x1920xf32> to vector<8x1920xf32>
    %60 = arith.addf %57, %59 : vector<8x1920xf32>
    %c0_45 = arith.constant 0 : index
    %c1920_46 = arith.constant 1920 : index
    %61 = vector.load %arg17[%c0_45, %c1920_46] : memref<8x5760xf32, #tpu.memory_space<vmem>>, vector<8x1920xf32>
    tpu.vector_store %arg17[%c0_45, %c1920_46], %60 {strides = array<i32>} : memref<8x5760xf32, #tpu.memory_space<vmem>>, vector<8x1920xf32>,
    %62 = vector.extract_strided_slice %60 {offsets = [0, 0], sizes = [8, 640], strides = [1, 1]} : vector<8x1920xf32> to vector<8x640xf32>
    %63 = arith.maximumf %55, %62 : vector<8x640xf32>
    %64 = vector.extract_strided_slice %60 {offsets = [0, 640], sizes = [8, 640], strides = [1, 1]} : vector<8x1920xf32> to vector<8x640xf32>
    %65 = arith.maximumf %63, %64 : vector<8x640xf32>
    %66 = vector.extract_strided_slice %60 {offsets = [0, 1280], sizes = [8, 640], strides = [1, 1]} : vector<8x1920xf32> to vector<8x640xf32>
    %67 = arith.maximumf %65, %66 : vector<8x640xf32>
    %c0_47 = arith.constant 0 : index
    %c3840 = arith.constant 3840 : index
    %68 = vector.load %arg13[%c0_47, %c3840] : memref<64x5760xbf16, #tpu.memory_space<vmem>>, vector<64x1920xbf16>
    %cst_48 = arith.constant dense<0.000000e+00> : vector<8x1920xf32>
    %69 = tpu.matmul %44, %68, %cst_48 {dimension_numbers = #tpu.dot_dimension_numbers<[1], [0], [0], [1], [0, 0, 1, 1], [], []>} : vector<8x64xbf16>, vector<64x1920xbf16>, vector<8x1920xf32> -> vector<8x1920xf32>
    %c0_49 = arith.constant 0 : index
    %c3840_50 = arith.constant 3840 : index
    %70 = vector.load %arg14[%c0_49, %c3840_50] : memref<1x5760xf32, #tpu.memory_space<vmem>>, vector<1x1920xf32>
    %71 = vector.broadcast %70 : vector<1x1920xf32> to vector<8x1920xf32>
    %72 = arith.addf %69, %71 : vector<8x1920xf32>
    %c0_51 = arith.constant 0 : index
    %c3840_52 = arith.constant 3840 : index
    %73 = vector.load %arg17[%c0_51, %c3840_52] : memref<8x5760xf32, #tpu.memory_space<vmem>>, vector<8x1920xf32>
    tpu.vector_store %arg17[%c0_51, %c3840_52], %72 {strides = array<i32>} : memref<8x5760xf32, #tpu.memory_space<vmem>>, vector<8x1920xf32>,
    %74 = vector.extract_strided_slice %72 {offsets = [0, 0], sizes = [8, 640], strides = [1, 1]} : vector<8x1920xf32> to vector<8x640xf32>
    %75 = arith.maximumf %67, %74 : vector<8x640xf32>
    %76 = vector.extract_strided_slice %72 {offsets = [0, 640], sizes = [8, 640], strides = [1, 1]} : vector<8x1920xf32> to vector<8x640xf32>
    %77 = arith.maximumf %75, %76 : vector<8x640xf32>
    %78 = vector.extract_strided_slice %72 {offsets = [0, 1280], sizes = [8, 640], strides = [1, 1]} : vector<8x1920xf32> to vector<8x640xf32>
    %79 = arith.maximumf %77, %78 : vector<8x640xf32>
    %cst_53 = arith.constant 0.000000e+00 : f32
    %80 = vector.broadcast %cst_53 : f32 to vector<8x640xf32>
    %c0_54 = arith.constant 0 : index
    %c0_55 = arith.constant 0 : index
    %81 = vector.load %arg17[%c0_54, %c0_55] : memref<8x5760xf32, #tpu.memory_space<vmem>>, vector<8x640xf32>
    %82 = arith.subf %81, %79 : vector<8x640xf32>
    %83 = math.exp %82 : vector<8x640xf32>
    %c0_56 = arith.constant 0 : index
    %c0_57 = arith.constant 0 : index
    %84 = vector.load %arg17[%c0_56, %c0_57] : memref<8x5760xf32, #tpu.memory_space<vmem>>, vector<8x640xf32>
    tpu.vector_store %arg17[%c0_56, %c0_57], %83 {strides = array<i32>} : memref<8x5760xf32, #tpu.memory_space<vmem>>, vector<8x640xf32>,
    %85 = arith.addf %80, %83 : vector<8x640xf32>
    %c0_58 = arith.constant 0 : index
    %c640 = arith.constant 640 : index
    %86 = vector.load %arg17[%c0_58, %c640] : memref<8x5760xf32, #tpu.memory_space<vmem>>, vector<8x640xf32>
    %87 = arith.subf %86, %79 : vector<8x640xf32>
    %88 = math.exp %87 : vector<8x640xf32>
    %c0_59 = arith.constant 0 : index
    %c640_60 = arith.constant 640 : index
    %89 = vector.load %arg17[%c0_59, %c640_60] : memref<8x5760xf32, #tpu.memory_space<vmem>>, vector<8x640xf32>
    tpu.vector_store %arg17[%c0_59, %c640_60], %88 {strides = array<i32>} : memref<8x5760xf32, #tpu.memory_space<vmem>>, vector<8x640xf32>,
    %90 = arith.addf %85, %88 : vector<8x640xf32>
    %c0_61 = arith.constant 0 : index
    %c1280 = arith.constant 1280 : index
    %91 = vector.load %arg17[%c0_61, %c1280] : memref<8x5760xf32, #tpu.memory_space<vmem>>, vector<8x640xf32>
    %92 = arith.subf %91, %79 : vector<8x640xf32>
    %93 = math.exp %92 : vector<8x640xf32>
    %c0_62 = arith.constant 0 : index
    %c1280_63 = arith.constant 1280 : index
    %94 = vector.load %arg17[%c0_62, %c1280_63] : memref<8x5760xf32, #tpu.memory_space<vmem>>, vector<8x640xf32>
    tpu.vector_store %arg17[%c0_62, %c1280_63], %93 {strides = array<i32>} : memref<8x5760xf32, #tpu.memory_space<vmem>>, vector<8x640xf32>,
    %95 = arith.addf %90, %93 : vector<8x640xf32>
    %c0_64 = arith.constant 0 : index
    %c1920_65 = arith.constant 1920 : index
    %96 = vector.load %arg17[%c0_64, %c1920_65] : memref<8x5760xf32, #tpu.memory_space<vmem>>, vector<8x640xf32>
    %97 = arith.subf %96, %79 : vector<8x640xf32>
    %98 = math.exp %97 : vector<8x640xf32>
    %c0_66 = arith.constant 0 : index
    %c1920_67 = arith.constant 1920 : index
    %99 = vector.load %arg17[%c0_66, %c1920_67] : memref<8x5760xf32, #tpu.memory_space<vmem>>, vector<8x640xf32>
    tpu.vector_store %arg17[%c0_66, %c1920_67], %98 {strides = array<i32>} : memref<8x5760xf32, #tpu.memory_space<vmem>>, vector<8x640xf32>,
    %100 = arith.addf %95, %98 : vector<8x640xf32>
    %c0_68 = arith.constant 0 : index
    %c2560 = arith.constant 2560 : index
    %101 = vector.load %arg17[%c0_68, %c2560] : memref<8x5760xf32, #tpu.memory_space<vmem>>, vector<8x640xf32>
    %102 = arith.subf %101, %79 : vector<8x640xf32>
    %103 = math.exp %102 : vector<8x640xf32>
    %c0_69 = arith.constant 0 : index
    %c2560_70 = arith.constant 2560 : index
    %104 = vector.load %arg17[%c0_69, %c2560_70] : memref<8x5760xf32, #tpu.memory_space<vmem>>, vector<8x640xf32>
    tpu.vector_store %arg17[%c0_69, %c2560_70], %103 {strides = array<i32>} : memref<8x5760xf32, #tpu.memory_space<vmem>>, vector<8x640xf32>,
    %105 = arith.addf %100, %103 : vector<8x640xf32>
    %c0_71 = arith.constant 0 : index
    %c3200 = arith.constant 3200 : index
    %106 = vector.load %arg17[%c0_71, %c3200] : memref<8x5760xf32, #tpu.memory_space<vmem>>, vector<8x640xf32>
    %107 = arith.subf %106, %79 : vector<8x640xf32>
    %108 = math.exp %107 : vector<8x640xf32>
    %c0_72 = arith.constant 0 : index
    %c3200_73 = arith.constant 3200 : index
    %109 = vector.load %arg17[%c0_72, %c3200_73] : memref<8x5760xf32, #tpu.memory_space<vmem>>, vector<8x640xf32>
    tpu.vector_store %arg17[%c0_72, %c3200_73], %108 {strides = array<i32>} : memref<8x5760xf32, #tpu.memory_space<vmem>>, vector<8x640xf32>,
    %110 = arith.addf %105, %108 : vector<8x640xf32>
    %c0_74 = arith.constant 0 : index
    %c3840_75 = arith.constant 3840 : index
    %111 = vector.load %arg17[%c0_74, %c3840_75] : memref<8x5760xf32, #tpu.memory_space<vmem>>, vector<8x640xf32>
    %112 = arith.subf %111, %79 : vector<8x640xf32>
    %113 = math.exp %112 : vector<8x640xf32>
    %c0_76 = arith.constant 0 : index
    %c3840_77 = arith.constant 3840 : index
    %114 = vector.load %arg17[%c0_76, %c3840_77] : memref<8x5760xf32, #tpu.memory_space<vmem>>, vector<8x640xf32>
    tpu.vector_store %arg17[%c0_76, %c3840_77], %113 {strides = array<i32>} : memref<8x5760xf32, #tpu.memory_space<vmem>>, vector<8x640xf32>,
    %115 = arith.addf %110, %113 : vector<8x640xf32>
    %c0_78 = arith.constant 0 : index
    %c4480 = arith.constant 4480 : index
    %116 = vector.load %arg17[%c0_78, %c4480] : memref<8x5760xf32, #tpu.memory_space<vmem>>, vector<8x640xf32>
    %117 = arith.subf %116, %79 : vector<8x640xf32>
    %118 = math.exp %117 : vector<8x640xf32>
    %c0_79 = arith.constant 0 : index
    %c4480_80 = arith.constant 4480 : index
    %119 = vector.load %arg17[%c0_79, %c4480_80] : memref<8x5760xf32, #tpu.memory_space<vmem>>, vector<8x640xf32>
    tpu.vector_store %arg17[%c0_79, %c4480_80], %118 {strides = array<i32>} : memref<8x5760xf32, #tpu.memory_space<vmem>>, vector<8x640xf32>,
    %120 = arith.addf %115, %118 : vector<8x640xf32>
    %c0_81 = arith.constant 0 : index
    %c5120 = arith.constant 5120 : index
    %121 = vector.load %arg17[%c0_81, %c5120] : memref<8x5760xf32, #tpu.memory_space<vmem>>, vector<8x640xf32>
    %122 = arith.subf %121, %79 : vector<8x640xf32>
    %123 = math.exp %122 : vector<8x640xf32>
    %c0_82 = arith.constant 0 : index
    %c5120_83 = arith.constant 5120 : index
    %124 = vector.load %arg17[%c0_82, %c5120_83] : memref<8x5760xf32, #tpu.memory_space<vmem>>, vector<8x640xf32>
    tpu.vector_store %arg17[%c0_82, %c5120_83], %123 {strides = array<i32>} : memref<8x5760xf32, #tpu.memory_space<vmem>>, vector<8x640xf32>,
    %125 = arith.addf %120, %123 : vector<8x640xf32>
    %cst_84 = arith.constant 1.000000e+00 : f32
    %126 = vector.broadcast %cst_84 : f32 to vector<8x640xf32>
    %127 = arith.divf %126, %125 : vector<8x640xf32>
    %c0_85 = arith.constant 0 : index
    %c0_86 = arith.constant 0 : index
    %128 = vector.load %arg17[%c0_85, %c0_86] : memref<8x5760xf32, #tpu.memory_space<vmem>>, vector<8x640xf32>
    %129 = arith.mulf %128, %127 : vector<8x640xf32>
    %130 = arith.truncf %129 : vector<8x640xf32> to vector<8x640xbf16>
    %c0_87 = arith.constant 0 : index
    %c0_88 = arith.constant 0 : index
    %131 = vector.load %arg15[%c0_87, %c0_88] : memref<8x5760xbf16, #tpu.memory_space<vmem>>, vector<8x640xbf16>
    tpu.vector_store %arg15[%c0_87, %c0_88], %130 {strides = array<i32>} : memref<8x5760xbf16, #tpu.memory_space<vmem>>, vector<8x640xbf16>,
    %c0_89 = arith.constant 0 : index
    %c640_90 = arith.constant 640 : index
    %132 = vector.load %arg17[%c0_89, %c640_90] : memref<8x5760xf32, #tpu.memory_space<vmem>>, vector<8x640xf32>
    %133 = arith.mulf %132, %127 : vector<8x640xf32>
    %134 = arith.truncf %133 : vector<8x640xf32> to vector<8x640xbf16>
    %c0_91 = arith.constant 0 : index
    %c640_92 = arith.constant 640 : index
    %135 = vector.load %arg15[%c0_91, %c640_92] : memref<8x5760xbf16, #tpu.memory_space<vmem>>, vector<8x640xbf16>
    tpu.vector_store %arg15[%c0_91, %c640_92], %134 {strides = array<i32>} : memref<8x5760xbf16, #tpu.memory_space<vmem>>, vector<8x640xbf16>,
    %c0_93 = arith.constant 0 : index
    %c1280_94 = arith.constant 1280 : index
    %136 = vector.load %arg17[%c0_93, %c1280_94] : memref<8x5760xf32, #tpu.memory_space<vmem>>, vector<8x640xf32>
    %137 = arith.mulf %136, %127 : vector<8x640xf32>
    %138 = arith.truncf %137 : vector<8x640xf32> to vector<8x640xbf16>
    %c0_95 = arith.constant 0 : index
    %c1280_96 = arith.constant 1280 : index
    %139 = vector.load %arg15[%c0_95, %c1280_96] : memref<8x5760xbf16, #tpu.memory_space<vmem>>, vector<8x640xbf16>
    tpu.vector_store %arg15[%c0_95, %c1280_96], %138 {strides = array<i32>} : memref<8x5760xbf16, #tpu.memory_space<vmem>>, vector<8x640xbf16>,
    %c0_97 = arith.constant 0 : index
    %c1920_98 = arith.constant 1920 : index
    %140 = vector.load %arg17[%c0_97, %c1920_98] : memref<8x5760xf32, #tpu.memory_space<vmem>>, vector<8x640xf32>
    %141 = arith.mulf %140, %127 : vector<8x640xf32>
    %142 = arith.truncf %141 : vector<8x640xf32> to vector<8x640xbf16>
    %c0_99 = arith.constant 0 : index
    %c1920_100 = arith.constant 1920 : index
    %143 = vector.load %arg15[%c0_99, %c1920_100] : memref<8x5760xbf16, #tpu.memory_space<vmem>>, vector<8x640xbf16>
    tpu.vector_store %arg15[%c0_99, %c1920_100], %142 {strides = array<i32>} : memref<8x5760xbf16, #tpu.memory_space<vmem>>, vector<8x640xbf16>,
    %c0_101 = arith.constant 0 : index
    %c2560_102 = arith.constant 2560 : index
    %144 = vector.load %arg17[%c0_101, %c2560_102] : memref<8x5760xf32, #tpu.memory_space<vmem>>, vector<8x640xf32>
    %145 = arith.mulf %144, %127 : vector<8x640xf32>
    %146 = arith.truncf %145 : vector<8x640xf32> to vector<8x640xbf16>
    %c0_103 = arith.constant 0 : index
    %c2560_104 = arith.constant 2560 : index
    %147 = vector.load %arg15[%c0_103, %c2560_104] : memref<8x5760xbf16, #tpu.memory_space<vmem>>, vector<8x640xbf16>
    tpu.vector_store %arg15[%c0_103, %c2560_104], %146 {strides = array<i32>} : memref<8x5760xbf16, #tpu.memory_space<vmem>>, vector<8x640xbf16>,
    %c0_105 = arith.constant 0 : index
    %c3200_106 = arith.constant 3200 : index
    %148 = vector.load %arg17[%c0_105, %c3200_106] : memref<8x5760xf32, #tpu.memory_space<vmem>>, vector<8x640xf32>
    %149 = arith.mulf %148, %127 : vector<8x640xf32>
    %150 = arith.truncf %149 : vector<8x640xf32> to vector<8x640xbf16>
    %c0_107 = arith.constant 0 : index
    %c3200_108 = arith.constant 3200 : index
    %151 = vector.load %arg15[%c0_107, %c3200_108] : memref<8x5760xbf16, #tpu.memory_space<vmem>>, vector<8x640xbf16>
    tpu.vector_store %arg15[%c0_107, %c3200_108], %150 {strides = array<i32>} : memref<8x5760xbf16, #tpu.memory_space<vmem>>, vector<8x640xbf16>,
    %c0_109 = arith.constant 0 : index
    %c3840_110 = arith.constant 3840 : index
    %152 = vector.load %arg17[%c0_109, %c3840_110] : memref<8x5760xf32, #tpu.memory_space<vmem>>, vector<8x640xf32>
    %153 = arith.mulf %152, %127 : vector<8x640xf32>
    %154 = arith.truncf %153 : vector<8x640xf32> to vector<8x640xbf16>
    %c0_111 = arith.constant 0 : index
    %c3840_112 = arith.constant 3840 : index
    %155 = vector.load %arg15[%c0_111, %c3840_112] : memref<8x5760xbf16, #tpu.memory_space<vmem>>, vector<8x640xbf16>
    tpu.vector_store %arg15[%c0_111, %c3840_112], %154 {strides = array<i32>} : memref<8x5760xbf16, #tpu.memory_space<vmem>>, vector<8x640xbf16>,
    %c0_113 = arith.constant 0 : index
    %c4480_114 = arith.constant 4480 : index
    %156 = vector.load %arg17[%c0_113, %c4480_114] : memref<8x5760xf32, #tpu.memory_space<vmem>>, vector<8x640xf32>
    %157 = arith.mulf %156, %127 : vector<8x640xf32>
    %158 = arith.truncf %157 : vector<8x640xf32> to vector<8x640xbf16>
    %c0_115 = arith.constant 0 : index
    %c4480_116 = arith.constant 4480 : index
    %159 = vector.load %arg15[%c0_115, %c4480_116] : memref<8x5760xbf16, #tpu.memory_space<vmem>>, vector<8x640xbf16>
    tpu.vector_store %arg15[%c0_115, %c4480_116], %158 {strides = array<i32>} : memref<8x5760xbf16, #tpu.memory_space<vmem>>, vector<8x640xbf16>,
    %c0_117 = arith.constant 0 : index
    %c5120_118 = arith.constant 5120 : index
    %160 = vector.load %arg17[%c0_117, %c5120_118] : memref<8x5760xf32, #tpu.memory_space<vmem>>, vector<8x640xf32>
    %161 = arith.mulf %160, %127 : vector<8x640xf32>
    %162 = arith.truncf %161 : vector<8x640xf32> to vector<8x640xbf16>
    %c0_119 = arith.constant 0 : index
    %c5120_120 = arith.constant 5120 : index
    %163 = vector.load %arg15[%c0_119, %c5120_120] : memref<8x5760xbf16, #tpu.memory_space<vmem>>, vector<8x640xbf16>
    tpu.vector_store %arg15[%c0_119, %c5120_120], %162 {strides = array<i32>} : memref<8x5760xbf16, #tpu.memory_space<vmem>>, vector<8x640xbf16>,
    return
  }
  func.func @transform_0(%arg0: i32) -> (i32, i32) {
    %c0_i32 = arith.constant 0 : i32
    %c0_i32_0 = arith.constant 0 : i32
    return %arg0, %c0_i32 : i32, i32
  }
  func.func @transform_1(%arg0: i32) -> (i32, i32) {
    %c0_i32 = arith.constant 0 : i32
    %c0_i32_0 = arith.constant 0 : i32
    return %arg0, %c0_i32 : i32, i32
  }
  func.func @transform_2(%arg0: i32) -> (i32, i32) {
    %c0_i32 = arith.constant 0 : i32
    %c0_i32_0 = arith.constant 0 : i32
    %c0_i32_1 = arith.constant 0 : i32
    return %c0_i32, %c0_i32_0 : i32, i32
  }
  func.func @transform_3(%arg0: i32) -> (i32, i32) {
    %c0_i32 = arith.constant 0 : i32
    %c0_i32_0 = arith.constant 0 : i32
    %c0_i32_1 = arith.constant 0 : i32
    return %c0_i32, %c0_i32_0 : i32, i32
  }
  func.func @transform_4(%arg0: i32) -> (i32, i32) {
    %c0_i32 = arith.constant 0 : i32
    %c0_i32_0 = arith.constant 0 : i32
    %c0_i32_1 = arith.constant 0 : i32
    return %c0_i32, %c0_i32_0 : i32, i32
  }
  func.func @transform_5(%arg0: i32) -> (i32, i32) {
    %c0_i32 = arith.constant 0 : i32
    %c0_i32_0 = arith.constant 0 : i32
    %c0_i32_1 = arith.constant 0 : i32
    return %c0_i32, %c0_i32_0 : i32, i32
  }
  func.func @transform_6(%arg0: i32) -> (i32, i32) {
    %c0_i32 = arith.constant 0 : i32
    %c0_i32_0 = arith.constant 0 : i32
    %c0_i32_1 = arith.constant 0 : i32
    return %c0_i32, %c0_i32_0 : i32, i32
  }
  func.func @transform_7(%arg0: i32) -> (i32, i32) {
    %c0_i32 = arith.constant 0 : i32
    %c0_i32_0 = arith.constant 0 : i32
    %c0_i32_1 = arith.constant 0 : i32
    return %c0_i32, %c0_i32_0 : i32, i32
  }
  func.func @transform_8(%arg0: i32) -> (i32, i32) {
    %c0_i32 = arith.constant 0 : i32
    %c0_i32_0 = arith.constant 0 : i32
    %c0_i32_1 = arith.constant 0 : i32
    return %c0_i32, %c0_i32_0 : i32, i32
  }
  func.func @transform_9(%arg0: i32) -> (i32, i32) {
    %c0_i32 = arith.constant 0 : i32
    %c0_i32_0 = arith.constant 0 : i32
    %c0_i32_1 = arith.constant 0 : i32
    return %c0_i32, %c0_i32_0 : i32, i32
  }
  func.func @transform_10(%arg0: i32) -> (i32, i32) {
    %c0_i32 = arith.constant 0 : i32
    %c0_i32_0 = arith.constant 0 : i32
    %c0_i32_1 = arith.constant 0 : i32
    return %c0_i32, %c0_i32_0 : i32, i32
  }
  func.func @transform_11(%arg0: i32) -> (i32, i32) {
    %c0_i32 = arith.constant 0 : i32
    %c0_i32_0 = arith.constant 0 : i32
    %c0_i32_1 = arith.constant 0 : i32
    return %c0_i32, %c0_i32_0 : i32, i32
  }
  func.func @transform_12(%arg0: i32) -> (i32, i32) {
    %c0_i32 = arith.constant 0 : i32
    %c0_i32_0 = arith.constant 0 : i32
    %c0_i32_1 = arith.constant 0 : i32
    return %c0_i32, %c0_i32_0 : i32, i32
  }
  func.func @transform_13(%arg0: i32) -> (i32, i32) {
    %c0_i32 = arith.constant 0 : i32
    %c0_i32_0 = arith.constant 0 : i32
    %c0_i32_1 = arith.constant 0 : i32
    return %c0_i32, %c0_i32_0 : i32, i32
  }
  func.func @transform_14(%arg0: i32) -> (i32, i32) {
    %c0_i32 = arith.constant 0 : i32
    %c0_i32_0 = arith.constant 0 : i32
    return %arg0, %c0_i32 : i32, i32
  }
  func.func @transform_15(%arg0: i32) -> (i32, i32) {
    %c0_i32 = arith.constant 0 : i32
    %c0_i32_0 = arith.constant 0 : i32
    return %arg0, %c0_i32 : i32, i32
  }
}

</mosaic_0001>

<llo_original>
// kernel: tpu_custom_call.1
$region0: #{tpu_custom_call.1}
  #allocation0 [shape = 'u32[]', space=smem, size = 0x4, offset = 0x4, fixed_abs, tag = 'smem constant byte address 0x4 - core index']
  #allocation1 [shape = 'u32[72,128]{1,0:T(1,128)}', space=vmem, size = 0x9000, scoped, tag = 'internal scratch']
  #allocation2 [shape = 'f32[8,5760]{1,0:T(8,128)}', space=vmem, size = 0x2d000, scoped, tag = 'scratch operand']
  %s0 = inlined_call_operand.vmem [shape: f32[64,5625], index: 0, kind: input, shape index: {}]
  %s1 = inlined_call_operand.vmem [shape: f32[64,8], index: 1, kind: input, shape index: {}]
  %s2 = inlined_call_operand.vmem [shape: bf16[5625,64], index: 2, kind: input, shape index: {}]
  %s3 = inlined_call_operand.vmem [shape: f32[1,64], index: 3, kind: input, shape index: {}]
  %s4 = inlined_call_operand.vmem [shape: f32[64,32], index: 4, kind: input, shape index: {}]
  %s5 = inlined_call_operand.vmem [shape: f32[1,32], index: 5, kind: input, shape index: {}]
  %s6 = inlined_call_operand.vmem [shape: f32[32,16], index: 6, kind: input, shape index: {}]
  %s7 = inlined_call_operand.vmem [shape: f32[1,16], index: 7, kind: input, shape index: {}]
  %s8 = inlined_call_operand.vmem [shape: f32[8,32], index: 8, kind: input, shape index: {}]
  %s9 = inlined_call_operand.vmem [shape: f32[1,32], index: 9, kind: input, shape index: {}]
  %s10 = inlined_call_operand.vmem [shape: f32[32,64], index: 10, kind: input, shape index: {}]
  %s11 = inlined_call_operand.vmem [shape: f32[1,64], index: 11, kind: input, shape index: {}]
  %s12 = inlined_call_operand.vmem [shape: bf16[64,5760], index: 12, kind: input, shape index: {}]
  %s13 = inlined_call_operand.vmem [shape: f32[1,5760], index: 13, kind: input, shape index: {}]
  %s14 = inlined_call_operand.hbm [shape: bf16[64,5760], index: 14, kind: output, shape index: {0}]
  %s15 = inlined_call_operand.vmem [shape: f32[64,16], index: 15, kind: output, shape index: {1}]
  %16 = xla_tuple %s14, %s15
  %s17 = sld [smem:[#allocation0]]
  $region97: #{tpu_custom_call.1} parent=0
    _
  %s19 = ssub.s32 1, %s17
  %s20 = scalar_select 0, %s19, %s17
  $region1: #{tpu_custom_call.1} parent=0
    #allocation3 [shape = 'u8[184320]{0}', space=vmem, size = 0x2d000, scoped, tag = 'output window, operand 0']
    #allocation4 [shape = 's32[2]{0}', space=sflag, size = 0x8, scoped, tag = 'scoped memory for tpu_custom_call.1']
    %21 = vsyncpa [#allocation4], 0
    %s22 = scalar_lea.sflag [#allocation4], 1
    %23 = vsyncpa %s22, 0
    loop: start=0, step=1, limit=10
    $region2: #{tpu_custom_call.1} parent=1 // loop_pre_header
      _
    $region3: #{tpu_custom_call.1} parent=1 // loop_header
      %s25 = sphi 0, %s29
      %p26 = scmp.ge.s32.totalorder %s25, 10
      %s35 = sphi 0, %s37
      %s38 = sphi 0, %s35
      %s39 = sphi 0, %s38
      %s55 = sphi 0, %s39
      %s61 = sphi 0, %s63
      %s64 = sphi 0, %s61
      %s65 = sphi 0, %s64
      %s81 = sphi 0, %s65
      %s85 = sphi 0, %s85
      %s87 = sphi 0, %s85
      %s88 = sphi 0, %s87
      %s102 = sphi 0, %s88
      %s106 = sphi 0, %s106
      %s108 = sphi 0, %s106
      %s109 = sphi 0, %s108
      %s123 = sphi 0, %s109
      %s127 = sphi 0, %s127
      %s129 = sphi 0, %s127
      %s130 = sphi 0, %s129
      %s144 = sphi 0, %s130
      %s148 = sphi 0, %s148
      %s150 = sphi 0, %s148
      %s151 = sphi 0, %s150
      %s165 = sphi 0, %s151
      %s169 = sphi 0, %s169
      %s171 = sphi 0, %s169
      %s172 = sphi 0, %s171
      %s186 = sphi 0, %s172
      %s190 = sphi 0, %s190
      %s192 = sphi 0, %s190
      %s193 = sphi 0, %s192
      %s207 = sphi 0, %s193
      %s211 = sphi 0, %s211
      %s213 = sphi 0, %s211
      %s214 = sphi 0, %s213
      %s228 = sphi 0, %s214
      %s232 = sphi 0, %s232
      %s234 = sphi 0, %s232
      %s235 = sphi 0, %s234
      %s249 = sphi 0, %s235
      %s253 = sphi 0, %s253
      %s255 = sphi 0, %s253
      %s256 = sphi 0, %s255
      %s270 = sphi 0, %s256
      %s274 = sphi 0, %s274
      %s276 = sphi 0, %s274
      %s277 = sphi 0, %s276
      %s291 = sphi 0, %s277
      %s295 = sphi 0, %s295
      %s297 = sphi 0, %s295
      %s298 = sphi 0, %s297
      %s312 = sphi 0, %s298
      %s316 = sphi 0, %s316
      %s318 = sphi 0, %s316
      %s319 = sphi 0, %s318
      %s333 = sphi 0, %s319
      %s339 = sphi 0, %s341
      %s342 = sphi 0, %s339
      %s343 = sphi 0, %s342
      %s359 = sphi 0, %s343
      %s365 = sphi 0, %s367
      %s368 = sphi 0, %s365
      %s369 = sphi 0, %s368
      %s385 = sphi 0, %s369
    $region4: #{tpu_custom_call.1} parent=1 // loop_header_branch
      %28 = sbr.rel (%p26) target = $region8
    $region5: #{tpu_custom_call.1} parent=1 // loop_body
      %s30 = ssub.s32 %s25, 1
      %s31 = ssub.s32 %s25, 2
      %s32 = sadd.s32 %s25, 1
      %s33 = ssub.s32 %s25, %s32
      %p34 = scmp.eq.s32.totalorder %s33, 0
      %s36 = sadd.s32 %s35, 1
      %s37 = scalar_select %p34, %s35, %s36
      %p40 = pneg %p34
      %p41 = scmp.eq.s32.totalorder %s25, 7
      %p42 = por %p40, %p41
      %p43 = scmp.ne.s32.totalorder %s35, %s38
      %p44 = scmp.eq.s32.totalorder %s25, 0
      %p45 = por %p43, %p44
      %p46 = scmp.ne.s32.totalorder %s35, %s38
      %p47 = scmp.eq.s32.totalorder %s30, 7
      %p48 = por %p46, %p47
      %p49 = scmp.ne.s32.totalorder %s38, %s39
      %p50 = scmp.eq.s32.totalorder %s30, 0
      %p51 = por %p49, %p50
      %p52 = scmp.ne.s32.totalorder %s38, %s39
      %p53 = scmp.eq.s32.totalorder %s31, 7
      %p54 = por %p52, %p53
      %p56 = scmp.ne.s32.totalorder %s39, %s55
      %p57 = scmp.eq.s32.totalorder %s31, 0
      %p58 = por %p56, %p57
      %s59 = ssub.s32 %s25, %s32
      %p60 = scmp.eq.s32.totalorder %s59, 0
      %s62 = sadd.s32 %s61, 1
      %s63 = scalar_select %p60, %s61, %s62
      %p66 = pneg %p60
      %p67 = scmp.eq.s32.totalorder %s25, 7
      %p68 = por %p66, %p67
      %p69 = scmp.ne.s32.totalorder %s61, %s64
      %p70 = scmp.eq.s32.totalorder %s25, 0
      %p71 = por %p69, %p70
      %p72 = scmp.ne.s32.totalorder %s61, %s64
      %p73 = scmp.eq.s32.totalorder %s30, 7
      %p74 = por %p72, %p73
      %p75 = scmp.ne.s32.totalorder %s64, %s65
      %p76 = scmp.eq.s32.totalorder %s30, 0
      %p77 = por %p75, %p76
      %p78 = scmp.ne.s32.totalorder %s64, %s65
      %p79 = scmp.eq.s32.totalorder %s31, 7
      %p80 = por %p78, %p79
      %p82 = scmp.ne.s32.totalorder %s65, %s81
      %p83 = scmp.eq.s32.totalorder %s31, 0
      %p84 = por %p82, %p83
      %s86 = sadd.s32 %s85, 1
      %p89 = scmp.eq.s32.totalorder %s25, 7
      %p90 = scmp.ne.s32.totalorder %s85, %s87
      %p91 = scmp.eq.s32.totalorder %s25, 0
      %p92 = por %p90, %p91
      %p93 = scmp.ne.s32.totalorder %s85, %s87
      %p94 = scmp.eq.s32.totalorder %s30, 7
      %p95 = por %p93, %p94
      %p96 = scmp.ne.s32.totalorder %s87, %s88
      %p97 = scmp.eq.s32.totalorder %s30, 0
      %p98 = por %p96, %p97
      %p99 = scmp.ne.s32.totalorder %s87, %s88
      %p100 = scmp.eq.s32.totalorder %s31, 7
      %p101 = por %p99, %p100
      %p103 = scmp.ne.s32.totalorder %s88, %s102
      %p104 = scmp.eq.s32.totalorder %s31, 0
      %p105 = por %p103, %p104
      %s107 = sadd.s32 %s106, 1
      %p110 = scmp.eq.s32.totalorder %s25, 7
      %p111 = scmp.ne.s32.totalorder %s106, %s108
      %p112 = scmp.eq.s32.totalorder %s25, 0
      %p113 = por %p111, %p112
      %p114 = scmp.ne.s32.totalorder %s106, %s108
      %p115 = scmp.eq.s32.totalorder %s30, 7
      %p116 = por %p114, %p115
      %p117 = scmp.ne.s32.totalorder %s108, %s109
      %p118 = scmp.eq.s32.totalorder %s30, 0
      %p119 = por %p117, %p118
      %p120 = scmp.ne.s32.totalorder %s108, %s109
      %p121 = scmp.eq.s32.totalorder %s31, 7
      %p122 = por %p120, %p121
      %p124 = scmp.ne.s32.totalorder %s109, %s123
      %p125 = scmp.eq.s32.totalorder %s31, 0
      %p126 = por %p124, %p125
      %s128 = sadd.s32 %s127, 1
      %p131 = scmp.eq.s32.totalorder %s25, 7
      %p132 = scmp.ne.s32.totalorder %s127, %s129
      %p133 = scmp.eq.s32.totalorder %s25, 0
      %p134 = por %p132, %p133
      %p135 = scmp.ne.s32.totalorder %s127, %s129
      %p136 = scmp.eq.s32.totalorder %s30, 7
      %p137 = por %p135, %p136
      %p138 = scmp.ne.s32.totalorder %s129, %s130
      %p139 = scmp.eq.s32.totalorder %s30, 0
      %p140 = por %p138, %p139
      %p141 = scmp.ne.s32.totalorder %s129, %s130
      %p142 = scmp.eq.s32.totalorder %s31, 7
      %p143 = por %p141, %p142
      %p145 = scmp.ne.s32.totalorder %s130, %s144
      %p146 = scmp.eq.s32.totalorder %s31, 0
      %p147 = por %p145, %p146
      %s149 = sadd.s32 %s148, 1
      %p152 = scmp.eq.s32.totalorder %s25, 7
      %p153 = scmp.ne.s32.totalorder %s148, %s150
      %p154 = scmp.eq.s32.totalorder %s25, 0
      %p155 = por %p153, %p154
      %p156 = scmp.ne.s32.totalorder %s148, %s150
      %p157 = scmp.eq.s32.totalorder %s30, 7
      %p158 = por %p156, %p157
      %p159 = scmp.ne.s32.totalorder %s150, %s151
      %p160 = scmp.eq.s32.totalorder %s30, 0
      %p161 = por %p159, %p160
      %p162 = scmp.ne.s32.totalorder %s150, %s151
      %p163 = scmp.eq.s32.totalorder %s31, 7
      %p164 = por %p162, %p163
      %p166 = scmp.ne.s32.totalorder %s151, %s165
      %p167 = scmp.eq.s32.totalorder %s31, 0
      %p168 = por %p166, %p167
      %s170 = sadd.s32 %s169, 1
      %p173 = scmp.eq.s32.totalorder %s25, 7
      %p174 = scmp.ne.s32.totalorder %s169, %s171
      %p175 = scmp.eq.s32.totalorder %s25, 0
      %p176 = por %p174, %p175
      %p177 = scmp.ne.s32.totalorder %s169, %s171
      %p178 = scmp.eq.s32.totalorder %s30, 7
      %p179 = por %p177, %p178
      %p180 = scmp.ne.s32.totalorder %s171, %s172
      %p181 = scmp.eq.s32.totalorder %s30, 0
      %p182 = por %p180, %p181
      %p183 = scmp.ne.s32.totalorder %s171, %s172
      %p184 = scmp.eq.s32.totalorder %s31, 7
      %p185 = por %p183, %p184
      %p187 = scmp.ne.s32.totalorder %s172, %s186
      %p188 = scmp.eq.s32.totalorder %s31, 0
      %p189 = por %p187, %p188
      %s191 = sadd.s32 %s190, 1
      %p194 = scmp.eq.s32.totalorder %s25, 7
      %p195 = scmp.ne.s32.totalorder %s190, %s192
      %p196 = scmp.eq.s32.totalorder %s25, 0
      %p197 = por %p195, %p196
      %p198 = scmp.ne.s32.totalorder %s190, %s192
      %p199 = scmp.eq.s32.totalorder %s30, 7
      %p200 = por %p198, %p199
      %p201 = scmp.ne.s32.totalorder %s192, %s193
      %p202 = scmp.eq.s32.totalorder %s30, 0
      %p203 = por %p201, %p202
      %p204 = scmp.ne.s32.totalorder %s192, %s193
      %p205 = scmp.eq.s32.totalorder %s31, 7
      %p206 = por %p204, %p205
      %p208 = scmp.ne.s32.totalorder %s193, %s207
      %p209 = scmp.eq.s32.totalorder %s31, 0
      %p210 = por %p208, %p209
      %s212 = sadd.s32 %s211, 1
      %p215 = scmp.eq.s32.totalorder %s25, 7
      %p216 = scmp.ne.s32.totalorder %s211, %s213
      %p217 = scmp.eq.s32.totalorder %s25, 0
      %p218 = por %p216, %p217
      %p219 = scmp.ne.s32.totalorder %s211, %s213
      %p220 = scmp.eq.s32.totalorder %s30, 7
      %p221 = por %p219, %p220
      %p222 = scmp.ne.s32.totalorder %s213, %s214
      %p223 = scmp.eq.s32.totalorder %s30, 0
      %p224 = por %p222, %p223
      %p225 = scmp.ne.s32.totalorder %s213, %s214
      %p226 = scmp.eq.s32.totalorder %s31, 7
      %p227 = por %p225, %p226
      %p229 = scmp.ne.s32.totalorder %s214, %s228
      %p230 = scmp.eq.s32.totalorder %s31, 0
      %p231 = por %p229, %p230
      %s233 = sadd.s32 %s232, 1
      %p236 = scmp.eq.s32.totalorder %s25, 7
      %p237 = scmp.ne.s32.totalorder %s232, %s234
      %p238 = scmp.eq.s32.totalorder %s25, 0
      %p239 = por %p237, %p238
      %p240 = scmp.ne.s32.totalorder %s232, %s234
      %p241 = scmp.eq.s32.totalorder %s30, 7
      %p242 = por %p240, %p241
      %p243 = scmp.ne.s32.totalorder %s234, %s235
      %p244 = scmp.eq.s32.totalorder %s30, 0
      %p245 = por %p243, %p244
      %p246 = scmp.ne.s32.totalorder %s234, %s235
      %p247 = scmp.eq.s32.totalorder %s31, 7
      %p248 = por %p246, %p247
      %p250 = scmp.ne.s32.totalorder %s235, %s249
      %p251 = scmp.eq.s32.totalorder %s31, 0
      %p252 = por %p250, %p251
      %s254 = sadd.s32 %s253, 1
      %p257 = scmp.eq.s32.totalorder %s25, 7
      %p258 = scmp.ne.s32.totalorder %s253, %s255
      %p259 = scmp.eq.s32.totalorder %s25, 0
      %p260 = por %p258, %p259
      %p261 = scmp.ne.s32.totalorder %s253, %s255
      %p262 = scmp.eq.s32.totalorder %s30, 7
      %p263 = por %p261, %p262
      %p264 = scmp.ne.s32.totalorder %s255, %s256
      %p265 = scmp.eq.s32.totalorder %s30, 0
      %p266 = por %p264, %p265
      %p267 = scmp.ne.s32.totalorder %s255, %s256
      %p268 = scmp.eq.s32.totalorder %s31, 7
      %p269 = por %p267, %p268
      %p271 = scmp.ne.s32.totalorder %s256, %s270
      %p272 = scmp.eq.s32.totalorder %s31, 0
      %p273 = por %p271, %p272
      %s275 = sadd.s32 %s274, 1
      %p278 = scmp.eq.s32.totalorder %s25, 7
      %p279 = scmp.ne.s32.totalorder %s274, %s276
      %p280 = scmp.eq.s32.totalorder %s25, 0
      %p281 = por %p279, %p280
      %p282 = scmp.ne.s32.totalorder %s274, %s276
      %p283 = scmp.eq.s32.totalorder %s30, 7
      %p284 = por %p282, %p283
      %p285 = scmp.ne.s32.totalorder %s276, %s277
      %p286 = scmp.eq.s32.totalorder %s30, 0
      %p287 = por %p285, %p286
      %p288 = scmp.ne.s32.totalorder %s276, %s277
      %p289 = scmp.eq.s32.totalorder %s31, 7
      %p290 = por %p288, %p289
      %p292 = scmp.ne.s32.totalorder %s277, %s291
      %p293 = scmp.eq.s32.totalorder %s31, 0
      %p294 = por %p292, %p293
      %s296 = sadd.s32 %s295, 1
      %p299 = scmp.eq.s32.totalorder %s25, 7
      %p300 = scmp.ne.s32.totalorder %s295, %s297
      %p301 = scmp.eq.s32.totalorder %s25, 0
      %p302 = por %p300, %p301
      %p303 = scmp.ne.s32.totalorder %s295, %s297
      %p304 = scmp.eq.s32.totalorder %s30, 7
      %p305 = por %p303, %p304
      %p306 = scmp.ne.s32.totalorder %s297, %s298
      %p307 = scmp.eq.s32.totalorder %s30, 0
      %p308 = por %p306, %p307
      %p309 = scmp.ne.s32.totalorder %s297, %s298
      %p310 = scmp.eq.s32.totalorder %s31, 7
      %p311 = por %p309, %p310
      %p313 = scmp.ne.s32.totalorder %s298, %s312
      %p314 = scmp.eq.s32.totalorder %s31, 0
      %p315 = por %p313, %p314
      %s317 = sadd.s32 %s316, 1
      %p320 = scmp.eq.s32.totalorder %s25, 7
      %p321 = scmp.ne.s32.totalorder %s316, %s318
      %p322 = scmp.eq.s32.totalorder %s25, 0
      %p323 = por %p321, %p322
      %p324 = scmp.ne.s32.totalorder %s316, %s318
      %p325 = scmp.eq.s32.totalorder %s30, 7
      %p326 = por %p324, %p325
      %p327 = scmp.ne.s32.totalorder %s318, %s319
      %p328 = scmp.eq.s32.totalorder %s30, 0
      %p329 = por %p327, %p328
      %p330 = scmp.ne.s32.totalorder %s318, %s319
      %p331 = scmp.eq.s32.totalorder %s31, 7
      %p332 = por %p330, %p331
      %p334 = scmp.ne.s32.totalorder %s319, %s333
      %p335 = scmp.eq.s32.totalorder %s31, 0
      %p336 = por %p334, %p335
      %s337 = ssub.s32 %s25, %s32
      %p338 = scmp.eq.s32.totalorder %s337, 0
      %s340 = sadd.s32 %s339, 1
      %s341 = scalar_select %p338, %s339, %s340
      %p344 = pneg %p338
      %p345 = scmp.eq.s32.totalorder %s25, 7
      %p346 = por %p344, %p345
      %p347 = scmp.ne.s32.totalorder %s339, %s342
      %p348 = scmp.eq.s32.totalorder %s25, 0
      %p349 = por %p347, %p348
      %p350 = scmp.ne.s32.totalorder %s339, %s342
      %p351 = scmp.eq.s32.totalorder %s30, 7
      %p352 = por %p350, %p351
      %p353 = scmp.ne.s32.totalorder %s342, %s343
      %p354 = scmp.eq.s32.totalorder %s30, 0
      %p355 = por %p353, %p354
      %p356 = scmp.ne.s32.totalorder %s342, %s343
      %p357 = scmp.eq.s32.totalorder %s31, 7
      %p358 = por %p356, %p357
      %p360 = scmp.ne.s32.totalorder %s343, %s359
      %p361 = scmp.eq.s32.totalorder %s31, 0
      %p362 = por %p360, %p361
      %s363 = ssub.s32 %s25, %s32
      %p364 = scmp.eq.s32.totalorder %s363, 0
      %s366 = sadd.s32 %s365, 1
      %s367 = scalar_select %p364, %s365, %s366
      %p370 = pneg %p364
      %p371 = scmp.eq.s32.totalorder %s25, 7
      %p372 = por %p370, %p371
      %p373 = scmp.ne.s32.totalorder %s365, %s368
      %p374 = scmp.eq.s32.totalorder %s25, 0
      %p375 = por %p373, %p374
      %p376 = scmp.ne.s32.totalorder %s365, %s368
      %p377 = scmp.eq.s32.totalorder %s30, 7
      %p378 = por %p376, %p377
      %p379 = scmp.ne.s32.totalorder %s368, %s369
      %p380 = scmp.eq.s32.totalorder %s30, 0
      %p381 = por %p379, %p380
      %p382 = scmp.ne.s32.totalorder %s368, %s369
      %p383 = scmp.eq.s32.totalorder %s31, 7
      %p384 = por %p382, %p383
      %p386 = scmp.ne.s32.totalorder %s369, %s385
      %p387 = scmp.eq.s32.totalorder %s31, 0
      %p388 = por %p386, %p387
      %p389 = scmp.le.s32.totalorder 1, %s25
      %p390 = scmp.lt.s32.totalorder %s25, 9
      %p391 = pnand %p389, %p390
      %p392 = pneg %p391
      // Predicated region
      $region9: #{tpu_custom_call.1} parent=5 // pred_check
        _
      $region10: #{tpu_custom_call.1} parent=5 // pred_check_branch
        %394 = sbr.rel (%p391) target = $region12
      $region11: #{tpu_custom_call.1} parent=5 // pred_region
        %s395 = ssub.s32 %s25, 1
        // Predicated region
        $region13: #{tpu_custom_call.1} parent=11 // pred_check
          %p396 = pneg %p98
        $region14: #{tpu_custom_call.1} parent=11 // pred_check_branch
          %398 = sbr.rel (%p396) target = $region16
        $region15: #{tpu_custom_call.1} parent=11 // pred_region
          _
        $region16: #{tpu_custom_call.1} parent=11 // pred_fallthru
          _
        // Predicated region
        $region17: #{tpu_custom_call.1} parent=11 // pred_check
          %p399 = pneg %p119
        $region18: #{tpu_custom_call.1} parent=11 // pred_check_branch
          %401 = sbr.rel (%p399) target = $region20
        $region19: #{tpu_custom_call.1} parent=11 // pred_region
          _
        $region20: #{tpu_custom_call.1} parent=11 // pred_fallthru
          _
        // Predicated region
        $region21: #{tpu_custom_call.1} parent=11 // pred_check
          %p402 = pneg %p140
        $region22: #{tpu_custom_call.1} parent=11 // pred_check_branch
          %404 = sbr.rel (%p402) target = $region24
        $region23: #{tpu_custom_call.1} parent=11 // pred_region
          _
        $region24: #{tpu_custom_call.1} parent=11 // pred_fallthru
          _
        // Predicated region
        $region25: #{tpu_custom_call.1} parent=11 // pred_check
          %p405 = pneg %p161
        $region26: #{tpu_custom_call.1} parent=11 // pred_check_branch
          %407 = sbr.rel (%p405) target = $region28
        $region27: #{tpu_custom_call.1} parent=11 // pred_region
          _
        $region28: #{tpu_custom_call.1} parent=11 // pred_fallthru
          _
        // Predicated region
        $region29: #{tpu_custom_call.1} parent=11 // pred_check
          %p408 = pneg %p182
        $region30: #{tpu_custom_call.1} parent=11 // pred_check_branch
          %410 = sbr.rel (%p408) target = $region32
        $region31: #{tpu_custom_call.1} parent=11 // pred_region
          _
        $region32: #{tpu_custom_call.1} parent=11 // pred_fallthru
          _
        // Predicated region
        $region33: #{tpu_custom_call.1} parent=11 // pred_check
          %p411 = pneg %p203
        $region34: #{tpu_custom_call.1} parent=11 // pred_check_branch
          %413 = sbr.rel (%p411) target = $region36
        $region35: #{tpu_custom_call.1} parent=11 // pred_region
          _
        $region36: #{tpu_custom_call.1} parent=11 // pred_fallthru
          _
        // Predicated region
        $region37: #{tpu_custom_call.1} parent=11 // pred_check
          %p414 = pneg %p224
        $region38: #{tpu_custom_call.1} parent=11 // pred_check_branch
          %416 = sbr.rel (%p414) target = $region40
        $region39: #{tpu_custom_call.1} parent=11 // pred_region
          _
        $region40: #{tpu_custom_call.1} parent=11 // pred_fallthru
          _
        // Predicated region
        $region41: #{tpu_custom_call.1} parent=11 // pred_check
          %p417 = pneg %p245
        $region42: #{tpu_custom_call.1} parent=11 // pred_check_branch
          %419 = sbr.rel (%p417) target = $region44
        $region43: #{tpu_custom_call.1} parent=11 // pred_region
          _
        $region44: #{tpu_custom_call.1} parent=11 // pred_fallthru
          _
        // Predicated region
        $region45: #{tpu_custom_call.1} parent=11 // pred_check
          %p420 = pneg %p266
        $region46: #{tpu_custom_call.1} parent=11 // pred_check_branch
          %422 = sbr.rel (%p420) target = $region48
        $region47: #{tpu_custom_call.1} parent=11 // pred_region
          _
        $region48: #{tpu_custom_call.1} parent=11 // pred_fallthru
          _
        // Predicated region
        $region49: #{tpu_custom_call.1} parent=11 // pred_check
          %p423 = pneg %p287
        $region50: #{tpu_custom_call.1} parent=11 // pred_check_branch
          %425 = sbr.rel (%p423) target = $region52
        $region51: #{tpu_custom_call.1} parent=11 // pred_region
          _
        $region52: #{tpu_custom_call.1} parent=11 // pred_fallthru
          _
        // Predicated region
        $region53: #{tpu_custom_call.1} parent=11 // pred_check
          %p426 = pneg %p308
        $region54: #{tpu_custom_call.1} parent=11 // pred_check_branch
          %428 = sbr.rel (%p426) target = $region56
        $region55: #{tpu_custom_call.1} parent=11 // pred_region
          _
        $region56: #{tpu_custom_call.1} parent=11 // pred_fallthru
          _
        // Predicated region
        $region57: #{tpu_custom_call.1} parent=11 // pred_check
          %p429 = pneg %p329
        $region58: #{tpu_custom_call.1} parent=11 // pred_check_branch
          %431 = sbr.rel (%p429) target = $region60
        $region59: #{tpu_custom_call.1} parent=11 // pred_region
          _
        $region60: #{tpu_custom_call.1} parent=11 // pred_fallthru
          _
      $region12: #{tpu_custom_call.1} parent=5 // pred_fallthru
        _
      %p432 = scmp.lt.s32.totalorder %s25, 8
      // Predicated region
      $region61: #{tpu_custom_call.1} parent=5 // pred_check
        %p433 = pneg %p432
      $region62: #{tpu_custom_call.1} parent=5 // pred_check_branch
        %435 = sbr.rel (%p433) target = $region64
      $region63: #{tpu_custom_call.1} parent=5 // pred_region
        // Predicated region
        $region65: #{tpu_custom_call.1} parent=63 // pred_check
          %p436 = pneg %p45
        $region66: #{tpu_custom_call.1} parent=63 // pred_check_branch
          %438 = sbr.rel (%p436) target = $region68
        $region67: #{tpu_custom_call.1} parent=63 // pred_region
          %p439 = scmp.lt.s32.totalorder %s25, 7
          %s440 = scalar_select %p439, %s25, 7
          %s441 = smul.addr %s440, 44
          %s442 = smul.addr %s441, 8
          %s443 = scalar_lea.vmem %s0, %s442
        $region68: #{tpu_custom_call.1} parent=63 // pred_fallthru
          _
        // Predicated region
        $region69: #{tpu_custom_call.1} parent=63 // pred_check
          %p444 = pneg %p71
        $region70: #{tpu_custom_call.1} parent=63 // pred_check_branch
          %446 = sbr.rel (%p444) target = $region72
        $region71: #{tpu_custom_call.1} parent=63 // pred_region
          %p447 = scmp.lt.s32.totalorder %s25, 7
          %s448 = scalar_select %p447, %s25, 7
          %s449 = smul.addr %s448, 8
          %s450 = scalar_lea.vmem %s1, %s449
        $region72: #{tpu_custom_call.1} parent=63 // pred_fallthru
          _
      $region64: #{tpu_custom_call.1} parent=5 // pred_fallthru
        _
      %p451 = scmp.le.s32.totalorder 1, %s25
      %p452 = scmp.lt.s32.totalorder %s25, 9
      %p453 = pnand %p451, %p452
      %p454 = pneg %p453
      // Predicated region
      $region73: #{tpu_custom_call.1} parent=5 // pred_check
        _
      $region74: #{tpu_custom_call.1} parent=5 // pred_check_branch
        %456 = sbr.rel (%p453) target = $region76
      $region75: #{tpu_custom_call.1} parent=5 // pred_region
        %s457 = ssub.s32 %s25, 1
        %p458 = scmp.lt.s32.totalorder %s30, 7
        %s459 = scalar_select %p458, %s30, 7
        %s460 = smul.addr %s459, 44
        %s461 = smul.addr %s460, 8
        %s462 = scalar_lea.vmem %s0, %s461
        %p463 = pneg %p51
        %p464 = pneg %p48
        %p465 = scmp.lt.s32.totalorder %s30, 7
        %s466 = scalar_select %p465, %s30, 7
        %s467 = smul.addr %s466, 8
        %s468 = scalar_lea.vmem %s1, %s467
        %p469 = pneg %p77
        %p470 = pneg %p74
        %p471 = pneg %p98
        %p472 = pneg %p95
        %p473 = pneg %p119
        %p474 = pneg %p116
        %p475 = pneg %p140
        %p476 = pneg %p137
        %p477 = pneg %p161
        %p478 = pneg %p158
        %p479 = pneg %p182
        %p480 = pneg %p179
        %p481 = pneg %p203
        %p482 = pneg %p200
        %p483 = pneg %p224
        %p484 = pneg %p221
        %p485 = pneg %p245
        %p486 = pneg %p242
        %p487 = pneg %p266
        %p488 = pneg %p263
        %p489 = pneg %p287
        %p490 = pneg %p284
        %p491 = pneg %p308
        %p492 = pneg %p305
        %p493 = pneg %p329
        %p494 = pneg %p326
        %p495 = pneg %p355
        %p496 = pneg %p352
        %s497 = sand.u32 %s342, 1
        %s498 = scalar_lea.sflag [#allocation4], %s497
        %s499 = sand.u32 %s342, 1
        %s500 = smul.addr %s499, 180
        %s501 = scalar_lea.vmem [#allocation3], %s500
        %p502 = pneg %p381
        %p503 = pneg %p378
        %p504 = scmp.lt.s32.totalorder %s30, 7
        %s505 = scalar_select %p504, %s30, 7
        %s506 = smul.addr %s505, 8
        %s507 = scalar_lea.vmem %s15, %s506
        %p508 = scmp.lt.s32.totalorder %s30, 7
        %s509 = scalar_select %p508, %s30, 7
        %s510 = smul.addr %s509, 44
        %s511 = smul.addr %s510, 8
        %s512 = scalar_lea.vmem %s0, %s511
        %p513 = scmp.lt.s32.totalorder %s30, 7
        %s514 = scalar_select %p513, %s30, 7
        %s515 = smul.addr %s514, 8
        %s516 = scalar_lea.vmem %s1, %s515
        %p517 = scmp.lt.s32.totalorder %s30, 7
        %s518 = scalar_select %p517, %s30, 7
        %s519 = smul.addr %s518, 8
        %s520 = scalar_lea.vmem %s15, %s519
        %v522 = vld [vmem:[%s512] sm:$0xff]
        %v523 = vld [vmem:[%s512 + $0x8] sm:$0xff]
        %v524 = vld [vmem:[%s512 + $0x10] sm:$0xff]
        %v525 = vld [vmem:[%s512 + $0x18] sm:$0xff]
        %v526 = vld [vmem:[%s512 + $0x20] sm:$0xff]
        %v527 = vld [vmem:[%s512 + $0x28] sm:$0xff]
        %v528 = vld [vmem:[%s512 + $0x30] sm:$0xff]
        %v529 = vld [vmem:[%s512 + $0x38] sm:$0xff]
        %v530 = vld [vmem:[%s512 + $0x40] sm:$0xff]
        %v531 = vld [vmem:[%s512 + $0x48] sm:$0xff]
        %v532 = vld [vmem:[%s512 + $0x50] sm:$0xff]
        %v533 = vld [vmem:[%s512 + $0x58] sm:$0xff]
        %v534 = vld [vmem:[%s512 + $0x60] sm:$0xff]
        %v535 = vld [vmem:[%s512 + $0x68] sm:$0xff]
        %v536 = vld [vmem:[%s512 + $0x70] sm:$0xff]
        %v537 = vld [vmem:[%s512 + $0x78] sm:$0xff]
        %v538 = vld [vmem:[%s512 + $0x80] sm:$0xff]
        %v539 = vld [vmem:[%s512 + $0x88] sm:$0xff]
        %v540 = vld [vmem:[%s512 + $0x90] sm:$0xff]
        %v541 = vld [vmem:[%s512 + $0x98] sm:$0xff]
        %v542 = vld [vmem:[%s512 + $0xa0] sm:$0xff]
        %v543 = vld [vmem:[%s512 + $0xa8] sm:$0xff]
        %v544 = vld [vmem:[%s512 + $0xb0] sm:$0xff]
        %v545 = vld [vmem:[%s512 + $0xb8] sm:$0xff]
        %v546 = vld [vmem:[%s512 + $0xc0] sm:$0xff]
        %v547 = vld [vmem:[%s512 + $0xc8] sm:$0xff]
        %v548 = vld [vmem:[%s512 + $0xd0] sm:$0xff]
        %v549 = vld [vmem:[%s512 + $0xd8] sm:$0xff]
        %v550 = vld [vmem:[%s512 + $0xe0] sm:$0xff]
        %v551 = vld [vmem:[%s512 + $0xe8] sm:$0xff]
        %v552 = vld [vmem:[%s512 + $0xf0] sm:$0xff]
        %v553 = vld [vmem:[%s512 + $0xf8] sm:$0xff]
        %v554 = vld [vmem:[%s512 + $0x100] sm:$0xff]
        %v555 = vld [vmem:[%s512 + $0x108] sm:$0xff]
        %v556 = vld [vmem:[%s512 + $0x110] sm:$0xff]
        %v557 = vld [vmem:[%s512 + $0x118] sm:$0xff]
        %v558 = vld [vmem:[%s512 + $0x120] sm:$0xff]
        %v559 = vld [vmem:[%s512 + $0x128] sm:$0xff]
        %v560 = vld [vmem:[%s512 + $0x130] sm:$0xff]
        %v561 = vld [vmem:[%s512 + $0x138] sm:$0xff]
        %v562 = vld [vmem:[%s512 + $0x140] sm:$0xff]
        %v563 = vld [vmem:[%s512 + $0x148] sm:$0xff]
        %v564 = vld [vmem:[%s512 + $0x150] sm:$0xff]
        %v565 = vld [vmem:[%s512 + $0x158] sm:$0xff]
        %v566 = vpack.c.bf16 %v522, %v522
        %v567 = vpack.c.bf16 %v523, %v523
        %v568 = vpack.c.bf16 %v524, %v524
        %v569 = vpack.c.bf16 %v525, %v525
        %v570 = vpack.c.bf16 %v526, %v526
        %v571 = vpack.c.bf16 %v527, %v527
        %v572 = vpack.c.bf16 %v528, %v528
        %v573 = vpack.c.bf16 %v529, %v529
        %v574 = vpack.c.bf16 %v530, %v530
        %v575 = vpack.c.bf16 %v531, %v531
        %v576 = vpack.c.bf16 %v532, %v532
        %v577 = vpack.c.bf16 %v533, %v533
        %v578 = vpack.c.bf16 %v534, %v534
        %v579 = vpack.c.bf16 %v535, %v535
        %v580 = vpack.c.bf16 %v536, %v536
        %v581 = vpack.c.bf16 %v537, %v537
        %v582 = vpack.c.bf16 %v538, %v538
        %v583 = vpack.c.bf16 %v539, %v539
        %v584 = vpack.c.bf16 %v540, %v540
        %v585 = vpack.c.bf16 %v541, %v541
        %v586 = vpack.c.bf16 %v542, %v542
        %v587 = vpack.c.bf16 %v543, %v543
        %v588 = vpack.c.bf16 %v544, %v544
        %v589 = vpack.c.bf16 %v545, %v545
        %v590 = vpack.c.bf16 %v546, %v546
        %v591 = vpack.c.bf16 %v547, %v547
        %v592 = vpack.c.bf16 %v548, %v548
        %v593 = vpack.c.bf16 %v549, %v549
        %v594 = vpack.c.bf16 %v550, %v550
        %v595 = vpack.c.bf16 %v551, %v551
        %v596 = vpack.c.bf16 %v552, %v552
        %v597 = vpack.c.bf16 %v553, %v553
        %v598 = vpack.c.bf16 %v554, %v554
        %v599 = vpack.c.bf16 %v555, %v555
        %v600 = vpack.c.bf16 %v556, %v556
        %v601 = vpack.c.bf16 %v557, %v557
        %v602 = vpack.c.bf16 %v558, %v558
        %v603 = vpack.c.bf16 %v559, %v559
        %v604 = vpack.c.bf16 %v560, %v560
        %v605 = vpack.c.bf16 %v561, %v561
        %v606 = vpack.c.bf16 %v562, %v562
        %v607 = vpack.c.bf16 %v563, %v563
        %v608 = vpack.c.bf16 %v564, %v564
        %v609 = vpack.c.bf16 %v565, %v565
        %v610 = vld [vmem:[%s2] sm:$0xf]
        %v611 = vld [vmem:[%s2 + $0x4] sm:$0xf]
        %v612 = vld [vmem:[%s2 + $0x8] sm:$0xf]
        %v613 = vld [vmem:[%s2 + $0xc] sm:$0xf]
        %v614 = vld [vmem:[%s2 + $0x10] sm:$0xf]
        %v615 = vld [vmem:[%s2 + $0x14] sm:$0xf]
        %v616 = vld [vmem:[%s2 + $0x18] sm:$0xf]
        %v617 = vld [vmem:[%s2 + $0x1c] sm:$0xf]
        %v618 = vld [vmem:[%s2 + $0x20] sm:$0xf]
        %v619 = vld [vmem:[%s2 + $0x24] sm:$0xf]
        %v620 = vld [vmem:[%s2 + $0x28] sm:$0xf]
        %v621 = vld [vmem:[%s2 + $0x2c] sm:$0xf]
        %v622 = vld [vmem:[%s2 + $0x30] sm:$0xf]
        %v623 = vld [vmem:[%s2 + $0x34] sm:$0xf]
        %v624 = vld [vmem:[%s2 + $0x38] sm:$0xf]
        %v625 = vld [vmem:[%s2 + $0x3c] sm:$0xf]
        %v626 = vld [vmem:[%s2 + $0x40] sm:$0xf]
        %v627 = vld [vmem:[%s2 + $0x44] sm:$0xf]
        %v628 = vld [vmem:[%s2 + $0x48] sm:$0xf]
        %v629 = vld [vmem:[%s2 + $0x4c] sm:$0xf]
        %v630 = vld [vmem:[%s2 + $0x50] sm:$0xf]
        %v631 = vld [vmem:[%s2 + $0x54] sm:$0xf]
        %v632 = vld [vmem:[%s2 + $0x58] sm:$0xf]
        %v633 = vld [vmem:[%s2 + $0x5c] sm:$0xf]
        %v634 = vld [vmem:[%s2 + $0x60] sm:$0xf]
        %v635 = vld [vmem:[%s2 + $0x64] sm:$0xf]
        %v636 = vld [vmem:[%s2 + $0x68] sm:$0xf]
        %v637 = vld [vmem:[%s2 + $0x6c] sm:$0xf]
        %v638 = vld [vmem:[%s2 + $0x70] sm:$0xf]
        %v639 = vld [vmem:[%s2 + $0x74] sm:$0xf]
        %v640 = vld [vmem:[%s2 + $0x78] sm:$0xf]
        %v641 = vld [vmem:[%s2 + $0x7c] sm:$0xf]
        %v642 = vld [vmem:[%s2 + $0x80] sm:$0xf]
        %v643 = vld [vmem:[%s2 + $0x84] sm:$0xf]
        %v644 = vld [vmem:[%s2 + $0x88] sm:$0xf]
        %v645 = vld [vmem:[%s2 + $0x8c] sm:$0xf]
        %v646 = vld [vmem:[%s2 + $0x90] sm:$0xf]
        %v647 = vld [vmem:[%s2 + $0x94] sm:$0xf]
        %v648 = vld [vmem:[%s2 + $0x98] sm:$0xf]
        %v649 = vld [vmem:[%s2 + $0x9c] sm:$0xf]
        %v650 = vld [vmem:[%s2 + $0xa0] sm:$0xf]
        %v651 = vld [vmem:[%s2 + $0xa4] sm:$0xf]
        %v652 = vld [vmem:[%s2 + $0xa8] sm:$0xf]
        %v653 = vld [vmem:[%s2 + $0xac] sm:$0xf]
        %v654 = vld [vmem:[%s2 + $0xb0] sm:$0xf]
        %v655 = vld [vmem:[%s2 + $0xb4] sm:$0xf]
        %v656 = vld [vmem:[%s2 + $0xb8] sm:$0xf]
        %v657 = vld [vmem:[%s2 + $0xbc] sm:$0xf]
        %v658 = vld [vmem:[%s2 + $0xc0] sm:$0xf]
        %v659 = vld [vmem:[%s2 + $0xc4] sm:$0xf]
        %v660 = vld [vmem:[%s2 + $0xc8] sm:$0xf]
        %v661 = vld [vmem:[%s2 + $0xcc] sm:$0xf]
        %v662 = vld [vmem:[%s2 + $0xd0] sm:$0xf]
        %v663 = vld [vmem:[%s2 + $0xd4] sm:$0xf]
        %v664 = vld [vmem:[%s2 + $0xd8] sm:$0xf]
        %v665 = vld [vmem:[%s2 + $0xdc] sm:$0xf]
        %v666 = vld [vmem:[%s2 + $0xe0] sm:$0xf]
        %v667 = vld [vmem:[%s2 + $0xe4] sm:$0xf]
        %v668 = vld [vmem:[%s2 + $0xe8] sm:$0xf]
        %v669 = vld [vmem:[%s2 + $0xec] sm:$0xf]
        %v670 = vld [vmem:[%s2 + $0xf0] sm:$0xf]
        %v671 = vld [vmem:[%s2 + $0xf4] sm:$0xf]
        %v672 = vld [vmem:[%s2 + $0xf8] sm:$0xf]
        %v673 = vld [vmem:[%s2 + $0xfc] sm:$0xf]
        %v674 = vld [vmem:[%s2 + $0x100] sm:$0xf]
        %v675 = vld [vmem:[%s2 + $0x104] sm:$0xf]
        %v676 = vld [vmem:[%s2 + $0x108] sm:$0xf]
        %v677 = vld [vmem:[%s2 + $0x10c] sm:$0xf]
        %v678 = vld [vmem:[%s2 + $0x110] sm:$0xf]
        %v679 = vld [vmem:[%s2 + $0x114] sm:$0xf]
        %v680 = vld [vmem:[%s2 + $0x118] sm:$0xf]
        %v681 = vld [vmem:[%s2 + $0x11c] sm:$0xf]
        %v682 = vld [vmem:[%s2 + $0x120] sm:$0xf]
        %v683 = vld [vmem:[%s2 + $0x124] sm:$0xf]
        %v684 = vld [vmem:[%s2 + $0x128] sm:$0xf]
        %v685 = vld [vmem:[%s2 + $0x12c] sm:$0xf]
        %v686 = vld [vmem:[%s2 + $0x130] sm:$0xf]
        %v687 = vld [vmem:[%s2 + $0x134] sm:$0xf]
        %v688 = vld [vmem:[%s2 + $0x138] sm:$0xf]
        %v689 = vld [vmem:[%s2 + $0x13c] sm:$0xf]
        %v690 = vld [vmem:[%s2 + $0x140] sm:$0xf]
        %v691 = vld [vmem:[%s2 + $0x144] sm:$0xf]
        %v692 = vld [vmem:[%s2 + $0x148] sm:$0xf]
        %v693 = vld [vmem:[%s2 + $0x14c] sm:$0xf]
        %v694 = vld [vmem:[%s2 + $0x150] sm:$0xf]
        %v695 = vld [vmem:[%s2 + $0x154] sm:$0xf]
        %v696 = vld [vmem:[%s2 + $0x158] sm:$0xf]
        %v697 = vld [vmem:[%s2 + $0x15c] sm:$0xf]
        %v698 = vld [vmem:[%s2 + $0x160] sm:$0xf]
        %v699 = vld [vmem:[%s2 + $0x164] sm:$0xf]
        %v700 = vld [vmem:[%s2 + $0x168] sm:$0xf]
        %v701 = vld [vmem:[%s2 + $0x16c] sm:$0xf]
        %v702 = vld [vmem:[%s2 + $0x170] sm:$0xf]
        %v703 = vld [vmem:[%s2 + $0x174] sm:$0xf]
        %v704 = vld [vmem:[%s2 + $0x178] sm:$0xf]
        %v705 = vld [vmem:[%s2 + $0x17c] sm:$0xf]
        %v706 = vld [vmem:[%s2 + $0x180] sm:$0xf]
        %v707 = vld [vmem:[%s2 + $0x184] sm:$0xf]
        %v708 = vld [vmem:[%s2 + $0x188] sm:$0xf]
        %v709 = vld [vmem:[%s2 + $0x18c] sm:$0xf]
        %v710 = vld [vmem:[%s2 + $0x190] sm:$0xf]
        %v711 = vld [vmem:[%s2 + $0x194] sm:$0xf]
        %v712 = vld [vmem:[%s2 + $0x198] sm:$0xf]
        %v713 = vld [vmem:[%s2 + $0x19c] sm:$0xf]
        %v714 = vld [vmem:[%s2 + $0x1a0] sm:$0xf]
        %v715 = vld [vmem:[%s2 + $0x1a4] sm:$0xf]
        %v716 = vld [vmem:[%s2 + $0x1a8] sm:$0xf]
        %v717 = vld [vmem:[%s2 + $0x1ac] sm:$0xf]
        %v718 = vld [vmem:[%s2 + $0x1b0] sm:$0xf]
        %v719 = vld [vmem:[%s2 + $0x1b4] sm:$0xf]
        %v720 = vld [vmem:[%s2 + $0x1b8] sm:$0xf]
        %v721 = vld [vmem:[%s2 + $0x1bc] sm:$0xf]
        %v722 = vld [vmem:[%s2 + $0x1c0] sm:$0xf]
        %v723 = vld [vmem:[%s2 + $0x1c4] sm:$0xf]
        %v724 = vld [vmem:[%s2 + $0x1c8] sm:$0xf]
        %v725 = vld [vmem:[%s2 + $0x1cc] sm:$0xf]
        %v726 = vld [vmem:[%s2 + $0x1d0] sm:$0xf]
        %v727 = vld [vmem:[%s2 + $0x1d4] sm:$0xf]
        %v728 = vld [vmem:[%s2 + $0x1d8] sm:$0xf]
        %v729 = vld [vmem:[%s2 + $0x1dc] sm:$0xf]
        %v730 = vld [vmem:[%s2 + $0x1e0] sm:$0xf]
        %v731 = vld [vmem:[%s2 + $0x1e4] sm:$0xf]
        %v732 = vld [vmem:[%s2 + $0x1e8] sm:$0xf]
        %v733 = vld [vmem:[%s2 + $0x1ec] sm:$0xf]
        %v734 = vld [vmem:[%s2 + $0x1f0] sm:$0xf]
        %v735 = vld [vmem:[%s2 + $0x1f4] sm:$0xf]
        %v736 = vld [vmem:[%s2 + $0x1f8] sm:$0xf]
        %v737 = vld [vmem:[%s2 + $0x1fc] sm:$0xf]
        %v738 = vld [vmem:[%s2 + $0x200] sm:$0xf]
        %v739 = vld [vmem:[%s2 + $0x204] sm:$0xf]
        %v740 = vld [vmem:[%s2 + $0x208] sm:$0xf]
        %v741 = vld [vmem:[%s2 + $0x20c] sm:$0xf]
        %v742 = vld [vmem:[%s2 + $0x210] sm:$0xf]
        %v743 = vld [vmem:[%s2 + $0x214] sm:$0xf]
        %v744 = vld [vmem:[%s2 + $0x218] sm:$0xf]
        %v745 = vld [vmem:[%s2 + $0x21c] sm:$0xf]
        %v746 = vld [vmem:[%s2 + $0x220] sm:$0xf]
        %v747 = vld [vmem:[%s2 + $0x224] sm:$0xf]
        %v748 = vld [vmem:[%s2 + $0x228] sm:$0xf]
        %v749 = vld [vmem:[%s2 + $0x22c] sm:$0xf]
        %v750 = vld [vmem:[%s2 + $0x230] sm:$0xf]
        %v751 = vld [vmem:[%s2 + $0x234] sm:$0xf]
        %v752 = vld [vmem:[%s2 + $0x238] sm:$0xf]
        %v753 = vld [vmem:[%s2 + $0x23c] sm:$0xf]
        %v754 = vld [vmem:[%s2 + $0x240] sm:$0xf]
        %v755 = vld [vmem:[%s2 + $0x244] sm:$0xf]
        %v756 = vld [vmem:[%s2 + $0x248] sm:$0xf]
        %v757 = vld [vmem:[%s2 + $0x24c] sm:$0xf]
        %v758 = vld [vmem:[%s2 + $0x250] sm:$0xf]
        %v759 = vld [vmem:[%s2 + $0x254] sm:$0xf]
        %v760 = vld [vmem:[%s2 + $0x258] sm:$0xf]
        %v761 = vld [vmem:[%s2 + $0x25c] sm:$0xf]
        %v762 = vld [vmem:[%s2 + $0x260] sm:$0xf]
        %v763 = vld [vmem:[%s2 + $0x264] sm:$0xf]
        %v764 = vld [vmem:[%s2 + $0x268] sm:$0xf]
        %v765 = vld [vmem:[%s2 + $0x26c] sm:$0xf]
        %v766 = vld [vmem:[%s2 + $0x270] sm:$0xf]
        %v767 = vld [vmem:[%s2 + $0x274] sm:$0xf]
        %v768 = vld [vmem:[%s2 + $0x278] sm:$0xf]
        %v769 = vld [vmem:[%s2 + $0x27c] sm:$0xf]
        %v770 = vld [vmem:[%s2 + $0x280] sm:$0xf]
        %v771 = vld [vmem:[%s2 + $0x284] sm:$0xf]
        %v772 = vld [vmem:[%s2 + $0x288] sm:$0xf]
        %v773 = vld [vmem:[%s2 + $0x28c] sm:$0xf]
        %v774 = vld [vmem:[%s2 + $0x290] sm:$0xf]
        %v775 = vld [vmem:[%s2 + $0x294] sm:$0xf]
        %v776 = vld [vmem:[%s2 + $0x298] sm:$0xf]
        %v777 = vld [vmem:[%s2 + $0x29c] sm:$0xf]
        %v778 = vld [vmem:[%s2 + $0x2a0] sm:$0xf]
        %v779 = vld [vmem:[%s2 + $0x2a4] sm:$0xf]
        %v780 = vld [vmem:[%s2 + $0x2a8] sm:$0xf]
        %v781 = vld [vmem:[%s2 + $0x2ac] sm:$0xf]
        %v782 = vld [vmem:[%s2 + $0x2b0] sm:$0xf]
        %v783 = vld [vmem:[%s2 + $0x2b4] sm:$0xf]
        %v784 = vld [vmem:[%s2 + $0x2b8] sm:$0xf]
        %v785 = vld [vmem:[%s2 + $0x2bc] sm:$0xf]
        %v786 = vld [vmem:[%s2 + $0x2c0] sm:$0xf]
        %v787 = vld [vmem:[%s2 + $0x2c4] sm:$0xf]
        %v788 = vld [vmem:[%s2 + $0x2c8] sm:$0xf]
        %v789 = vld [vmem:[%s2 + $0x2cc] sm:$0xf]
        %v790 = vld [vmem:[%s2 + $0x2d0] sm:$0xf]
        %v791 = vld [vmem:[%s2 + $0x2d4] sm:$0xf]
        %v792 = vld [vmem:[%s2 + $0x2d8] sm:$0xf]
        %v793 = vld [vmem:[%s2 + $0x2dc] sm:$0xf]
        %v794 = vld [vmem:[%s2 + $0x2e0] sm:$0xf]
        %v795 = vld [vmem:[%s2 + $0x2e4] sm:$0xf]
        %v796 = vld [vmem:[%s2 + $0x2e8] sm:$0xf]
        %v797 = vld [vmem:[%s2 + $0x2ec] sm:$0xf]
        %v798 = vld [vmem:[%s2 + $0x2f0] sm:$0xf]
        %v799 = vld [vmem:[%s2 + $0x2f4] sm:$0xf]
        %v800 = vld [vmem:[%s2 + $0x2f8] sm:$0xf]
        %v801 = vld [vmem:[%s2 + $0x2fc] sm:$0xf]
        %v802 = vld [vmem:[%s2 + $0x300] sm:$0xf]
        %v803 = vld [vmem:[%s2 + $0x304] sm:$0xf]
        %v804 = vld [vmem:[%s2 + $0x308] sm:$0xf]
        %v805 = vld [vmem:[%s2 + $0x30c] sm:$0xf]
        %v806 = vld [vmem:[%s2 + $0x310] sm:$0xf]
        %v807 = vld [vmem:[%s2 + $0x314] sm:$0xf]
        %v808 = vld [vmem:[%s2 + $0x318] sm:$0xf]
        %v809 = vld [vmem:[%s2 + $0x31c] sm:$0xf]
        %v810 = vld [vmem:[%s2 + $0x320] sm:$0xf]
        %v811 = vld [vmem:[%s2 + $0x324] sm:$0xf]
        %v812 = vld [vmem:[%s2 + $0x328] sm:$0xf]
        %v813 = vld [vmem:[%s2 + $0x32c] sm:$0xf]
        %v814 = vld [vmem:[%s2 + $0x330] sm:$0xf]
        %v815 = vld [vmem:[%s2 + $0x334] sm:$0xf]
        %v816 = vld [vmem:[%s2 + $0x338] sm:$0xf]
        %v817 = vld [vmem:[%s2 + $0x33c] sm:$0xf]
        %v818 = vld [vmem:[%s2 + $0x340] sm:$0xf]
        %v819 = vld [vmem:[%s2 + $0x344] sm:$0xf]
        %v820 = vld [vmem:[%s2 + $0x348] sm:$0xf]
        %v821 = vld [vmem:[%s2 + $0x34c] sm:$0xf]
        %v822 = vld [vmem:[%s2 + $0x350] sm:$0xf]
        %v823 = vld [vmem:[%s2 + $0x354] sm:$0xf]
        %v824 = vld [vmem:[%s2 + $0x358] sm:$0xf]
        %v825 = vld [vmem:[%s2 + $0x35c] sm:$0xf]
        %v826 = vld [vmem:[%s2 + $0x360] sm:$0xf]
        %v827 = vld [vmem:[%s2 + $0x364] sm:$0xf]
        %v828 = vld [vmem:[%s2 + $0x368] sm:$0xf]
        %v829 = vld [vmem:[%s2 + $0x36c] sm:$0xf]
        %v830 = vld [vmem:[%s2 + $0x370] sm:$0xf]
        %v831 = vld [vmem:[%s2 + $0x374] sm:$0xf]
        %v832 = vld [vmem:[%s2 + $0x378] sm:$0xf]
        %v833 = vld [vmem:[%s2 + $0x37c] sm:$0xf]
        %v834 = vld [vmem:[%s2 + $0x380] sm:$0xf]
        %v835 = vld [vmem:[%s2 + $0x384] sm:$0xf]
        %v836 = vld [vmem:[%s2 + $0x388] sm:$0xf]
        %v837 = vld [vmem:[%s2 + $0x38c] sm:$0xf]
        %v838 = vld [vmem:[%s2 + $0x390] sm:$0xf]
        %v839 = vld [vmem:[%s2 + $0x394] sm:$0xf]
        %v840 = vld [vmem:[%s2 + $0x398] sm:$0xf]
        %v841 = vld [vmem:[%s2 + $0x39c] sm:$0xf]
        %v842 = vld [vmem:[%s2 + $0x3a0] sm:$0xf]
        %v843 = vld [vmem:[%s2 + $0x3a4] sm:$0xf]
        %v844 = vld [vmem:[%s2 + $0x3a8] sm:$0xf]
        %v845 = vld [vmem:[%s2 + $0x3ac] sm:$0xf]
        %v846 = vld [vmem:[%s2 + $0x3b0] sm:$0xf]
        %v847 = vld [vmem:[%s2 + $0x3b4] sm:$0xf]
        %v848 = vld [vmem:[%s2 + $0x3b8] sm:$0xf]
        %v849 = vld [vmem:[%s2 + $0x3bc] sm:$0xf]
        %v850 = vld [vmem:[%s2 + $0x3c0] sm:$0xf]
        %v851 = vld [vmem:[%s2 + $0x3c4] sm:$0xf]
        %v852 = vld [vmem:[%s2 + $0x3c8] sm:$0xf]
        %v853 = vld [vmem:[%s2 + $0x3cc] sm:$0xf]
        %v854 = vld [vmem:[%s2 + $0x3d0] sm:$0xf]
        %v855 = vld [vmem:[%s2 + $0x3d4] sm:$0xf]
        %v856 = vld [vmem:[%s2 + $0x3d8] sm:$0xf]
        %v857 = vld [vmem:[%s2 + $0x3dc] sm:$0xf]
        %v858 = vld [vmem:[%s2 + $0x3e0] sm:$0xf]
        %v859 = vld [vmem:[%s2 + $0x3e4] sm:$0xf]
        %v860 = vld [vmem:[%s2 + $0x3e8] sm:$0xf]
        %v861 = vld [vmem:[%s2 + $0x3ec] sm:$0xf]
        %v862 = vld [vmem:[%s2 + $0x3f0] sm:$0xf]
        %v863 = vld [vmem:[%s2 + $0x3f4] sm:$0xf]
        %v864 = vld [vmem:[%s2 + $0x3f8] sm:$0xf]
        %v865 = vld [vmem:[%s2 + $0x3fc] sm:$0xf]
        %v866 = vld [vmem:[%s2 + $0x400] sm:$0xf]
        %v867 = vld [vmem:[%s2 + $0x404] sm:$0xf]
        %v868 = vld [vmem:[%s2 + $0x408] sm:$0xf]
        %v869 = vld [vmem:[%s2 + $0x40c] sm:$0xf]
        %v870 = vld [vmem:[%s2 + $0x410] sm:$0xf]
        %v871 = vld [vmem:[%s2 + $0x414] sm:$0xf]
        %v872 = vld [vmem:[%s2 + $0x418] sm:$0xf]
        %v873 = vld [vmem:[%s2 + $0x41c] sm:$0xf]
        %v874 = vld [vmem:[%s2 + $0x420] sm:$0xf]
        %v875 = vld [vmem:[%s2 + $0x424] sm:$0xf]
        %v876 = vld [vmem:[%s2 + $0x428] sm:$0xf]
        %v877 = vld [vmem:[%s2 + $0x42c] sm:$0xf]
        %v878 = vld [vmem:[%s2 + $0x430] sm:$0xf]
        %v879 = vld [vmem:[%s2 + $0x434] sm:$0xf]
        %v880 = vld [vmem:[%s2 + $0x438] sm:$0xf]
        %v881 = vld [vmem:[%s2 + $0x43c] sm:$0xf]
        %v882 = vld [vmem:[%s2 + $0x440] sm:$0xf]
        %v883 = vld [vmem:[%s2 + $0x444] sm:$0xf]
        %v884 = vld [vmem:[%s2 + $0x448] sm:$0xf]
        %v885 = vld [vmem:[%s2 + $0x44c] sm:$0xf]
        %v886 = vld [vmem:[%s2 + $0x450] sm:$0xf]
        %v887 = vld [vmem:[%s2 + $0x454] sm:$0xf]
        %v888 = vld [vmem:[%s2 + $0x458] sm:$0xf]
        %v889 = vld [vmem:[%s2 + $0x45c] sm:$0xf]
        %v890 = vld [vmem:[%s2 + $0x460] sm:$0xf]
        %v891 = vld [vmem:[%s2 + $0x464] sm:$0xf]
        %v892 = vld [vmem:[%s2 + $0x468] sm:$0xf]
        %v893 = vld [vmem:[%s2 + $0x46c] sm:$0xf]
        %v894 = vld [vmem:[%s2 + $0x470] sm:$0xf]
        %v895 = vld [vmem:[%s2 + $0x474] sm:$0xf]
        %v896 = vld [vmem:[%s2 + $0x478] sm:$0xf]
        %v897 = vld [vmem:[%s2 + $0x47c] sm:$0xf]
        %v898 = vld [vmem:[%s2 + $0x480] sm:$0xf]
        %v899 = vld [vmem:[%s2 + $0x484] sm:$0xf]
        %v900 = vld [vmem:[%s2 + $0x488] sm:$0xf]
        %v901 = vld [vmem:[%s2 + $0x48c] sm:$0xf]
        %v902 = vld [vmem:[%s2 + $0x490] sm:$0xf]
        %v903 = vld [vmem:[%s2 + $0x494] sm:$0xf]
        %v904 = vld [vmem:[%s2 + $0x498] sm:$0xf]
        %v905 = vld [vmem:[%s2 + $0x49c] sm:$0xf]
        %v906 = vld [vmem:[%s2 + $0x4a0] sm:$0xf]
        %v907 = vld [vmem:[%s2 + $0x4a4] sm:$0xf]
        %v908 = vld [vmem:[%s2 + $0x4a8] sm:$0xf]
        %v909 = vld [vmem:[%s2 + $0x4ac] sm:$0xf]
        %v910 = vld [vmem:[%s2 + $0x4b0] sm:$0xf]
        %v911 = vld [vmem:[%s2 + $0x4b4] sm:$0xf]
        %v912 = vld [vmem:[%s2 + $0x4b8] sm:$0xf]
        %v913 = vld [vmem:[%s2 + $0x4bc] sm:$0xf]
        %v914 = vld [vmem:[%s2 + $0x4c0] sm:$0xf]
        %v915 = vld [vmem:[%s2 + $0x4c4] sm:$0xf]
        %v916 = vld [vmem:[%s2 + $0x4c8] sm:$0xf]
        %v917 = vld [vmem:[%s2 + $0x4cc] sm:$0xf]
        %v918 = vld [vmem:[%s2 + $0x4d0] sm:$0xf]
        %v919 = vld [vmem:[%s2 + $0x4d4] sm:$0xf]
        %v920 = vld [vmem:[%s2 + $0x4d8] sm:$0xf]
        %v921 = vld [vmem:[%s2 + $0x4dc] sm:$0xf]
        %v922 = vld [vmem:[%s2 + $0x4e0] sm:$0xf]
        %v923 = vld [vmem:[%s2 + $0x4e4] sm:$0xf]
        %v924 = vld [vmem:[%s2 + $0x4e8] sm:$0xf]
        %v925 = vld [vmem:[%s2 + $0x4ec] sm:$0xf]
        %v926 = vld [vmem:[%s2 + $0x4f0] sm:$0xf]
        %v927 = vld [vmem:[%s2 + $0x4f4] sm:$0xf]
        %v928 = vld [vmem:[%s2 + $0x4f8] sm:$0xf]
        %v929 = vld [vmem:[%s2 + $0x4fc] sm:$0xf]
        %v930 = vld [vmem:[%s2 + $0x500] sm:$0xf]
        %v931 = vld [vmem:[%s2 + $0x504] sm:$0xf]
        %v932 = vld [vmem:[%s2 + $0x508] sm:$0xf]
        %v933 = vld [vmem:[%s2 + $0x50c] sm:$0xf]
        %v934 = vld [vmem:[%s2 + $0x510] sm:$0xf]
        %v935 = vld [vmem:[%s2 + $0x514] sm:$0xf]
        %v936 = vld [vmem:[%s2 + $0x518] sm:$0xf]
        %v937 = vld [vmem:[%s2 + $0x51c] sm:$0xf]
        %v938 = vld [vmem:[%s2 + $0x520] sm:$0xf]
        %v939 = vld [vmem:[%s2 + $0x524] sm:$0xf]
        %v940 = vld [vmem:[%s2 + $0x528] sm:$0xf]
        %v941 = vld [vmem:[%s2 + $0x52c] sm:$0xf]
        %v942 = vld [vmem:[%s2 + $0x530] sm:$0xf]
        %v943 = vld [vmem:[%s2 + $0x534] sm:$0xf]
        %v944 = vld [vmem:[%s2 + $0x538] sm:$0xf]
        %v945 = vld [vmem:[%s2 + $0x53c] sm:$0xf]
        %v946 = vld [vmem:[%s2 + $0x540] sm:$0xf]
        %v947 = vld [vmem:[%s2 + $0x544] sm:$0xf]
        %v948 = vld [vmem:[%s2 + $0x548] sm:$0xf]
        %v949 = vld [vmem:[%s2 + $0x54c] sm:$0xf]
        %v950 = vld [vmem:[%s2 + $0x550] sm:$0xf]
        %v951 = vld [vmem:[%s2 + $0x554] sm:$0xf]
        %v952 = vld [vmem:[%s2 + $0x558] sm:$0xf]
        %v953 = vld [vmem:[%s2 + $0x55c] sm:$0xf]
        %v954 = vld [vmem:[%s2 + $0x560] sm:$0xf]
        %v955 = vld [vmem:[%s2 + $0x564] sm:$0xf]
        %v956 = vld [vmem:[%s2 + $0x568] sm:$0xf]
        %v957 = vld [vmem:[%s2 + $0x56c] sm:$0xf]
        %v958 = vld [vmem:[%s2 + $0x570] sm:$0xf]
        %v959 = vld [vmem:[%s2 + $0x574] sm:$0xf]
        %v960 = vld [vmem:[%s2 + $0x578] sm:$0xf]
        %v961 = vld [vmem:[%s2 + $0x57c] sm:$0xf]
        %v962 = vld [vmem:[%s2 + $0x580] sm:$0xf]
        %v963 = vld [vmem:[%s2 + $0x584] sm:$0xf]
        %v964 = vld [vmem:[%s2 + $0x588] sm:$0xf]
        %v965 = vld [vmem:[%s2 + $0x58c] sm:$0xf]
        %v966 = vld [vmem:[%s2 + $0x590] sm:$0xf]
        %v967 = vld [vmem:[%s2 + $0x594] sm:$0xf]
        %v968 = vld [vmem:[%s2 + $0x598] sm:$0xf]
        %v969 = vld [vmem:[%s2 + $0x59c] sm:$0xf]
        %v970 = vld [vmem:[%s2 + $0x5a0] sm:$0xf]
        %v971 = vld [vmem:[%s2 + $0x5a4] sm:$0xf]
        %v972 = vld [vmem:[%s2 + $0x5a8] sm:$0xf]
        %v973 = vld [vmem:[%s2 + $0x5ac] sm:$0xf]
        %v974 = vld [vmem:[%s2 + $0x5b0] sm:$0xf]
        %v975 = vld [vmem:[%s2 + $0x5b4] sm:$0xf]
        %v976 = vld [vmem:[%s2 + $0x5b8] sm:$0xf]
        %v977 = vld [vmem:[%s2 + $0x5bc] sm:$0xf]
        %v978 = vld [vmem:[%s2 + $0x5c0] sm:$0xf]
        %v979 = vld [vmem:[%s2 + $0x5c4] sm:$0xf]
        %v980 = vld [vmem:[%s2 + $0x5c8] sm:$0xf]
        %v981 = vld [vmem:[%s2 + $0x5cc] sm:$0xf]
        %v982 = vld [vmem:[%s2 + $0x5d0] sm:$0xf]
        %v983 = vld [vmem:[%s2 + $0x5d4] sm:$0xf]
        %v984 = vld [vmem:[%s2 + $0x5d8] sm:$0xf]
        %v985 = vld [vmem:[%s2 + $0x5dc] sm:$0xf]
        %v986 = vld [vmem:[%s2 + $0x5e0] sm:$0xf]
        %v987 = vld [vmem:[%s2 + $0x5e4] sm:$0xf]
        %v988 = vld [vmem:[%s2 + $0x5e8] sm:$0xf]
        %v989 = vld [vmem:[%s2 + $0x5ec] sm:$0xf]
        %v990 = vld [vmem:[%s2 + $0x5f0] sm:$0xf]
        %v991 = vld [vmem:[%s2 + $0x5f4] sm:$0xf]
        %v992 = vld [vmem:[%s2 + $0x5f8] sm:$0xf]
        %v993 = vld [vmem:[%s2 + $0x5fc] sm:$0xf]
        %v994 = vld [vmem:[%s2 + $0x600] sm:$0xf]
        %v995 = vld [vmem:[%s2 + $0x604] sm:$0xf]
        %v996 = vld [vmem:[%s2 + $0x608] sm:$0xf]
        %v997 = vld [vmem:[%s2 + $0x60c] sm:$0xf]
        %v998 = vld [vmem:[%s2 + $0x610] sm:$0xf]
        %v999 = vld [vmem:[%s2 + $0x614] sm:$0xf]
        %v1000 = vld [vmem:[%s2 + $0x618] sm:$0xf]
        %v1001 = vld [vmem:[%s2 + $0x61c] sm:$0xf]
        %v1002 = vld [vmem:[%s2 + $0x620] sm:$0xf]
        %v1003 = vld [vmem:[%s2 + $0x624] sm:$0xf]
        %v1004 = vld [vmem:[%s2 + $0x628] sm:$0xf]
        %v1005 = vld [vmem:[%s2 + $0x62c] sm:$0xf]
        %v1006 = vld [vmem:[%s2 + $0x630] sm:$0xf]
        %v1007 = vld [vmem:[%s2 + $0x634] sm:$0xf]
        %v1008 = vld [vmem:[%s2 + $0x638] sm:$0xf]
        %v1009 = vld [vmem:[%s2 + $0x63c] sm:$0xf]
        %v1010 = vld [vmem:[%s2 + $0x640] sm:$0xf]
        %v1011 = vld [vmem:[%s2 + $0x644] sm:$0xf]
        %v1012 = vld [vmem:[%s2 + $0x648] sm:$0xf]
        %v1013 = vld [vmem:[%s2 + $0x64c] sm:$0xf]
        %v1014 = vld [vmem:[%s2 + $0x650] sm:$0xf]
        %v1015 = vld [vmem:[%s2 + $0x654] sm:$0xf]
        %v1016 = vld [vmem:[%s2 + $0x658] sm:$0xf]
        %v1017 = vld [vmem:[%s2 + $0x65c] sm:$0xf]
        %v1018 = vld [vmem:[%s2 + $0x660] sm:$0xf]
        %v1019 = vld [vmem:[%s2 + $0x664] sm:$0xf]
        %v1020 = vld [vmem:[%s2 + $0x668] sm:$0xf]
        %v1021 = vld [vmem:[%s2 + $0x66c] sm:$0xf]
        %v1022 = vld [vmem:[%s2 + $0x670] sm:$0xf]
        %v1023 = vld [vmem:[%s2 + $0x674] sm:$0xf]
        %v1024 = vld [vmem:[%s2 + $0x678] sm:$0xf]
        %v1025 = vld [vmem:[%s2 + $0x67c] sm:$0xf]
        %v1026 = vld [vmem:[%s2 + $0x680] sm:$0xf]
        %v1027 = vld [vmem:[%s2 + $0x684] sm:$0xf]
        %v1028 = vld [vmem:[%s2 + $0x688] sm:$0xf]
        %v1029 = vld [vmem:[%s2 + $0x68c] sm:$0xf]
        %v1030 = vld [vmem:[%s2 + $0x690] sm:$0xf]
        %v1031 = vld [vmem:[%s2 + $0x694] sm:$0xf]
        %v1032 = vld [vmem:[%s2 + $0x698] sm:$0xf]
        %v1033 = vld [vmem:[%s2 + $0x69c] sm:$0xf]
        %v1034 = vld [vmem:[%s2 + $0x6a0] sm:$0xf]
        %v1035 = vld [vmem:[%s2 + $0x6a4] sm:$0xf]
        %v1036 = vld [vmem:[%s2 + $0x6a8] sm:$0xf]
        %v1037 = vld [vmem:[%s2 + $0x6ac] sm:$0xf]
        %v1038 = vld [vmem:[%s2 + $0x6b0] sm:$0xf]
        %v1039 = vld [vmem:[%s2 + $0x6b4] sm:$0xf]
        %v1040 = vld [vmem:[%s2 + $0x6b8] sm:$0xf]
        %v1041 = vld [vmem:[%s2 + $0x6bc] sm:$0xf]
        %v1042 = vld [vmem:[%s2 + $0x6c0] sm:$0xf]
        %v1043 = vld [vmem:[%s2 + $0x6c4] sm:$0xf]
        %v1044 = vld [vmem:[%s2 + $0x6c8] sm:$0xf]
        %v1045 = vld [vmem:[%s2 + $0x6cc] sm:$0xf]
        %v1046 = vld [vmem:[%s2 + $0x6d0] sm:$0xf]
        %v1047 = vld [vmem:[%s2 + $0x6d4] sm:$0xf]
        %v1048 = vld [vmem:[%s2 + $0x6d8] sm:$0xf]
        %v1049 = vld [vmem:[%s2 + $0x6dc] sm:$0xf]
        %v1050 = vld [vmem:[%s2 + $0x6e0] sm:$0xf]
        %v1051 = vld [vmem:[%s2 + $0x6e4] sm:$0xf]
        %v1052 = vld [vmem:[%s2 + $0x6e8] sm:$0xf]
        %v1053 = vld [vmem:[%s2 + $0x6ec] sm:$0xf]
        %v1054 = vld [vmem:[%s2 + $0x6f0] sm:$0xf]
        %v1055 = vld [vmem:[%s2 + $0x6f4] sm:$0xf]
        %v1056 = vld [vmem:[%s2 + $0x6f8] sm:$0xf]
        %v1057 = vld [vmem:[%s2 + $0x6fc] sm:$0xf]
        %v1058 = vld [vmem:[%s2 + $0x700] sm:$0xf]
        %v1059 = vld [vmem:[%s2 + $0x704] sm:$0xf]
        %v1060 = vld [vmem:[%s2 + $0x708] sm:$0xf]
        %v1061 = vld [vmem:[%s2 + $0x70c] sm:$0xf]
        %v1062 = vld [vmem:[%s2 + $0x710] sm:$0xf]
        %v1063 = vld [vmem:[%s2 + $0x714] sm:$0xf]
        %v1064 = vld [vmem:[%s2 + $0x718] sm:$0xf]
        %v1065 = vld [vmem:[%s2 + $0x71c] sm:$0xf]
        %v1066 = vld [vmem:[%s2 + $0x720] sm:$0xf]
        %v1067 = vld [vmem:[%s2 + $0x724] sm:$0xf]
        %v1068 = vld [vmem:[%s2 + $0x728] sm:$0xf]
        %v1069 = vld [vmem:[%s2 + $0x72c] sm:$0xf]
        %v1070 = vld [vmem:[%s2 + $0x730] sm:$0xf]
        %v1071 = vld [vmem:[%s2 + $0x734] sm:$0xf]
        %v1072 = vld [vmem:[%s2 + $0x738] sm:$0xf]
        %v1073 = vld [vmem:[%s2 + $0x73c] sm:$0xf]
        %v1074 = vld [vmem:[%s2 + $0x740] sm:$0xf]
        %v1075 = vld [vmem:[%s2 + $0x744] sm:$0xf]
        %v1076 = vld [vmem:[%s2 + $0x748] sm:$0xf]
        %v1077 = vld [vmem:[%s2 + $0x74c] sm:$0xf]
        %v1078 = vld [vmem:[%s2 + $0x750] sm:$0xf]
        %v1079 = vld [vmem:[%s2 + $0x754] sm:$0xf]
        %v1080 = vld [vmem:[%s2 + $0x758] sm:$0xf]
        %v1081 = vld [vmem:[%s2 + $0x75c] sm:$0xf]
        %v1082 = vld [vmem:[%s2 + $0x760] sm:$0xf]
        %v1083 = vld [vmem:[%s2 + $0x764] sm:$0xf]
        %v1084 = vld [vmem:[%s2 + $0x768] sm:$0xf]
        %v1085 = vld [vmem:[%s2 + $0x76c] sm:$0xf]
        %v1086 = vld [vmem:[%s2 + $0x770] sm:$0xf]
        %v1087 = vld [vmem:[%s2 + $0x774] sm:$0xf]
        %v1088 = vld [vmem:[%s2 + $0x778] sm:$0xf]
        %v1089 = vld [vmem:[%s2 + $0x77c] sm:$0xf]
        %v1090 = vld [vmem:[%s2 + $0x780] sm:$0xf]
        %v1091 = vld [vmem:[%s2 + $0x784] sm:$0xf]
        %v1092 = vld [vmem:[%s2 + $0x788] sm:$0xf]
        %v1093 = vld [vmem:[%s2 + $0x78c] sm:$0xf]
        %v1094 = vld [vmem:[%s2 + $0x790] sm:$0xf]
        %v1095 = vld [vmem:[%s2 + $0x794] sm:$0xf]
        %v1096 = vld [vmem:[%s2 + $0x798] sm:$0xf]
        %v1097 = vld [vmem:[%s2 + $0x79c] sm:$0xf]
        %v1098 = vld [vmem:[%s2 + $0x7a0] sm:$0xf]
        %v1099 = vld [vmem:[%s2 + $0x7a4] sm:$0xf]
        %v1100 = vld [vmem:[%s2 + $0x7a8] sm:$0xf]
        %v1101 = vld [vmem:[%s2 + $0x7ac] sm:$0xf]
        %v1102 = vld [vmem:[%s2 + $0x7b0] sm:$0xf]
        %v1103 = vld [vmem:[%s2 + $0x7b4] sm:$0xf]
        %v1104 = vld [vmem:[%s2 + $0x7b8] sm:$0xf]
        %v1105 = vld [vmem:[%s2 + $0x7bc] sm:$0xf]
        %v1106 = vld [vmem:[%s2 + $0x7c0] sm:$0xf]
        %v1107 = vld [vmem:[%s2 + $0x7c4] sm:$0xf]
        %v1108 = vld [vmem:[%s2 + $0x7c8] sm:$0xf]
        %v1109 = vld [vmem:[%s2 + $0x7cc] sm:$0xf]
        %v1110 = vld [vmem:[%s2 + $0x7d0] sm:$0xf]
        %v1111 = vld [vmem:[%s2 + $0x7d4] sm:$0xf]
        %v1112 = vld [vmem:[%s2 + $0x7d8] sm:$0xf]
        %v1113 = vld [vmem:[%s2 + $0x7dc] sm:$0xf]
        %v1114 = vld [vmem:[%s2 + $0x7e0] sm:$0xf]
        %v1115 = vld [vmem:[%s2 + $0x7e4] sm:$0xf]
        %v1116 = vld [vmem:[%s2 + $0x7e8] sm:$0xf]
        %v1117 = vld [vmem:[%s2 + $0x7ec] sm:$0xf]
        %v1118 = vld [vmem:[%s2 + $0x7f0] sm:$0xf]
        %v1119 = vld [vmem:[%s2 + $0x7f4] sm:$0xf]
        %v1120 = vld [vmem:[%s2 + $0x7f8] sm:$0xf]
        %v1121 = vld [vmem:[%s2 + $0x7fc] sm:$0xf]
        %v1122 = vld [vmem:[%s2 + $0x800] sm:$0xf]
        %v1123 = vld [vmem:[%s2 + $0x804] sm:$0xf]
        %v1124 = vld [vmem:[%s2 + $0x808] sm:$0xf]
        %v1125 = vld [vmem:[%s2 + $0x80c] sm:$0xf]
        %v1126 = vld [vmem:[%s2 + $0x810] sm:$0xf]
        %v1127 = vld [vmem:[%s2 + $0x814] sm:$0xf]
        %v1128 = vld [vmem:[%s2 + $0x818] sm:$0xf]
        %v1129 = vld [vmem:[%s2 + $0x81c] sm:$0xf]
        %v1130 = vld [vmem:[%s2 + $0x820] sm:$0xf]
        %v1131 = vld [vmem:[%s2 + $0x824] sm:$0xf]
        %v1132 = vld [vmem:[%s2 + $0x828] sm:$0xf]
        %v1133 = vld [vmem:[%s2 + $0x82c] sm:$0xf]
        %v1134 = vld [vmem:[%s2 + $0x830] sm:$0xf]
        %v1135 = vld [vmem:[%s2 + $0x834] sm:$0xf]
        %v1136 = vld [vmem:[%s2 + $0x838] sm:$0xf]
        %v1137 = vld [vmem:[%s2 + $0x83c] sm:$0xf]
        %v1138 = vld [vmem:[%s2 + $0x840] sm:$0xf]
        %v1139 = vld [vmem:[%s2 + $0x844] sm:$0xf]
        %v1140 = vld [vmem:[%s2 + $0x848] sm:$0xf]
        %v1141 = vld [vmem:[%s2 + $0x84c] sm:$0xf]
        %v1142 = vld [vmem:[%s2 + $0x850] sm:$0xf]
        %v1143 = vld [vmem:[%s2 + $0x854] sm:$0xf]
        %v1144 = vld [vmem:[%s2 + $0x858] sm:$0xf]
        %v1145 = vld [vmem:[%s2 + $0x85c] sm:$0xf]
        %v1146 = vld [vmem:[%s2 + $0x860] sm:$0xf]
        %v1147 = vld [vmem:[%s2 + $0x864] sm:$0xf]
        %v1148 = vld [vmem:[%s2 + $0x868] sm:$0xf]
        %v1149 = vld [vmem:[%s2 + $0x86c] sm:$0xf]
        %v1150 = vld [vmem:[%s2 + $0x870] sm:$0xf]
        %v1151 = vld [vmem:[%s2 + $0x874] sm:$0xf]
        %v1152 = vld [vmem:[%s2 + $0x878] sm:$0xf]
        %v1153 = vld [vmem:[%s2 + $0x87c] sm:$0xf]
        %v1154 = vld [vmem:[%s2 + $0x880] sm:$0xf]
        %v1155 = vld [vmem:[%s2 + $0x884] sm:$0xf]
        %v1156 = vld [vmem:[%s2 + $0x888] sm:$0xf]
        %v1157 = vld [vmem:[%s2 + $0x88c] sm:$0xf]
        %v1158 = vld [vmem:[%s2 + $0x890] sm:$0xf]
        %v1159 = vld [vmem:[%s2 + $0x894] sm:$0xf]
        %v1160 = vld [vmem:[%s2 + $0x898] sm:$0xf]
        %v1161 = vld [vmem:[%s2 + $0x89c] sm:$0xf]
        %v1162 = vld [vmem:[%s2 + $0x8a0] sm:$0xf]
        %v1163 = vld [vmem:[%s2 + $0x8a4] sm:$0xf]
        %v1164 = vld [vmem:[%s2 + $0x8a8] sm:$0xf]
        %v1165 = vld [vmem:[%s2 + $0x8ac] sm:$0xf]
        %v1166 = vld [vmem:[%s2 + $0x8b0] sm:$0xf]
        %v1167 = vld [vmem:[%s2 + $0x8b4] sm:$0xf]
        %v1168 = vld [vmem:[%s2 + $0x8b8] sm:$0xf]
        %v1169 = vld [vmem:[%s2 + $0x8bc] sm:$0xf]
        %v1170 = vld [vmem:[%s2 + $0x8c0] sm:$0xf]
        %v1171 = vld [vmem:[%s2 + $0x8c4] sm:$0xf]
        %v1172 = vld [vmem:[%s2 + $0x8c8] sm:$0xf]
        %v1173 = vld [vmem:[%s2 + $0x8cc] sm:$0xf]
        %v1174 = vld [vmem:[%s2 + $0x8d0] sm:$0xf]
        %v1175 = vld [vmem:[%s2 + $0x8d4] sm:$0xf]
        %v1176 = vld [vmem:[%s2 + $0x8d8] sm:$0xf]
        %v1177 = vld [vmem:[%s2 + $0x8dc] sm:$0xf]
        %v1178 = vld [vmem:[%s2 + $0x8e0] sm:$0xf]
        %v1179 = vld [vmem:[%s2 + $0x8e4] sm:$0xf]
        %v1180 = vld [vmem:[%s2 + $0x8e8] sm:$0xf]
        %v1181 = vld [vmem:[%s2 + $0x8ec] sm:$0xf]
        %v1182 = vld [vmem:[%s2 + $0x8f0] sm:$0xf]
        %v1183 = vld [vmem:[%s2 + $0x8f4] sm:$0xf]
        %v1184 = vld [vmem:[%s2 + $0x8f8] sm:$0xf]
        %v1185 = vld [vmem:[%s2 + $0x8fc] sm:$0xf]
        %v1186 = vld [vmem:[%s2 + $0x900] sm:$0xf]
        %v1187 = vld [vmem:[%s2 + $0x904] sm:$0xf]
        %v1188 = vld [vmem:[%s2 + $0x908] sm:$0xf]
        %v1189 = vld [vmem:[%s2 + $0x90c] sm:$0xf]
        %v1190 = vld [vmem:[%s2 + $0x910] sm:$0xf]
        %v1191 = vld [vmem:[%s2 + $0x914] sm:$0xf]
        %v1192 = vld [vmem:[%s2 + $0x918] sm:$0xf]
        %v1193 = vld [vmem:[%s2 + $0x91c] sm:$0xf]
        %v1194 = vld [vmem:[%s2 + $0x920] sm:$0xf]
        %v1195 = vld [vmem:[%s2 + $0x924] sm:$0xf]
        %v1196 = vld [vmem:[%s2 + $0x928] sm:$0xf]
        %v1197 = vld [vmem:[%s2 + $0x92c] sm:$0xf]
        %v1198 = vld [vmem:[%s2 + $0x930] sm:$0xf]
        %v1199 = vld [vmem:[%s2 + $0x934] sm:$0xf]
        %v1200 = vld [vmem:[%s2 + $0x938] sm:$0xf]
        %v1201 = vld [vmem:[%s2 + $0x93c] sm:$0xf]
        %v1202 = vld [vmem:[%s2 + $0x940] sm:$0xf]
        %v1203 = vld [vmem:[%s2 + $0x944] sm:$0xf]
        %v1204 = vld [vmem:[%s2 + $0x948] sm:$0xf]
        %v1205 = vld [vmem:[%s2 + $0x94c] sm:$0xf]
        %v1206 = vld [vmem:[%s2 + $0x950] sm:$0xf]
        %v1207 = vld [vmem:[%s2 + $0x954] sm:$0xf]
        %v1208 = vld [vmem:[%s2 + $0x958] sm:$0xf]
        %v1209 = vld [vmem:[%s2 + $0x95c] sm:$0xf]
        %v1210 = vld [vmem:[%s2 + $0x960] sm:$0xf]
        %v1211 = vld [vmem:[%s2 + $0x964] sm:$0xf]
        %v1212 = vld [vmem:[%s2 + $0x968] sm:$0xf]
        %v1213 = vld [vmem:[%s2 + $0x96c] sm:$0xf]
        %v1214 = vld [vmem:[%s2 + $0x970] sm:$0xf]
        %v1215 = vld [vmem:[%s2 + $0x974] sm:$0xf]
        %v1216 = vld [vmem:[%s2 + $0x978] sm:$0xf]
        %v1217 = vld [vmem:[%s2 + $0x97c] sm:$0xf]
        %v1218 = vld [vmem:[%s2 + $0x980] sm:$0xf]
        %v1219 = vld [vmem:[%s2 + $0x984] sm:$0xf]
        %v1220 = vld [vmem:[%s2 + $0x988] sm:$0xf]
        %v1221 = vld [vmem:[%s2 + $0x98c] sm:$0xf]
        %v1222 = vld [vmem:[%s2 + $0x990] sm:$0xf]
        %v1223 = vld [vmem:[%s2 + $0x994] sm:$0xf]
        %v1224 = vld [vmem:[%s2 + $0x998] sm:$0xf]
        %v1225 = vld [vmem:[%s2 + $0x99c] sm:$0xf]
        %v1226 = vld [vmem:[%s2 + $0x9a0] sm:$0xf]
        %v1227 = vld [vmem:[%s2 + $0x9a4] sm:$0xf]
        %v1228 = vld [vmem:[%s2 + $0x9a8] sm:$0xf]
        %v1229 = vld [vmem:[%s2 + $0x9ac] sm:$0xf]
        %v1230 = vld [vmem:[%s2 + $0x9b0] sm:$0xf]
        %v1231 = vld [vmem:[%s2 + $0x9b4] sm:$0xf]
        %v1232 = vld [vmem:[%s2 + $0x9b8] sm:$0xf]
        %v1233 = vld [vmem:[%s2 + $0x9bc] sm:$0xf]
        %v1234 = vld [vmem:[%s2 + $0x9c0] sm:$0xf]
        %v1235 = vld [vmem:[%s2 + $0x9c4] sm:$0xf]
        %v1236 = vld [vmem:[%s2 + $0x9c8] sm:$0xf]
        %v1237 = vld [vmem:[%s2 + $0x9cc] sm:$0xf]
        %v1238 = vld [vmem:[%s2 + $0x9d0] sm:$0xf]
        %v1239 = vld [vmem:[%s2 + $0x9d4] sm:$0xf]
        %v1240 = vld [vmem:[%s2 + $0x9d8] sm:$0xf]
        %v1241 = vld [vmem:[%s2 + $0x9dc] sm:$0xf]
        %v1242 = vld [vmem:[%s2 + $0x9e0] sm:$0xf]
        %v1243 = vld [vmem:[%s2 + $0x9e4] sm:$0xf]
        %v1244 = vld [vmem:[%s2 + $0x9e8] sm:$0xf]
        %v1245 = vld [vmem:[%s2 + $0x9ec] sm:$0xf]
        %v1246 = vld [vmem:[%s2 + $0x9f0] sm:$0xf]
        %v1247 = vld [vmem:[%s2 + $0x9f4] sm:$0xf]
        %v1248 = vld [vmem:[%s2 + $0x9f8] sm:$0xf]
        %v1249 = vld [vmem:[%s2 + $0x9fc] sm:$0xf]
        %v1250 = vld [vmem:[%s2 + $0xa00] sm:$0xf]
        %v1251 = vld [vmem:[%s2 + $0xa04] sm:$0xf]
        %v1252 = vld [vmem:[%s2 + $0xa08] sm:$0xf]
        %v1253 = vld [vmem:[%s2 + $0xa0c] sm:$0xf]
        %v1254 = vld [vmem:[%s2 + $0xa10] sm:$0xf]
        %v1255 = vld [vmem:[%s2 + $0xa14] sm:$0xf]
        %v1256 = vld [vmem:[%s2 + $0xa18] sm:$0xf]
        %v1257 = vld [vmem:[%s2 + $0xa1c] sm:$0xf]
        %v1258 = vld [vmem:[%s2 + $0xa20] sm:$0xf]
        %v1259 = vld [vmem:[%s2 + $0xa24] sm:$0xf]
        %v1260 = vld [vmem:[%s2 + $0xa28] sm:$0xf]
        %v1261 = vld [vmem:[%s2 + $0xa2c] sm:$0xf]
        %v1262 = vld [vmem:[%s2 + $0xa30] sm:$0xf]
        %v1263 = vld [vmem:[%s2 + $0xa34] sm:$0xf]
        %v1264 = vld [vmem:[%s2 + $0xa38] sm:$0xf]
        %v1265 = vld [vmem:[%s2 + $0xa3c] sm:$0xf]
        %v1266 = vld [vmem:[%s2 + $0xa40] sm:$0xf]
        %v1267 = vld [vmem:[%s2 + $0xa44] sm:$0xf]
        %v1268 = vld [vmem:[%s2 + $0xa48] sm:$0xf]
        %v1269 = vld [vmem:[%s2 + $0xa4c] sm:$0xf]
        %v1270 = vld [vmem:[%s2 + $0xa50] sm:$0xf]
        %v1271 = vld [vmem:[%s2 + $0xa54] sm:$0xf]
        %v1272 = vld [vmem:[%s2 + $0xa58] sm:$0xf]
        %v1273 = vld [vmem:[%s2 + $0xa5c] sm:$0xf]
        %v1274 = vld [vmem:[%s2 + $0xa60] sm:$0xf]
        %v1275 = vld [vmem:[%s2 + $0xa64] sm:$0xf]
        %v1276 = vld [vmem:[%s2 + $0xa68] sm:$0xf]
        %v1277 = vld [vmem:[%s2 + $0xa6c] sm:$0xf]
        %v1278 = vld [vmem:[%s2 + $0xa70] sm:$0xf]
        %v1279 = vld [vmem:[%s2 + $0xa74] sm:$0xf]
        %v1280 = vld [vmem:[%s2 + $0xa78] sm:$0xf]
        %v1281 = vld [vmem:[%s2 + $0xa7c] sm:$0xf]
        %v1282 = vld [vmem:[%s2 + $0xa80] sm:$0xf]
        %v1283 = vld [vmem:[%s2 + $0xa84] sm:$0xf]
        %v1284 = vld [vmem:[%s2 + $0xa88] sm:$0xf]
        %v1285 = vld [vmem:[%s2 + $0xa8c] sm:$0xf]
        %v1286 = vld [vmem:[%s2 + $0xa90] sm:$0xf]
        %v1287 = vld [vmem:[%s2 + $0xa94] sm:$0xf]
        %v1288 = vld [vmem:[%s2 + $0xa98] sm:$0xf]
        %v1289 = vld [vmem:[%s2 + $0xa9c] sm:$0xf]
        %v1290 = vld [vmem:[%s2 + $0xaa0] sm:$0xf]
        %v1291 = vld [vmem:[%s2 + $0xaa4] sm:$0xf]
        %v1292 = vld [vmem:[%s2 + $0xaa8] sm:$0xf]
        %v1293 = vld [vmem:[%s2 + $0xaac] sm:$0xf]
        %v1294 = vld [vmem:[%s2 + $0xab0] sm:$0xf]
        %v1295 = vld [vmem:[%s2 + $0xab4] sm:$0xf]
        %v1296 = vld [vmem:[%s2 + $0xab8] sm:$0xf]
        %v1297 = vld [vmem:[%s2 + $0xabc] sm:$0xf]
        %v1298 = vld [vmem:[%s2 + $0xac0] sm:$0xf]
        %v1299 = vld [vmem:[%s2 + $0xac4] sm:$0xf]
        %v1300 = vld [vmem:[%s2 + $0xac8] sm:$0xf]
        %v1301 = vld [vmem:[%s2 + $0xacc] sm:$0xf]
        %v1302 = vld [vmem:[%s2 + $0xad0] sm:$0xf]
        %v1303 = vld [vmem:[%s2 + $0xad4] sm:$0xf]
        %v1304 = vld [vmem:[%s2 + $0xad8] sm:$0xf]
        %v1305 = vld [vmem:[%s2 + $0xadc] sm:$0xf]
        %v1306 = vld [vmem:[%s2 + $0xae0] sm:$0xf]
        %v1307 = vld [vmem:[%s2 + $0xae4] sm:$0xf]
        %v1308 = vld [vmem:[%s2 + $0xae8] sm:$0xf]
        %v1309 = vld [vmem:[%s2 + $0xaec] sm:$0xf]
        %v1310 = vld [vmem:[%s2 + $0xaf0] sm:$0xf]
        %v1311 = vld [vmem:[%s2 + $0xaf4] sm:$0xf]
        %v1312 = vld [vmem:[%s2 + $0xaf8] sm:$0xf]
        %v1313 = vld [vmem:[%s2 + $0xafc] sm:$0x1]
        %v1314 = vld [vmem:[%s3] sm:$0x1]
        %v1316 = vperm.slane %v1314, 0
        %v2022 = vunpack.c.l.b16 %v610
        %v2023 = vunpack.c.l.b16 %v611
        %v2024 = vunpack.c.l.b16 %v612
        %v2025 = vunpack.c.l.b16 %v613
        %v2026 = vunpack.c.l.b16 %v614
        %v2027 = vunpack.c.l.b16 %v615
        %v2028 = vunpack.c.l.b16 %v616
        %v2029 = vunpack.c.l.b16 %v617
        %v2030 = vunpack.c.l.b16 %v618
        %v2031 = vunpack.c.l.b16 %v619
        %v2032 = vunpack.c.l.b16 %v620
        %v2033 = vunpack.c.l.b16 %v621
        %v2034 = vunpack.c.l.b16 %v622
        %v2035 = vunpack.c.l.b16 %v623
        %v2036 = vunpack.c.l.b16 %v624
        %v2037 = vunpack.c.l.b16 %v625
        %v2038 = vunpack.c.l.b16 %v626
        %v2039 = vunpack.c.l.b16 %v627
        %v2040 = vunpack.c.l.b16 %v628
        %v2041 = vunpack.c.l.b16 %v629
        %v2042 = vunpack.c.l.b16 %v630
        %v2043 = vunpack.c.l.b16 %v631
        %v2044 = vunpack.c.l.b16 %v632
        %v2045 = vunpack.c.l.b16 %v633
        %v2046 = vunpack.c.l.b16 %v634
        %v2047 = vunpack.c.l.b16 %v635
        %v2048 = vunpack.c.l.b16 %v636
        %v2049 = vunpack.c.l.b16 %v637
        %v2050 = vunpack.c.l.b16 %v638
        %v2051 = vunpack.c.l.b16 %v639
        %v2052 = vunpack.c.l.b16 %v640
        %v2053 = vunpack.c.l.b16 %v641
        %v2054 = vunpack.c.l.b16 %v642
        %v2055 = vunpack.c.l.b16 %v643
        %v2056 = vunpack.c.l.b16 %v644
        %v2057 = vunpack.c.l.b16 %v645
        %v2058 = vunpack.c.l.b16 %v646
        %v2059 = vunpack.c.l.b16 %v647
        %v2060 = vunpack.c.l.b16 %v648
        %v2061 = vunpack.c.l.b16 %v649
        %v2062 = vunpack.c.l.b16 %v650
        %v2063 = vunpack.c.l.b16 %v651
        %v2064 = vunpack.c.l.b16 %v652
        %v2065 = vunpack.c.l.b16 %v653
        %v2066 = vunpack.c.l.b16 %v654
        %v2067 = vunpack.c.l.b16 %v655
        %v2068 = vunpack.c.l.b16 %v656
        %v2069 = vunpack.c.l.b16 %v657
        %v2070 = vunpack.c.l.b16 %v658
        %v2071 = vunpack.c.l.b16 %v659
        %v2072 = vunpack.c.l.b16 %v660
        %v2073 = vunpack.c.l.b16 %v661
        %v2074 = vunpack.c.l.b16 %v662
        %v2075 = vunpack.c.l.b16 %v663
        %v2076 = vunpack.c.l.b16 %v664
        %v2077 = vunpack.c.l.b16 %v665
        %v2078 = vunpack.c.l.b16 %v666
        %v2079 = vunpack.c.l.b16 %v667
        %v2080 = vunpack.c.l.b16 %v668
        %v2081 = vunpack.c.l.b16 %v669
        %v2082 = vunpack.c.l.b16 %v670
        %v2083 = vunpack.c.l.b16 %v671
        %v2084 = vunpack.c.l.b16 %v672
        %v2085 = vunpack.c.l.b16 %v673
        %v2086 = vunpack.c.l.b16 %v674
        %v2087 = vunpack.c.l.b16 %v675
        %v2088 = vunpack.c.l.b16 %v676
        %v2089 = vunpack.c.l.b16 %v677
        %v2090 = vunpack.c.l.b16 %v678
        %v2091 = vunpack.c.l.b16 %v679
        %v2092 = vunpack.c.l.b16 %v680
        %v2093 = vunpack.c.l.b16 %v681
        %v2094 = vunpack.c.l.b16 %v682
        %v2095 = vunpack.c.l.b16 %v683
        %v2096 = vunpack.c.l.b16 %v684
        %v2097 = vunpack.c.l.b16 %v685
        %v2098 = vunpack.c.l.b16 %v686
        %v2099 = vunpack.c.l.b16 %v687
        %v2100 = vunpack.c.l.b16 %v688
        %v2101 = vunpack.c.l.b16 %v689
        %v2102 = vunpack.c.l.b16 %v690
        %v2103 = vunpack.c.l.b16 %v691
        %v2104 = vunpack.c.l.b16 %v692
        %v2105 = vunpack.c.l.b16 %v693
        %v2106 = vunpack.c.l.b16 %v694
        %v2107 = vunpack.c.l.b16 %v695
        %v2108 = vunpack.c.l.b16 %v696
        %v2109 = vunpack.c.l.b16 %v697
        %v2110 = vunpack.c.l.b16 %v698
        %v2111 = vunpack.c.l.b16 %v699
        %v2112 = vunpack.c.l.b16 %v700
        %v2113 = vunpack.c.l.b16 %v701
        %v2114 = vunpack.c.l.b16 %v702
        %v2115 = vunpack.c.l.b16 %v703
        %v2116 = vunpack.c.l.b16 %v704
        %v2117 = vunpack.c.l.b16 %v705
        %v2118 = vunpack.c.l.b16 %v706
        %v2119 = vunpack.c.l.b16 %v707
        %v2120 = vunpack.c.l.b16 %v708
        %v2121 = vunpack.c.l.b16 %v709
        %v2122 = vunpack.c.l.b16 %v710
        %v2123 = vunpack.c.l.b16 %v711
        %v2124 = vunpack.c.l.b16 %v712
        %v2125 = vunpack.c.l.b16 %v713
        %v2126 = vunpack.c.l.b16 %v714
        %v2127 = vunpack.c.l.b16 %v715
        %v2128 = vunpack.c.l.b16 %v716
        %v2129 = vunpack.c.l.b16 %v717
        %v2130 = vunpack.c.l.b16 %v718
        %v2131 = vunpack.c.l.b16 %v719
        %v2132 = vunpack.c.l.b16 %v720
        %v2133 = vunpack.c.l.b16 %v721
        %v2134 = vunpack.c.l.b16 %v722
        %v2135 = vunpack.c.l.b16 %v723
        %v2136 = vunpack.c.l.b16 %v724
        %v2137 = vunpack.c.l.b16 %v725
        %v2138 = vunpack.c.l.b16 %v726
        %v2139 = vunpack.c.l.b16 %v727
        %v2140 = vunpack.c.l.b16 %v728
        %v2141 = vunpack.c.l.b16 %v729
        %v2142 = vunpack.c.l.b16 %v730
        %v2143 = vunpack.c.l.b16 %v731
        %v2144 = vunpack.c.l.b16 %v732
        %v2145 = vunpack.c.l.b16 %v733
        %v2146 = vunpack.c.l.b16 %v734
        %v2147 = vunpack.c.l.b16 %v735
        %v2148 = vunpack.c.l.b16 %v736
        %v2149 = vunpack.c.l.b16 %v737
        %v2150 = vunpack.c.l.b16 %v738
        %v2151 = vunpack.c.l.b16 %v739
        %v2152 = vunpack.c.l.b16 %v740
        %v2153 = vunpack.c.l.b16 %v741
        %v2154 = vunpack.c.l.b16 %v742
        %v2155 = vunpack.c.l.b16 %v743
        %v2156 = vunpack.c.l.b16 %v744
        %v2157 = vunpack.c.l.b16 %v745
        %v2158 = vunpack.c.l.b16 %v746
        %v2159 = vunpack.c.l.b16 %v747
        %v2160 = vunpack.c.l.b16 %v748
        %v2161 = vunpack.c.l.b16 %v749
        %v2162 = vunpack.c.l.b16 %v750
        %v2163 = vunpack.c.l.b16 %v751
        %v2164 = vunpack.c.l.b16 %v752
        %v2165 = vunpack.c.l.b16 %v753
        %v2166 = vunpack.c.l.b16 %v754
        %v2167 = vunpack.c.l.b16 %v755
        %v2168 = vunpack.c.l.b16 %v756
        %v2169 = vunpack.c.l.b16 %v757
        %v2170 = vunpack.c.l.b16 %v758
        %v2171 = vunpack.c.l.b16 %v759
        %v2172 = vunpack.c.l.b16 %v760
        %v2173 = vunpack.c.l.b16 %v761
        %v2174 = vunpack.c.l.b16 %v762
        %v2175 = vunpack.c.l.b16 %v763
        %v2176 = vunpack.c.l.b16 %v764
        %v2177 = vunpack.c.l.b16 %v765
        %v2178 = vunpack.c.l.b16 %v766
        %v2179 = vunpack.c.l.b16 %v767
        %v2180 = vunpack.c.l.b16 %v768
        %v2181 = vunpack.c.l.b16 %v769
        %v2182 = vunpack.c.l.b16 %v770
        %v2183 = vunpack.c.l.b16 %v771
        %v2184 = vunpack.c.l.b16 %v772
        %v2185 = vunpack.c.l.b16 %v773
        %v2186 = vunpack.c.l.b16 %v774
        %v2187 = vunpack.c.l.b16 %v775
        %v2188 = vunpack.c.l.b16 %v776
        %v2189 = vunpack.c.l.b16 %v777
        %v2190 = vunpack.c.l.b16 %v778
        %v2191 = vunpack.c.l.b16 %v779
        %v2192 = vunpack.c.l.b16 %v780
        %v2193 = vunpack.c.l.b16 %v781
        %v2194 = vunpack.c.l.b16 %v782
        %v2195 = vunpack.c.l.b16 %v783
        %v2196 = vunpack.c.l.b16 %v784
        %v2197 = vunpack.c.l.b16 %v785
        %v2198 = vunpack.c.l.b16 %v786
        %v2199 = vunpack.c.l.b16 %v787
        %v2200 = vunpack.c.l.b16 %v788
        %v2201 = vunpack.c.l.b16 %v789
        %v2202 = vunpack.c.l.b16 %v790
        %v2203 = vunpack.c.l.b16 %v791
        %v2204 = vunpack.c.l.b16 %v792
        %v2205 = vunpack.c.l.b16 %v793
        %v2206 = vunpack.c.l.b16 %v794
        %v2207 = vunpack.c.l.b16 %v795
        %v2208 = vunpack.c.l.b16 %v796
        %v2209 = vunpack.c.l.b16 %v797
        %v2210 = vunpack.c.l.b16 %v798
        %v2211 = vunpack.c.l.b16 %v799
        %v2212 = vunpack.c.l.b16 %v800
        %v2213 = vunpack.c.l.b16 %v801
        %v2214 = vunpack.c.l.b16 %v802
        %v2215 = vunpack.c.l.b16 %v803
        %v2216 = vunpack.c.l.b16 %v804
        %v2217 = vunpack.c.l.b16 %v805
        %v2218 = vunpack.c.l.b16 %v806
        %v2219 = vunpack.c.l.b16 %v807
        %v2220 = vunpack.c.l.b16 %v808
        %v2221 = vunpack.c.l.b16 %v809
        %v2222 = vunpack.c.l.b16 %v810
        %v2223 = vunpack.c.l.b16 %v811
        %v2224 = vunpack.c.l.b16 %v812
        %v2225 = vunpack.c.l.b16 %v813
        %v2226 = vunpack.c.l.b16 %v814
        %v2227 = vunpack.c.l.b16 %v815
        %v2228 = vunpack.c.l.b16 %v816
        %v2229 = vunpack.c.l.b16 %v817
        %v2230 = vunpack.c.l.b16 %v818
        %v2231 = vunpack.c.l.b16 %v819
        %v2232 = vunpack.c.l.b16 %v820
        %v2233 = vunpack.c.l.b16 %v821
        %v2234 = vunpack.c.l.b16 %v822
        %v2235 = vunpack.c.l.b16 %v823
        %v2236 = vunpack.c.l.b16 %v824
        %v2237 = vunpack.c.l.b16 %v825
        %v2238 = vunpack.c.l.b16 %v826
        %v2239 = vunpack.c.l.b16 %v827
        %v2240 = vunpack.c.l.b16 %v828
        %v2241 = vunpack.c.l.b16 %v829
        %v2242 = vunpack.c.l.b16 %v830
        %v2243 = vunpack.c.l.b16 %v831
        %v2244 = vunpack.c.l.b16 %v832
        %v2245 = vunpack.c.l.b16 %v833
        %v2246 = vunpack.c.l.b16 %v834
        %v2247 = vunpack.c.l.b16 %v835
        %v2248 = vunpack.c.l.b16 %v836
        %v2249 = vunpack.c.l.b16 %v837
        %v2250 = vunpack.c.l.b16 %v838
        %v2251 = vunpack.c.l.b16 %v839
        %v2252 = vunpack.c.l.b16 %v840
        %v2253 = vunpack.c.l.b16 %v841
        %v2254 = vunpack.c.l.b16 %v842
        %v2255 = vunpack.c.l.b16 %v843
        %v2256 = vunpack.c.l.b16 %v844
        %v2257 = vunpack.c.l.b16 %v845
        %v2258 = vunpack.c.l.b16 %v846
        %v2259 = vunpack.c.l.b16 %v847
        %v2260 = vunpack.c.l.b16 %v848
        %v2261 = vunpack.c.l.b16 %v849
        %v2262 = vunpack.c.l.b16 %v850
        %v2263 = vunpack.c.l.b16 %v851
        %v2264 = vunpack.c.l.b16 %v852
        %v2265 = vunpack.c.l.b16 %v853
        %v2266 = vunpack.c.l.b16 %v854
        %v2267 = vunpack.c.l.b16 %v855
        %v2268 = vunpack.c.l.b16 %v856
        %v2269 = vunpack.c.l.b16 %v857
        %v2270 = vunpack.c.l.b16 %v858
        %v2271 = vunpack.c.l.b16 %v859
        %v2272 = vunpack.c.l.b16 %v860
        %v2273 = vunpack.c.l.b16 %v861
        %v2274 = vunpack.c.l.b16 %v862
        %v2275 = vunpack.c.l.b16 %v863
        %v2276 = vunpack.c.l.b16 %v864
        %v2277 = vunpack.c.l.b16 %v865
        %v2278 = vunpack.c.l.b16 %v866
        %v2279 = vunpack.c.l.b16 %v867
        %v2280 = vunpack.c.l.b16 %v868
        %v2281 = vunpack.c.l.b16 %v869
        %v2282 = vunpack.c.l.b16 %v870
        %v2283 = vunpack.c.l.b16 %v871
        %v2284 = vunpack.c.l.b16 %v872
        %v2285 = vunpack.c.l.b16 %v873
        %v2286 = vunpack.c.l.b16 %v874
        %v2287 = vunpack.c.l.b16 %v875
        %v2288 = vunpack.c.l.b16 %v876
        %v2289 = vunpack.c.l.b16 %v877
        %v2290 = vunpack.c.l.b16 %v878
        %v2291 = vunpack.c.l.b16 %v879
        %v2292 = vunpack.c.l.b16 %v880
        %v2293 = vunpack.c.l.b16 %v881
        %v2294 = vunpack.c.l.b16 %v882
        %v2295 = vunpack.c.l.b16 %v883
        %v2296 = vunpack.c.l.b16 %v884
        %v2297 = vunpack.c.l.b16 %v885
        %v2298 = vunpack.c.l.b16 %v886
        %v2299 = vunpack.c.l.b16 %v887
        %v2300 = vunpack.c.l.b16 %v888
        %v2301 = vunpack.c.l.b16 %v889
        %v2302 = vunpack.c.l.b16 %v890
        %v2303 = vunpack.c.l.b16 %v891
        %v2304 = vunpack.c.l.b16 %v892
        %v2305 = vunpack.c.l.b16 %v893
        %v2306 = vunpack.c.l.b16 %v894
        %v2307 = vunpack.c.l.b16 %v895
        %v2308 = vunpack.c.l.b16 %v896
        %v2309 = vunpack.c.l.b16 %v897
        %v2310 = vunpack.c.l.b16 %v898
        %v2311 = vunpack.c.l.b16 %v899
        %v2312 = vunpack.c.l.b16 %v900
        %v2313 = vunpack.c.l.b16 %v901
        %v2314 = vunpack.c.l.b16 %v902
        %v2315 = vunpack.c.l.b16 %v903
        %v2316 = vunpack.c.l.b16 %v904
        %v2317 = vunpack.c.l.b16 %v905
        %v2318 = vunpack.c.l.b16 %v906
        %v2319 = vunpack.c.l.b16 %v907
        %v2320 = vunpack.c.l.b16 %v908
        %v2321 = vunpack.c.l.b16 %v909
        %v2322 = vunpack.c.l.b16 %v910
        %v2323 = vunpack.c.l.b16 %v911
        %v2324 = vunpack.c.l.b16 %v912
        %v2325 = vunpack.c.l.b16 %v913
        %v2326 = vunpack.c.l.b16 %v914
        %v2327 = vunpack.c.l.b16 %v915
        %v2328 = vunpack.c.l.b16 %v916
        %v2329 = vunpack.c.l.b16 %v917
        %v2330 = vunpack.c.l.b16 %v918
        %v2331 = vunpack.c.l.b16 %v919
        %v2332 = vunpack.c.l.b16 %v920
        %v2333 = vunpack.c.l.b16 %v921
        %v2334 = vunpack.c.l.b16 %v922
        %v2335 = vunpack.c.l.b16 %v923
        %v2336 = vunpack.c.l.b16 %v924
        %v2337 = vunpack.c.l.b16 %v925
        %v2338 = vunpack.c.l.b16 %v926
        %v2339 = vunpack.c.l.b16 %v927
        %v2340 = vunpack.c.l.b16 %v928
        %v2341 = vunpack.c.l.b16 %v929
        %v2342 = vunpack.c.l.b16 %v930
        %v2343 = vunpack.c.l.b16 %v931
        %v2344 = vunpack.c.l.b16 %v932
        %v2345 = vunpack.c.l.b16 %v933
        %v2346 = vunpack.c.l.b16 %v934
        %v2347 = vunpack.c.l.b16 %v935
        %v2348 = vunpack.c.l.b16 %v936
        %v2349 = vunpack.c.l.b16 %v937
        %v2350 = vunpack.c.l.b16 %v938
        %v2351 = vunpack.c.l.b16 %v939
        %v2352 = vunpack.c.l.b16 %v940
        %v2353 = vunpack.c.l.b16 %v941
        %v2354 = vunpack.c.l.b16 %v942
        %v2355 = vunpack.c.l.b16 %v943
        %v2356 = vunpack.c.l.b16 %v944
        %v2357 = vunpack.c.l.b16 %v945
        %v2358 = vunpack.c.l.b16 %v946
        %v2359 = vunpack.c.l.b16 %v947
        %v2360 = vunpack.c.l.b16 %v948
        %v2361 = vunpack.c.l.b16 %v949
        %v2362 = vunpack.c.l.b16 %v950
        %v2363 = vunpack.c.l.b16 %v951
        %v2364 = vunpack.c.l.b16 %v952
        %v2365 = vunpack.c.l.b16 %v953
        %v2366 = vunpack.c.l.b16 %v954
        %v2367 = vunpack.c.l.b16 %v955
        %v2368 = vunpack.c.l.b16 %v956
        %v2369 = vunpack.c.l.b16 %v957
        %v2370 = vunpack.c.l.b16 %v958
        %v2371 = vunpack.c.l.b16 %v959
        %v2372 = vunpack.c.l.b16 %v960
        %v2373 = vunpack.c.l.b16 %v961
        %v2374 = vunpack.c.l.b16 %v962
        %v2375 = vunpack.c.l.b16 %v963
        %v2376 = vunpack.c.l.b16 %v964
        %v2377 = vunpack.c.l.b16 %v965
        %v2378 = vunpack.c.l.b16 %v966
        %v2379 = vunpack.c.l.b16 %v967
        %v2380 = vunpack.c.l.b16 %v968
        %v2381 = vunpack.c.l.b16 %v969
        %v2382 = vunpack.c.l.b16 %v970
        %v2383 = vunpack.c.l.b16 %v971
        %v2384 = vunpack.c.l.b16 %v972
        %v2385 = vunpack.c.l.b16 %v973
        %v2386 = vunpack.c.l.b16 %v974
        %v2387 = vunpack.c.l.b16 %v975
        %v2388 = vunpack.c.l.b16 %v976
        %v2389 = vunpack.c.l.b16 %v977
        %v2390 = vunpack.c.l.b16 %v978
        %v2391 = vunpack.c.l.b16 %v979
        %v2392 = vunpack.c.l.b16 %v980
        %v2393 = vunpack.c.l.b16 %v981
        %v2394 = vunpack.c.l.b16 %v982
        %v2395 = vunpack.c.l.b16 %v983
        %v2396 = vunpack.c.l.b16 %v984
        %v2397 = vunpack.c.l.b16 %v985
        %v2398 = vunpack.c.l.b16 %v986
        %v2399 = vunpack.c.l.b16 %v987
        %v2400 = vunpack.c.l.b16 %v988
        %v2401 = vunpack.c.l.b16 %v989
        %v2402 = vunpack.c.l.b16 %v990
        %v2403 = vunpack.c.l.b16 %v991
        %v2404 = vunpack.c.l.b16 %v992
        %v2405 = vunpack.c.l.b16 %v993
        %v2406 = vunpack.c.l.b16 %v994
        %v2407 = vunpack.c.l.b16 %v995
        %v2408 = vunpack.c.l.b16 %v996
        %v2409 = vunpack.c.l.b16 %v997
        %v2410 = vunpack.c.l.b16 %v998
        %v2411 = vunpack.c.l.b16 %v999
        %v2412 = vunpack.c.l.b16 %v1000
        %v2413 = vunpack.c.l.b16 %v1001
        %v2414 = vunpack.c.l.b16 %v1002
        %v2415 = vunpack.c.l.b16 %v1003
        %v2416 = vunpack.c.l.b16 %v1004
        %v2417 = vunpack.c.l.b16 %v1005
        %v2418 = vunpack.c.l.b16 %v1006
        %v2419 = vunpack.c.l.b16 %v1007
        %v2420 = vunpack.c.l.b16 %v1008
        %v2421 = vunpack.c.l.b16 %v1009
        %v2422 = vunpack.c.l.b16 %v1010
        %v2423 = vunpack.c.l.b16 %v1011
        %v2424 = vunpack.c.l.b16 %v1012
        %v2425 = vunpack.c.l.b16 %v1013
        %v2426 = vunpack.c.l.b16 %v1014
        %v2427 = vunpack.c.l.b16 %v1015
        %v2428 = vunpack.c.l.b16 %v1016
        %v2429 = vunpack.c.l.b16 %v1017
        %v2430 = vunpack.c.l.b16 %v1018
        %v2431 = vunpack.c.l.b16 %v1019
        %v2432 = vunpack.c.l.b16 %v1020
        %v2433 = vunpack.c.l.b16 %v1021
        %v2434 = vunpack.c.l.b16 %v1022
        %v2435 = vunpack.c.l.b16 %v1023
        %v2436 = vunpack.c.l.b16 %v1024
        %v2437 = vunpack.c.l.b16 %v1025
        %v2438 = vunpack.c.l.b16 %v1026
        %v2439 = vunpack.c.l.b16 %v1027
        %v2440 = vunpack.c.l.b16 %v1028
        %v2441 = vunpack.c.l.b16 %v1029
        %v2442 = vunpack.c.l.b16 %v1030
        %v2443 = vunpack.c.l.b16 %v1031
        %v2444 = vunpack.c.l.b16 %v1032
        %v2445 = vunpack.c.l.b16 %v1033
        %v2446 = vunpack.c.l.b16 %v1034
        %v2447 = vunpack.c.l.b16 %v1035
        %v2448 = vunpack.c.l.b16 %v1036
        %v2449 = vunpack.c.l.b16 %v1037
        %v2450 = vunpack.c.l.b16 %v1038
        %v2451 = vunpack.c.l.b16 %v1039
        %v2452 = vunpack.c.l.b16 %v1040
        %v2453 = vunpack.c.l.b16 %v1041
        %v2454 = vunpack.c.l.b16 %v1042
        %v2455 = vunpack.c.l.b16 %v1043
        %v2456 = vunpack.c.l.b16 %v1044
        %v2457 = vunpack.c.l.b16 %v1045
        %v2458 = vunpack.c.l.b16 %v1046
        %v2459 = vunpack.c.l.b16 %v1047
        %v2460 = vunpack.c.l.b16 %v1048
        %v2461 = vunpack.c.l.b16 %v1049
        %v2462 = vunpack.c.l.b16 %v1050
        %v2463 = vunpack.c.l.b16 %v1051
        %v2464 = vunpack.c.l.b16 %v1052
        %v2465 = vunpack.c.l.b16 %v1053
        %v2466 = vunpack.c.l.b16 %v1054
        %v2467 = vunpack.c.l.b16 %v1055
        %v2468 = vunpack.c.l.b16 %v1056
        %v2469 = vunpack.c.l.b16 %v1057
        %v2470 = vunpack.c.l.b16 %v1058
        %v2471 = vunpack.c.l.b16 %v1059
        %v2472 = vunpack.c.l.b16 %v1060
        %v2473 = vunpack.c.l.b16 %v1061
        %v2474 = vunpack.c.l.b16 %v1062
        %v2475 = vunpack.c.l.b16 %v1063
        %v2476 = vunpack.c.l.b16 %v1064
        %v2477 = vunpack.c.l.b16 %v1065
        %v2478 = vunpack.c.l.b16 %v1066
        %v2479 = vunpack.c.l.b16 %v1067
        %v2480 = vunpack.c.l.b16 %v1068
        %v2481 = vunpack.c.l.b16 %v1069
        %v2482 = vunpack.c.l.b16 %v1070
        %v2483 = vunpack.c.l.b16 %v1071
        %v2484 = vunpack.c.l.b16 %v1072
        %v2485 = vunpack.c.l.b16 %v1073
        %v2486 = vunpack.c.l.b16 %v1074
        %v2487 = vunpack.c.l.b16 %v1075
        %v2488 = vunpack.c.l.b16 %v1076
        %v2489 = vunpack.c.l.b16 %v1077
        %v2490 = vunpack.c.l.b16 %v1078
        %v2491 = vunpack.c.l.b16 %v1079
        %v2492 = vunpack.c.l.b16 %v1080
        %v2493 = vunpack.c.l.b16 %v1081
        %v2494 = vunpack.c.l.b16 %v1082
        %v2495 = vunpack.c.l.b16 %v1083
        %v2496 = vunpack.c.l.b16 %v1084
        %v2497 = vunpack.c.l.b16 %v1085
        %v2498 = vunpack.c.l.b16 %v1086
        %v2499 = vunpack.c.l.b16 %v1087
        %v2500 = vunpack.c.l.b16 %v1088
        %v2501 = vunpack.c.l.b16 %v1089
        %v2502 = vunpack.c.l.b16 %v1090
        %v2503 = vunpack.c.l.b16 %v1091
        %v2504 = vunpack.c.l.b16 %v1092
        %v2505 = vunpack.c.l.b16 %v1093
        %v2506 = vunpack.c.l.b16 %v1094
        %v2507 = vunpack.c.l.b16 %v1095
        %v2508 = vunpack.c.l.b16 %v1096
        %v2509 = vunpack.c.l.b16 %v1097
        %v2510 = vunpack.c.l.b16 %v1098
        %v2511 = vunpack.c.l.b16 %v1099
        %v2512 = vunpack.c.l.b16 %v1100
        %v2513 = vunpack.c.l.b16 %v1101
        %v2514 = vunpack.c.l.b16 %v1102
        %v2515 = vunpack.c.l.b16 %v1103
        %v2516 = vunpack.c.l.b16 %v1104
        %v2517 = vunpack.c.l.b16 %v1105
        %v2518 = vunpack.c.l.b16 %v1106
        %v2519 = vunpack.c.l.b16 %v1107
        %v2520 = vunpack.c.l.b16 %v1108
        %v2521 = vunpack.c.l.b16 %v1109
        %v2522 = vunpack.c.l.b16 %v1110
        %v2523 = vunpack.c.l.b16 %v1111
        %v2524 = vunpack.c.l.b16 %v1112
        %v2525 = vunpack.c.l.b16 %v1113
        %v2526 = vunpack.c.l.b16 %v1114
        %v2527 = vunpack.c.l.b16 %v1115
        %v2528 = vunpack.c.l.b16 %v1116
        %v2529 = vunpack.c.l.b16 %v1117
        %v2530 = vunpack.c.l.b16 %v1118
        %v2531 = vunpack.c.l.b16 %v1119
        %v2532 = vunpack.c.l.b16 %v1120
        %v2533 = vunpack.c.l.b16 %v1121
        %v2534 = vunpack.c.l.b16 %v1122
        %v2535 = vunpack.c.l.b16 %v1123
        %v2536 = vunpack.c.l.b16 %v1124
        %v2537 = vunpack.c.l.b16 %v1125
        %v2538 = vunpack.c.l.b16 %v1126
        %v2539 = vunpack.c.l.b16 %v1127
        %v2540 = vunpack.c.l.b16 %v1128
        %v2541 = vunpack.c.l.b16 %v1129
        %v2542 = vunpack.c.l.b16 %v1130
        %v2543 = vunpack.c.l.b16 %v1131
        %v2544 = vunpack.c.l.b16 %v1132
        %v2545 = vunpack.c.l.b16 %v1133
        %v2546 = vunpack.c.l.b16 %v1134
        %v2547 = vunpack.c.l.b16 %v1135
        %v2548 = vunpack.c.l.b16 %v1136
        %v2549 = vunpack.c.l.b16 %v1137
        %v2550 = vunpack.c.l.b16 %v1138
        %v2551 = vunpack.c.l.b16 %v1139
        %v2552 = vunpack.c.l.b16 %v1140
        %v2553 = vunpack.c.l.b16 %v1141
        %v2554 = vunpack.c.l.b16 %v1142
        %v2555 = vunpack.c.l.b16 %v1143
        %v2556 = vunpack.c.l.b16 %v1144
        %v2557 = vunpack.c.l.b16 %v1145
        %v2558 = vunpack.c.l.b16 %v1146
        %v2559 = vunpack.c.l.b16 %v1147
        %v2560 = vunpack.c.l.b16 %v1148
        %v2561 = vunpack.c.l.b16 %v1149
        %v2562 = vunpack.c.l.b16 %v1150
        %v2563 = vunpack.c.l.b16 %v1151
        %v2564 = vunpack.c.l.b16 %v1152
        %v2565 = vunpack.c.l.b16 %v1153
        %v2566 = vunpack.c.l.b16 %v1154
        %v2567 = vunpack.c.l.b16 %v1155
        %v2568 = vunpack.c.l.b16 %v1156
        %v2569 = vunpack.c.l.b16 %v1157
        %v2570 = vunpack.c.l.b16 %v1158
        %v2571 = vunpack.c.l.b16 %v1159
        %v2572 = vunpack.c.l.b16 %v1160
        %v2573 = vunpack.c.l.b16 %v1161
        %v2574 = vunpack.c.l.b16 %v1162
        %v2575 = vunpack.c.l.b16 %v1163
        %v2576 = vunpack.c.l.b16 %v1164
        %v2577 = vunpack.c.l.b16 %v1165
        %v2578 = vunpack.c.l.b16 %v1166
        %v2579 = vunpack.c.l.b16 %v1167
        %v2580 = vunpack.c.l.b16 %v1168
        %v2581 = vunpack.c.l.b16 %v1169
        %v2582 = vunpack.c.l.b16 %v1170
        %v2583 = vunpack.c.l.b16 %v1171
        %v2584 = vunpack.c.l.b16 %v1172
        %v2585 = vunpack.c.l.b16 %v1173
        %v2586 = vunpack.c.l.b16 %v1174
        %v2587 = vunpack.c.l.b16 %v1175
        %v2588 = vunpack.c.l.b16 %v1176
        %v2589 = vunpack.c.l.b16 %v1177
        %v2590 = vunpack.c.l.b16 %v1178
        %v2591 = vunpack.c.l.b16 %v1179
        %v2592 = vunpack.c.l.b16 %v1180
        %v2593 = vunpack.c.l.b16 %v1181
        %v2594 = vunpack.c.l.b16 %v1182
        %v2595 = vunpack.c.l.b16 %v1183
        %v2596 = vunpack.c.l.b16 %v1184
        %v2597 = vunpack.c.l.b16 %v1185
        %v2598 = vunpack.c.l.b16 %v1186
        %v2599 = vunpack.c.l.b16 %v1187
        %v2600 = vunpack.c.l.b16 %v1188
        %v2601 = vunpack.c.l.b16 %v1189
        %v2602 = vunpack.c.l.b16 %v1190
        %v2603 = vunpack.c.l.b16 %v1191
        %v2604 = vunpack.c.l.b16 %v1192
        %v2605 = vunpack.c.l.b16 %v1193
        %v2606 = vunpack.c.l.b16 %v1194
        %v2607 = vunpack.c.l.b16 %v1195
        %v2608 = vunpack.c.l.b16 %v1196
        %v2609 = vunpack.c.l.b16 %v1197
        %v2610 = vunpack.c.l.b16 %v1198
        %v2611 = vunpack.c.l.b16 %v1199
        %v2612 = vunpack.c.l.b16 %v1200
        %v2613 = vunpack.c.l.b16 %v1201
        %v2614 = vunpack.c.l.b16 %v1202
        %v2615 = vunpack.c.l.b16 %v1203
        %v2616 = vunpack.c.l.b16 %v1204
        %v2617 = vunpack.c.l.b16 %v1205
        %v2618 = vunpack.c.l.b16 %v1206
        %v2619 = vunpack.c.l.b16 %v1207
        %v2620 = vunpack.c.l.b16 %v1208
        %v2621 = vunpack.c.l.b16 %v1209
        %v2622 = vunpack.c.l.b16 %v1210
        %v2623 = vunpack.c.l.b16 %v1211
        %v2624 = vunpack.c.l.b16 %v1212
        %v2625 = vunpack.c.l.b16 %v1213
        %v2626 = vunpack.c.l.b16 %v1214
        %v2627 = vunpack.c.l.b16 %v1215
        %v2628 = vunpack.c.l.b16 %v1216
        %v2629 = vunpack.c.l.b16 %v1217
        %v2630 = vunpack.c.l.b16 %v1218
        %v2631 = vunpack.c.l.b16 %v1219
        %v2632 = vunpack.c.l.b16 %v1220
        %v2633 = vunpack.c.l.b16 %v1221
        %v2634 = vunpack.c.l.b16 %v1222
        %v2635 = vunpack.c.l.b16 %v1223
        %v2636 = vunpack.c.l.b16 %v1224
        %v2637 = vunpack.c.l.b16 %v1225
        %v2638 = vunpack.c.l.b16 %v1226
        %v2639 = vunpack.c.l.b16 %v1227
        %v2640 = vunpack.c.l.b16 %v1228
        %v2641 = vunpack.c.l.b16 %v1229
        %v2642 = vunpack.c.l.b16 %v1230
        %v2643 = vunpack.c.l.b16 %v1231
        %v2644 = vunpack.c.l.b16 %v1232
        %v2645 = vunpack.c.l.b16 %v1233
        %v2646 = vunpack.c.l.b16 %v1234
        %v2647 = vunpack.c.l.b16 %v1235
        %v2648 = vunpack.c.l.b16 %v1236
        %v2649 = vunpack.c.l.b16 %v1237
        %v2650 = vunpack.c.l.b16 %v1238
        %v2651 = vunpack.c.l.b16 %v1239
        %v2652 = vunpack.c.l.b16 %v1240
        %v2653 = vunpack.c.l.b16 %v1241
        %v2654 = vunpack.c.l.b16 %v1242
        %v2655 = vunpack.c.l.b16 %v1243
        %v2656 = vunpack.c.l.b16 %v1244
        %v2657 = vunpack.c.l.b16 %v1245
        %v2658 = vunpack.c.l.b16 %v1246
        %v2659 = vunpack.c.l.b16 %v1247
        %v2660 = vunpack.c.l.b16 %v1248
        %v2661 = vunpack.c.l.b16 %v1249
        %v2662 = vunpack.c.l.b16 %v1250
        %v2663 = vunpack.c.l.b16 %v1251
        %v2664 = vunpack.c.l.b16 %v1252
        %v2665 = vunpack.c.l.b16 %v1253
        %v2666 = vunpack.c.l.b16 %v1254
        %v2667 = vunpack.c.l.b16 %v1255
        %v2668 = vunpack.c.l.b16 %v1256
        %v2669 = vunpack.c.l.b16 %v1257
        %v2670 = vunpack.c.l.b16 %v1258
        %v2671 = vunpack.c.l.b16 %v1259
        %v2672 = vunpack.c.l.b16 %v1260
        %v2673 = vunpack.c.l.b16 %v1261
        %v2674 = vunpack.c.l.b16 %v1262
        %v2675 = vunpack.c.l.b16 %v1263
        %v2676 = vunpack.c.l.b16 %v1264
        %v2677 = vunpack.c.l.b16 %v1265
        %v2678 = vunpack.c.l.b16 %v1266
        %v2679 = vunpack.c.l.b16 %v1267
        %v2680 = vunpack.c.l.b16 %v1268
        %v2681 = vunpack.c.l.b16 %v1269
        %v2682 = vunpack.c.l.b16 %v1270
        %v2683 = vunpack.c.l.b16 %v1271
        %v2684 = vunpack.c.l.b16 %v1272
        %v2685 = vunpack.c.l.b16 %v1273
        %v2686 = vunpack.c.l.b16 %v1274
        %v2687 = vunpack.c.l.b16 %v1275
        %v2688 = vunpack.c.l.b16 %v1276
        %v2689 = vunpack.c.l.b16 %v1277
        %v2690 = vunpack.c.l.b16 %v1278
        %v2691 = vunpack.c.l.b16 %v1279
        %v2692 = vunpack.c.l.b16 %v1280
        %v2693 = vunpack.c.l.b16 %v1281
        %v2694 = vunpack.c.l.b16 %v1282
        %v2695 = vunpack.c.l.b16 %v1283
        %v2696 = vunpack.c.l.b16 %v1284
        %v2697 = vunpack.c.l.b16 %v1285
        %v2698 = vunpack.c.l.b16 %v1286
        %v2699 = vunpack.c.l.b16 %v1287
        %v2700 = vunpack.c.l.b16 %v1288
        %v2701 = vunpack.c.l.b16 %v1289
        %v2702 = vunpack.c.l.b16 %v1290
        %v2703 = vunpack.c.l.b16 %v1291
        %v2704 = vunpack.c.l.b16 %v1292
        %v2705 = vunpack.c.l.b16 %v1293
        %v2706 = vunpack.c.l.b16 %v1294
        %v2707 = vunpack.c.l.b16 %v1295
        %v2708 = vunpack.c.l.b16 %v1296
        %v2709 = vunpack.c.l.b16 %v1297
        %v2710 = vunpack.c.l.b16 %v1298
        %v2711 = vunpack.c.l.b16 %v1299
        %v2712 = vunpack.c.l.b16 %v1300
        %v2713 = vunpack.c.l.b16 %v1301
        %v2714 = vunpack.c.l.b16 %v1302
        %v2715 = vunpack.c.l.b16 %v1303
        %v2716 = vunpack.c.l.b16 %v1304
        %v2717 = vunpack.c.l.b16 %v1305
        %v2718 = vunpack.c.l.b16 %v1306
        %v2719 = vunpack.c.l.b16 %v1307
        %v2720 = vunpack.c.l.b16 %v1308
        %v2721 = vunpack.c.l.b16 %v1309
        %v2722 = vunpack.c.l.b16 %v1310
        %v2723 = vunpack.c.l.b16 %v1311
        %v2724 = vunpack.c.l.b16 %v1312
        %v2725 = vunpack.c.l.b16 %v1313
        %v2726 = vpack.c.b16 %v2023, %v2022
        %v2727 = vpack.c.b16 %v2025, %v2024
        %v2728 = vpack.c.b16 %v2027, %v2026
        %v2729 = vpack.c.b16 %v2029, %v2028
        %v2730 = vpack.c.b16 %v2031, %v2030
        %v2731 = vpack.c.b16 %v2033, %v2032
        %v2732 = vpack.c.b16 %v2035, %v2034
        %v2733 = vpack.c.b16 %v2037, %v2036
        %v2734 = vpack.c.b16 %v2039, %v2038
        %v2735 = vpack.c.b16 %v2041, %v2040
        %v2736 = vpack.c.b16 %v2043, %v2042
        %v2737 = vpack.c.b16 %v2045, %v2044
        %v2738 = vpack.c.b16 %v2047, %v2046
        %v2739 = vpack.c.b16 %v2049, %v2048
        %v2740 = vpack.c.b16 %v2051, %v2050
        %v2741 = vpack.c.b16 %v2053, %v2052
        %v2742 = vpack.c.b16 %v2055, %v2054
        %v2743 = vpack.c.b16 %v2057, %v2056
        %v2744 = vpack.c.b16 %v2059, %v2058
        %v2745 = vpack.c.b16 %v2061, %v2060
        %v2746 = vpack.c.b16 %v2063, %v2062
        %v2747 = vpack.c.b16 %v2065, %v2064
        %v2748 = vpack.c.b16 %v2067, %v2066
        %v2749 = vpack.c.b16 %v2069, %v2068
        %v2750 = vpack.c.b16 %v2071, %v2070
        %v2751 = vpack.c.b16 %v2073, %v2072
        %v2752 = vpack.c.b16 %v2075, %v2074
        %v2753 = vpack.c.b16 %v2077, %v2076
        %v2754 = vpack.c.b16 %v2079, %v2078
        %v2755 = vpack.c.b16 %v2081, %v2080
        %v2756 = vpack.c.b16 %v2083, %v2082
        %v2757 = vpack.c.b16 %v2085, %v2084
        %v2758 = vpack.c.b16 %v2087, %v2086
        %v2759 = vpack.c.b16 %v2089, %v2088
        %v2760 = vpack.c.b16 %v2091, %v2090
        %v2761 = vpack.c.b16 %v2093, %v2092
        %v2762 = vpack.c.b16 %v2095, %v2094
        %v2763 = vpack.c.b16 %v2097, %v2096
        %v2764 = vpack.c.b16 %v2099, %v2098
        %v2765 = vpack.c.b16 %v2101, %v2100
        %v2766 = vpack.c.b16 %v2103, %v2102
        %v2767 = vpack.c.b16 %v2105, %v2104
        %v2768 = vpack.c.b16 %v2107, %v2106
        %v2769 = vpack.c.b16 %v2109, %v2108
        %v2770 = vpack.c.b16 %v2111, %v2110
        %v2771 = vpack.c.b16 %v2113, %v2112
        %v2772 = vpack.c.b16 %v2115, %v2114
        %v2773 = vpack.c.b16 %v2117, %v2116
        %v2774 = vpack.c.b16 %v2119, %v2118
        %v2775 = vpack.c.b16 %v2121, %v2120
        %v2776 = vpack.c.b16 %v2123, %v2122
        %v2777 = vpack.c.b16 %v2125, %v2124
        %v2778 = vpack.c.b16 %v2127, %v2126
        %v2779 = vpack.c.b16 %v2129, %v2128
        %v2780 = vpack.c.b16 %v2131, %v2130
        %v2781 = vpack.c.b16 %v2133, %v2132
        %v2782 = vpack.c.b16 %v2135, %v2134
        %v2783 = vpack.c.b16 %v2137, %v2136
        %v2784 = vpack.c.b16 %v2139, %v2138
        %v2785 = vpack.c.b16 %v2141, %v2140
        %v2786 = vpack.c.b16 %v2143, %v2142
        %v2787 = vpack.c.b16 %v2145, %v2144
        %v2788 = vpack.c.b16 %v2147, %v2146
        %v2789 = vpack.c.b16 %v2149, %v2148
        %v2790 = vpack.c.b16 %v2151, %v2150
        %v2791 = vpack.c.b16 %v2153, %v2152
        %v2792 = vpack.c.b16 %v2155, %v2154
        %v2793 = vpack.c.b16 %v2157, %v2156
        %v2794 = vpack.c.b16 %v2159, %v2158
        %v2795 = vpack.c.b16 %v2161, %v2160
        %v2796 = vpack.c.b16 %v2163, %v2162
        %v2797 = vpack.c.b16 %v2165, %v2164
        %v2798 = vpack.c.b16 %v2167, %v2166
        %v2799 = vpack.c.b16 %v2169, %v2168
        %v2800 = vpack.c.b16 %v2171, %v2170
        %v2801 = vpack.c.b16 %v2173, %v2172
        %v2802 = vpack.c.b16 %v2175, %v2174
        %v2803 = vpack.c.b16 %v2177, %v2176
        %v2804 = vpack.c.b16 %v2179, %v2178
        %v2805 = vpack.c.b16 %v2181, %v2180
        %v2806 = vpack.c.b16 %v2183, %v2182
        %v2807 = vpack.c.b16 %v2185, %v2184
        %v2808 = vpack.c.b16 %v2187, %v2186
        %v2809 = vpack.c.b16 %v2189, %v2188
        %v2810 = vpack.c.b16 %v2191, %v2190
        %v2811 = vpack.c.b16 %v2193, %v2192
        %v2812 = vpack.c.b16 %v2195, %v2194
        %v2813 = vpack.c.b16 %v2197, %v2196
        %v2814 = vpack.c.b16 %v2199, %v2198
        %v2815 = vpack.c.b16 %v2201, %v2200
        %v2816 = vpack.c.b16 %v2203, %v2202
        %v2817 = vpack.c.b16 %v2205, %v2204
        %v2818 = vpack.c.b16 %v2207, %v2206
        %v2819 = vpack.c.b16 %v2209, %v2208
        %v2820 = vpack.c.b16 %v2211, %v2210
        %v2821 = vpack.c.b16 %v2213, %v2212
        %v2822 = vpack.c.b16 %v2215, %v2214
        %v2823 = vpack.c.b16 %v2217, %v2216
        %v2824 = vpack.c.b16 %v2219, %v2218
        %v2825 = vpack.c.b16 %v2221, %v2220
        %v2826 = vpack.c.b16 %v2223, %v2222
        %v2827 = vpack.c.b16 %v2225, %v2224
        %v2828 = vpack.c.b16 %v2227, %v2226
        %v2829 = vpack.c.b16 %v2229, %v2228
        %v2830 = vpack.c.b16 %v2231, %v2230
        %v2831 = vpack.c.b16 %v2233, %v2232
        %v2832 = vpack.c.b16 %v2235, %v2234
        %v2833 = vpack.c.b16 %v2237, %v2236
        %v2834 = vpack.c.b16 %v2239, %v2238
        %v2835 = vpack.c.b16 %v2241, %v2240
        %v2836 = vpack.c.b16 %v2243, %v2242
        %v2837 = vpack.c.b16 %v2245, %v2244
        %v2838 = vpack.c.b16 %v2247, %v2246
        %v2839 = vpack.c.b16 %v2249, %v2248
        %v2840 = vpack.c.b16 %v2251, %v2250
        %v2841 = vpack.c.b16 %v2253, %v2252
        %v2842 = vpack.c.b16 %v2255, %v2254
        %v2843 = vpack.c.b16 %v2257, %v2256
        %v2844 = vpack.c.b16 %v2259, %v2258
        %v2845 = vpack.c.b16 %v2261, %v2260
        %v2846 = vpack.c.b16 %v2263, %v2262
        %v2847 = vpack.c.b16 %v2265, %v2264
        %v2848 = vpack.c.b16 %v2267, %v2266
        %v2849 = vpack.c.b16 %v2269, %v2268
        %v2850 = vpack.c.b16 %v2271, %v2270
        %v2851 = vpack.c.b16 %v2273, %v2272
        %v2852 = vpack.c.b16 %v2275, %v2274
        %v2853 = vpack.c.b16 %v2277, %v2276
        %v2854 = vpack.c.b16 %v2279, %v2278
        %v2855 = vpack.c.b16 %v2281, %v2280
        %v2856 = vpack.c.b16 %v2283, %v2282
        %v2857 = vpack.c.b16 %v2285, %v2284
        %v2858 = vpack.c.b16 %v2287, %v2286
        %v2859 = vpack.c.b16 %v2289, %v2288
        %v2860 = vpack.c.b16 %v2291, %v2290
        %v2861 = vpack.c.b16 %v2293, %v2292
        %v2862 = vpack.c.b16 %v2295, %v2294
        %v2863 = vpack.c.b16 %v2297, %v2296
        %v2864 = vpack.c.b16 %v2299, %v2298
        %v2865 = vpack.c.b16 %v2301, %v2300
        %v2866 = vpack.c.b16 %v2303, %v2302
        %v2867 = vpack.c.b16 %v2305, %v2304
        %v2868 = vpack.c.b16 %v2307, %v2306
        %v2869 = vpack.c.b16 %v2309, %v2308
        %v2870 = vpack.c.b16 %v2311, %v2310
        %v2871 = vpack.c.b16 %v2313, %v2312
        %v2872 = vpack.c.b16 %v2315, %v2314
        %v2873 = vpack.c.b16 %v2317, %v2316
        %v2874 = vpack.c.b16 %v2319, %v2318
        %v2875 = vpack.c.b16 %v2321, %v2320
        %v2876 = vpack.c.b16 %v2323, %v2322
        %v2877 = vpack.c.b16 %v2325, %v2324
        %v2878 = vpack.c.b16 %v2327, %v2326
        %v2879 = vpack.c.b16 %v2329, %v2328
        %v2880 = vpack.c.b16 %v2331, %v2330
        %v2881 = vpack.c.b16 %v2333, %v2332
        %v2882 = vpack.c.b16 %v2335, %v2334
        %v2883 = vpack.c.b16 %v2337, %v2336
        %v2884 = vpack.c.b16 %v2339, %v2338
        %v2885 = vpack.c.b16 %v2341, %v2340
        %v2886 = vpack.c.b16 %v2343, %v2342
        %v2887 = vpack.c.b16 %v2345, %v2344
        %v2888 = vpack.c.b16 %v2347, %v2346
        %v2889 = vpack.c.b16 %v2349, %v2348
        %v2890 = vpack.c.b16 %v2351, %v2350
        %v2891 = vpack.c.b16 %v2353, %v2352
        %v2892 = vpack.c.b16 %v2355, %v2354
        %v2893 = vpack.c.b16 %v2357, %v2356
        %v2894 = vpack.c.b16 %v2359, %v2358
        %v2895 = vpack.c.b16 %v2361, %v2360
        %v2896 = vpack.c.b16 %v2363, %v2362
        %v2897 = vpack.c.b16 %v2365, %v2364
        %v2898 = vpack.c.b16 %v2367, %v2366
        %v2899 = vpack.c.b16 %v2369, %v2368
        %v2900 = vpack.c.b16 %v2371, %v2370
        %v2901 = vpack.c.b16 %v2373, %v2372
        %v2902 = vpack.c.b16 %v2375, %v2374
        %v2903 = vpack.c.b16 %v2377, %v2376
        %v2904 = vpack.c.b16 %v2379, %v2378
        %v2905 = vpack.c.b16 %v2381, %v2380
        %v2906 = vpack.c.b16 %v2383, %v2382
        %v2907 = vpack.c.b16 %v2385, %v2384
        %v2908 = vpack.c.b16 %v2387, %v2386
        %v2909 = vpack.c.b16 %v2389, %v2388
        %v2910 = vpack.c.b16 %v2391, %v2390
        %v2911 = vpack.c.b16 %v2393, %v2392
        %v2912 = vpack.c.b16 %v2395, %v2394
        %v2913 = vpack.c.b16 %v2397, %v2396
        %v2914 = vpack.c.b16 %v2399, %v2398
        %v2915 = vpack.c.b16 %v2401, %v2400
        %v2916 = vpack.c.b16 %v2403, %v2402
        %v2917 = vpack.c.b16 %v2405, %v2404
        %v2918 = vpack.c.b16 %v2407, %v2406
        %v2919 = vpack.c.b16 %v2409, %v2408
        %v2920 = vpack.c.b16 %v2411, %v2410
        %v2921 = vpack.c.b16 %v2413, %v2412
        %v2922 = vpack.c.b16 %v2415, %v2414
        %v2923 = vpack.c.b16 %v2417, %v2416
        %v2924 = vpack.c.b16 %v2419, %v2418
        %v2925 = vpack.c.b16 %v2421, %v2420
        %v2926 = vpack.c.b16 %v2423, %v2422
        %v2927 = vpack.c.b16 %v2425, %v2424
        %v2928 = vpack.c.b16 %v2427, %v2426
        %v2929 = vpack.c.b16 %v2429, %v2428
        %v2930 = vpack.c.b16 %v2431, %v2430
        %v2931 = vpack.c.b16 %v2433, %v2432
        %v2932 = vpack.c.b16 %v2435, %v2434
        %v2933 = vpack.c.b16 %v2437, %v2436
        %v2934 = vpack.c.b16 %v2439, %v2438
        %v2935 = vpack.c.b16 %v2441, %v2440
        %v2936 = vpack.c.b16 %v2443, %v2442
        %v2937 = vpack.c.b16 %v2445, %v2444
        %v2938 = vpack.c.b16 %v2447, %v2446
        %v2939 = vpack.c.b16 %v2449, %v2448
        %v2940 = vpack.c.b16 %v2451, %v2450
        %v2941 = vpack.c.b16 %v2453, %v2452
        %v2942 = vpack.c.b16 %v2455, %v2454
        %v2943 = vpack.c.b16 %v2457, %v2456
        %v2944 = vpack.c.b16 %v2459, %v2458
        %v2945 = vpack.c.b16 %v2461, %v2460
        %v2946 = vpack.c.b16 %v2463, %v2462
        %v2947 = vpack.c.b16 %v2465, %v2464
        %v2948 = vpack.c.b16 %v2467, %v2466
        %v2949 = vpack.c.b16 %v2469, %v2468
        %v2950 = vpack.c.b16 %v2471, %v2470
        %v2951 = vpack.c.b16 %v2473, %v2472
        %v2952 = vpack.c.b16 %v2475, %v2474
        %v2953 = vpack.c.b16 %v2477, %v2476
        %v2954 = vpack.c.b16 %v2479, %v2478
        %v2955 = vpack.c.b16 %v2481, %v2480
        %v2956 = vpack.c.b16 %v2483, %v2482
        %v2957 = vpack.c.b16 %v2485, %v2484
        %v2958 = vpack.c.b16 %v2487, %v2486
        %v2959 = vpack.c.b16 %v2489, %v2488
        %v2960 = vpack.c.b16 %v2491, %v2490
        %v2961 = vpack.c.b16 %v2493, %v2492
        %v2962 = vpack.c.b16 %v2495, %v2494
        %v2963 = vpack.c.b16 %v2497, %v2496
        %v2964 = vpack.c.b16 %v2499, %v2498
        %v2965 = vpack.c.b16 %v2501, %v2500
        %v2966 = vpack.c.b16 %v2503, %v2502
        %v2967 = vpack.c.b16 %v2505, %v2504
        %v2968 = vpack.c.b16 %v2507, %v2506
        %v2969 = vpack.c.b16 %v2509, %v2508
        %v2970 = vpack.c.b16 %v2511, %v2510
        %v2971 = vpack.c.b16 %v2513, %v2512
        %v2972 = vpack.c.b16 %v2515, %v2514
        %v2973 = vpack.c.b16 %v2517, %v2516
        %v2974 = vpack.c.b16 %v2519, %v2518
        %v2975 = vpack.c.b16 %v2521, %v2520
        %v2976 = vpack.c.b16 %v2523, %v2522
        %v2977 = vpack.c.b16 %v2525, %v2524
        %v2978 = vpack.c.b16 %v2527, %v2526
        %v2979 = vpack.c.b16 %v2529, %v2528
        %v2980 = vpack.c.b16 %v2531, %v2530
        %v2981 = vpack.c.b16 %v2533, %v2532
        %v2982 = vpack.c.b16 %v2535, %v2534
        %v2983 = vpack.c.b16 %v2537, %v2536
        %v2984 = vpack.c.b16 %v2539, %v2538
        %v2985 = vpack.c.b16 %v2541, %v2540
        %v2986 = vpack.c.b16 %v2543, %v2542
        %v2987 = vpack.c.b16 %v2545, %v2544
        %v2988 = vpack.c.b16 %v2547, %v2546
        %v2989 = vpack.c.b16 %v2549, %v2548
        %v2990 = vpack.c.b16 %v2551, %v2550
        %v2991 = vpack.c.b16 %v2553, %v2552
        %v2992 = vpack.c.b16 %v2555, %v2554
        %v2993 = vpack.c.b16 %v2557, %v2556
        %v2994 = vpack.c.b16 %v2559, %v2558
        %v2995 = vpack.c.b16 %v2561, %v2560
        %v2996 = vpack.c.b16 %v2563, %v2562
        %v2997 = vpack.c.b16 %v2565, %v2564
        %v2998 = vpack.c.b16 %v2567, %v2566
        %v2999 = vpack.c.b16 %v2569, %v2568
        %v3000 = vpack.c.b16 %v2571, %v2570
        %v3001 = vpack.c.b16 %v2573, %v2572
        %v3002 = vpack.c.b16 %v2575, %v2574
        %v3003 = vpack.c.b16 %v2577, %v2576
        %v3004 = vpack.c.b16 %v2579, %v2578
        %v3005 = vpack.c.b16 %v2581, %v2580
        %v3006 = vpack.c.b16 %v2583, %v2582
        %v3007 = vpack.c.b16 %v2585, %v2584
        %v3008 = vpack.c.b16 %v2587, %v2586
        %v3009 = vpack.c.b16 %v2589, %v2588
        %v3010 = vpack.c.b16 %v2591, %v2590
        %v3011 = vpack.c.b16 %v2593, %v2592
        %v3012 = vpack.c.b16 %v2595, %v2594
        %v3013 = vpack.c.b16 %v2597, %v2596
        %v3014 = vpack.c.b16 %v2599, %v2598
        %v3015 = vpack.c.b16 %v2601, %v2600
        %v3016 = vpack.c.b16 %v2603, %v2602
        %v3017 = vpack.c.b16 %v2605, %v2604
        %v3018 = vpack.c.b16 %v2607, %v2606
        %v3019 = vpack.c.b16 %v2609, %v2608
        %v3020 = vpack.c.b16 %v2611, %v2610
        %v3021 = vpack.c.b16 %v2613, %v2612
        %v3022 = vpack.c.b16 %v2615, %v2614
        %v3023 = vpack.c.b16 %v2617, %v2616
        %v3024 = vpack.c.b16 %v2619, %v2618
        %v3025 = vpack.c.b16 %v2621, %v2620
        %v3026 = vpack.c.b16 %v2623, %v2622
        %v3027 = vpack.c.b16 %v2625, %v2624
        %v3028 = vpack.c.b16 %v2627, %v2626
        %v3029 = vpack.c.b16 %v2629, %v2628
        %v3030 = vpack.c.b16 %v2631, %v2630
        %v3031 = vpack.c.b16 %v2633, %v2632
        %v3032 = vpack.c.b16 %v2635, %v2634
        %v3033 = vpack.c.b16 %v2637, %v2636
        %v3034 = vpack.c.b16 %v2639, %v2638
        %v3035 = vpack.c.b16 %v2641, %v2640
        %v3036 = vpack.c.b16 %v2643, %v2642
        %v3037 = vpack.c.b16 %v2645, %v2644
        %v3038 = vpack.c.b16 %v2647, %v2646
        %v3039 = vpack.c.b16 %v2649, %v2648
        %v3040 = vpack.c.b16 %v2651, %v2650
        %v3041 = vpack.c.b16 %v2653, %v2652
        %v3042 = vpack.c.b16 %v2655, %v2654
        %v3043 = vpack.c.b16 %v2657, %v2656
        %v3044 = vpack.c.b16 %v2659, %v2658
        %v3045 = vpack.c.b16 %v2661, %v2660
        %v3046 = vpack.c.b16 %v2663, %v2662
        %v3047 = vpack.c.b16 %v2665, %v2664
        %v3048 = vpack.c.b16 %v2667, %v2666
        %v3049 = vpack.c.b16 %v2669, %v2668
        %v3050 = vpack.c.b16 %v2671, %v2670
        %v3051 = vpack.c.b16 %v2673, %v2672
        %v3052 = vpack.c.b16 %v2675, %v2674
        %v3053 = vpack.c.b16 %v2677, %v2676
        %v3054 = vpack.c.b16 %v2679, %v2678
        %v3055 = vpack.c.b16 %v2681, %v2680
        %v3056 = vpack.c.b16 %v2683, %v2682
        %v3057 = vpack.c.b16 %v2685, %v2684
        %v3058 = vpack.c.b16 %v2687, %v2686
        %v3059 = vpack.c.b16 %v2689, %v2688
        %v3060 = vpack.c.b16 %v2691, %v2690
        %v3061 = vpack.c.b16 %v2693, %v2692
        %v3062 = vpack.c.b16 %v2695, %v2694
        %v3063 = vpack.c.b16 %v2697, %v2696
        %v3064 = vpack.c.b16 %v2699, %v2698
        %v3065 = vpack.c.b16 %v2701, %v2700
        %v3066 = vpack.c.b16 %v2703, %v2702
        %v3067 = vpack.c.b16 %v2705, %v2704
        %v3068 = vpack.c.b16 %v2707, %v2706
        %v3069 = vpack.c.b16 %v2709, %v2708
        %v3070 = vpack.c.b16 %v2711, %v2710
        %v3071 = vpack.c.b16 %v2713, %v2712
        %v3072 = vpack.c.b16 %v2715, %v2714
        %v3073 = vpack.c.b16 %v2717, %v2716
        %v3074 = vpack.c.b16 %v2719, %v2718
        %v3075 = vpack.c.b16 %v2721, %v2720
        %v3076 = vpack.c.b16 %v2723, %v2722
        %v3077 = vpack.c.b16 %v2725, %v2724
        %vm3429 = vcmask 990208
        %v3431 = vsel %vm3429, %v609, 0
        %vm3433 = vcmask 1043456
        %vm3434 = vcmask 1044480
        %v3435 = vsel %vm3433, 4294967295, 65535
        %v3436 = vsel %vm3434, %v3435, 0
        %v3438 = vand.u32 %v3077, %v3436
        %3440 = vmatpush.bf16.msra.mxu0 %v2733
        %3441 = vmatpush.bf16.msra.mxu0 %v2732
        %3442 = vmatpush.bf16.msra.mxu0 %v2731
        %3443 = vmatpush.bf16.msra.mxu0 %v2730
        %3444 = vmatpush.bf16.msra.mxu0 %v2729
        %3445 = vmatpush.bf16.msra.mxu0 %v2728
        %3446 = vmatpush.bf16.msra.mxu0 %v2727
        %3447 = vmatpush.bf16.msra.mxu0 %v2726
        %3448 = vmatmul.bf16.gmra.mxu0 %v566
        %v3449 = vpop.f32.mrf.mxu0
        %v3450 = vadd.f32 %v1316, %v3449
        %v3451 = vpop.f32.mrf.mxu0
        %3452 = vdwg.mxu0
        %3453 = vmatpush.bf16.msra.mxu0 %v2741
        %3454 = vmatpush.bf16.msra.mxu0 %v2740
        %3455 = vmatpush.bf16.msra.mxu0 %v2739
        %3456 = vmatpush.bf16.msra.mxu0 %v2738
        %3457 = vmatpush.bf16.msra.mxu0 %v2737
        %3458 = vmatpush.bf16.msra.mxu0 %v2736
        %3459 = vmatpush.bf16.msra.mxu0 %v2735
        %3460 = vmatpush.bf16.msra.mxu0 %v2734
        %3461 = vmatmul.bf16.gmra.mxu0 %v567
        %v3462 = vpop.f32.mrf.mxu0
        %v3463 = vadd.f32 %v3450, %v3462
        %v3464 = vpop.f32.mrf.mxu0
        %3465 = vdwg.mxu0
        %3466 = vmatpush.bf16.msra.mxu0 %v2749
        %3467 = vmatpush.bf16.msra.mxu0 %v2748
        %3468 = vmatpush.bf16.msra.mxu0 %v2747
        %3469 = vmatpush.bf16.msra.mxu0 %v2746
        %3470 = vmatpush.bf16.msra.mxu0 %v2745
        %3471 = vmatpush.bf16.msra.mxu0 %v2744
        %3472 = vmatpush.bf16.msra.mxu0 %v2743
        %3473 = vmatpush.bf16.msra.mxu0 %v2742
        %3474 = vmatmul.bf16.gmra.mxu0 %v568
        %v3475 = vpop.f32.mrf.mxu0
        %v3476 = vadd.f32 %v3463, %v3475
        %v3477 = vpop.f32.mrf.mxu0
        %3478 = vdwg.mxu0
        %3479 = vmatpush.bf16.msra.mxu0 %v2757
        %3480 = vmatpush.bf16.msra.mxu0 %v2756
        %3481 = vmatpush.bf16.msra.mxu0 %v2755
        %3482 = vmatpush.bf16.msra.mxu0 %v2754
        %3483 = vmatpush.bf16.msra.mxu0 %v2753
        %3484 = vmatpush.bf16.msra.mxu0 %v2752
        %3485 = vmatpush.bf16.msra.mxu0 %v2751
        %3486 = vmatpush.bf16.msra.mxu0 %v2750
        %3487 = vmatmul.bf16.gmra.mxu0 %v569
        %v3488 = vpop.f32.mrf.mxu0
        %v3489 = vadd.f32 %v3476, %v3488
        %v3490 = vpop.f32.mrf.mxu0
        %3491 = vdwg.mxu0
        %3492 = vmatpush.bf16.msra.mxu0 %v2765
        %3493 = vmatpush.bf16.msra.mxu0 %v2764
        %3494 = vmatpush.bf16.msra.mxu0 %v2763
        %3495 = vmatpush.bf16.msra.mxu0 %v2762
        %3496 = vmatpush.bf16.msra.mxu0 %v2761
        %3497 = vmatpush.bf16.msra.mxu0 %v2760
        %3498 = vmatpush.bf16.msra.mxu0 %v2759
        %3499 = vmatpush.bf16.msra.mxu0 %v2758
        %3500 = vmatmul.bf16.gmra.mxu0 %v570
        %v3501 = vpop.f32.mrf.mxu0
        %v3502 = vadd.f32 %v3489, %v3501
        %v3503 = vpop.f32.mrf.mxu0
        %3504 = vdwg.mxu0
        %3505 = vmatpush.bf16.msra.mxu0 %v2773
        %3506 = vmatpush.bf16.msra.mxu0 %v2772
        %3507 = vmatpush.bf16.msra.mxu0 %v2771
        %3508 = vmatpush.bf16.msra.mxu0 %v2770
        %3509 = vmatpush.bf16.msra.mxu0 %v2769
        %3510 = vmatpush.bf16.msra.mxu0 %v2768
        %3511 = vmatpush.bf16.msra.mxu0 %v2767
        %3512 = vmatpush.bf16.msra.mxu0 %v2766
        %3513 = vmatmul.bf16.gmra.mxu0 %v571
        %v3514 = vpop.f32.mrf.mxu0
        %v3515 = vadd.f32 %v3502, %v3514
        %v3516 = vpop.f32.mrf.mxu0
        %3517 = vdwg.mxu0
        %3518 = vmatpush.bf16.msra.mxu0 %v2781
        %3519 = vmatpush.bf16.msra.mxu0 %v2780
        %3520 = vmatpush.bf16.msra.mxu0 %v2779
        %3521 = vmatpush.bf16.msra.mxu0 %v2778
        %3522 = vmatpush.bf16.msra.mxu0 %v2777
        %3523 = vmatpush.bf16.msra.mxu0 %v2776
        %3524 = vmatpush.bf16.msra.mxu0 %v2775
        %3525 = vmatpush.bf16.msra.mxu0 %v2774
        %3526 = vmatmul.bf16.gmra.mxu0 %v572
        %v3527 = vpop.f32.mrf.mxu0
        %v3528 = vadd.f32 %v3515, %v3527
        %v3529 = vpop.f32.mrf.mxu0
        %3530 = vdwg.mxu0
        %3531 = vmatpush.bf16.msra.mxu0 %v2789
        %3532 = vmatpush.bf16.msra.mxu0 %v2788
        %3533 = vmatpush.bf16.msra.mxu0 %v2787
        %3534 = vmatpush.bf16.msra.mxu0 %v2786
        %3535 = vmatpush.bf16.msra.mxu0 %v2785
        %3536 = vmatpush.bf16.msra.mxu0 %v2784
        %3537 = vmatpush.bf16.msra.mxu0 %v2783
        %3538 = vmatpush.bf16.msra.mxu0 %v2782
        %3539 = vmatmul.bf16.gmra.mxu0 %v573
        %v3540 = vpop.f32.mrf.mxu0
        %v3541 = vadd.f32 %v3528, %v3540
        %v3542 = vpop.f32.mrf.mxu0
        %3543 = vdwg.mxu0
        %3544 = vmatpush.bf16.msra.mxu0 %v2797
        %3545 = vmatpush.bf16.msra.mxu0 %v2796
        %3546 = vmatpush.bf16.msra.mxu0 %v2795
        %3547 = vmatpush.bf16.msra.mxu0 %v2794
        %3548 = vmatpush.bf16.msra.mxu0 %v2793
        %3549 = vmatpush.bf16.msra.mxu0 %v2792
        %3550 = vmatpush.bf16.msra.mxu0 %v2791
        %3551 = vmatpush.bf16.msra.mxu0 %v2790
        %3552 = vmatmul.bf16.gmra.mxu0 %v574
        %v3553 = vpop.f32.mrf.mxu0
        %v3554 = vadd.f32 %v3541, %v3553
        %v3555 = vpop.f32.mrf.mxu0
        %3556 = vdwg.mxu0
        %3557 = vmatpush.bf16.msra.mxu0 %v2805
        %3558 = vmatpush.bf16.msra.mxu0 %v2804
        %3559 = vmatpush.bf16.msra.mxu0 %v2803
        %3560 = vmatpush.bf16.msra.mxu0 %v2802
        %3561 = vmatpush.bf16.msra.mxu0 %v2801
        %3562 = vmatpush.bf16.msra.mxu0 %v2800
        %3563 = vmatpush.bf16.msra.mxu0 %v2799
        %3564 = vmatpush.bf16.msra.mxu0 %v2798
        %3565 = vmatmul.bf16.gmra.mxu0 %v575
        %v3566 = vpop.f32.mrf.mxu0
        %v3567 = vadd.f32 %v3554, %v3566
        %v3568 = vpop.f32.mrf.mxu0
        %3569 = vdwg.mxu0
        %3570 = vmatpush.bf16.msra.mxu0 %v2813
        %3571 = vmatpush.bf16.msra.mxu0 %v2812
        %3572 = vmatpush.bf16.msra.mxu0 %v2811
        %3573 = vmatpush.bf16.msra.mxu0 %v2810
        %3574 = vmatpush.bf16.msra.mxu0 %v2809
        %3575 = vmatpush.bf16.msra.mxu0 %v2808
        %3576 = vmatpush.bf16.msra.mxu0 %v2807
        %3577 = vmatpush.bf16.msra.mxu0 %v2806
        %3578 = vmatmul.bf16.gmra.mxu0 %v576
        %v3579 = vpop.f32.mrf.mxu0
        %v3580 = vadd.f32 %v3567, %v3579
        %v3581 = vpop.f32.mrf.mxu0
        %3582 = vdwg.mxu0
        %3583 = vmatpush.bf16.msra.mxu0 %v2821
        %3584 = vmatpush.bf16.msra.mxu0 %v2820
        %3585 = vmatpush.bf16.msra.mxu0 %v2819
        %3586 = vmatpush.bf16.msra.mxu0 %v2818
        %3587 = vmatpush.bf16.msra.mxu0 %v2817
        %3588 = vmatpush.bf16.msra.mxu0 %v2816
        %3589 = vmatpush.bf16.msra.mxu0 %v2815
        %3590 = vmatpush.bf16.msra.mxu0 %v2814
        %3591 = vmatmul.bf16.gmra.mxu0 %v577
        %v3592 = vpop.f32.mrf.mxu0
        %v3593 = vadd.f32 %v3580, %v3592
        %v3594 = vpop.f32.mrf.mxu0
        %3595 = vdwg.mxu0
        %3596 = vmatpush.bf16.msra.mxu0 %v2829
        %3597 = vmatpush.bf16.msra.mxu0 %v2828
        %3598 = vmatpush.bf16.msra.mxu0 %v2827
        %3599 = vmatpush.bf16.msra.mxu0 %v2826
        %3600 = vmatpush.bf16.msra.mxu0 %v2825
        %3601 = vmatpush.bf16.msra.mxu0 %v2824
        %3602 = vmatpush.bf16.msra.mxu0 %v2823
        %3603 = vmatpush.bf16.msra.mxu0 %v2822
        %3604 = vmatmul.bf16.gmra.mxu0 %v578
        %v3605 = vpop.f32.mrf.mxu0
        %v3606 = vadd.f32 %v3593, %v3605
        %v3607 = vpop.f32.mrf.mxu0
        %3608 = vdwg.mxu0
        %3609 = vmatpush.bf16.msra.mxu0 %v2837
        %3610 = vmatpush.bf16.msra.mxu0 %v2836
        %3611 = vmatpush.bf16.msra.mxu0 %v2835
        %3612 = vmatpush.bf16.msra.mxu0 %v2834
        %3613 = vmatpush.bf16.msra.mxu0 %v2833
        %3614 = vmatpush.bf16.msra.mxu0 %v2832
        %3615 = vmatpush.bf16.msra.mxu0 %v2831
        %3616 = vmatpush.bf16.msra.mxu0 %v2830
        %3617 = vmatmul.bf16.gmra.mxu0 %v579
        %v3618 = vpop.f32.mrf.mxu0
        %v3619 = vadd.f32 %v3606, %v3618
        %v3620 = vpop.f32.mrf.mxu0
        %3621 = vdwg.mxu0
        %3622 = vmatpush.bf16.msra.mxu0 %v2845
        %3623 = vmatpush.bf16.msra.mxu0 %v2844
        %3624 = vmatpush.bf16.msra.mxu0 %v2843
        %3625 = vmatpush.bf16.msra.mxu0 %v2842
        %3626 = vmatpush.bf16.msra.mxu0 %v2841
        %3627 = vmatpush.bf16.msra.mxu0 %v2840
        %3628 = vmatpush.bf16.msra.mxu0 %v2839
        %3629 = vmatpush.bf16.msra.mxu0 %v2838
        %3630 = vmatmul.bf16.gmra.mxu0 %v580
        %v3631 = vpop.f32.mrf.mxu0
        %v3632 = vadd.f32 %v3619, %v3631
        %v3633 = vpop.f32.mrf.mxu0
        %3634 = vdwg.mxu0
        %3635 = vmatpush.bf16.msra.mxu0 %v2853
        %3636 = vmatpush.bf16.msra.mxu0 %v2852
        %3637 = vmatpush.bf16.msra.mxu0 %v2851
        %3638 = vmatpush.bf16.msra.mxu0 %v2850
        %3639 = vmatpush.bf16.msra.mxu0 %v2849
        %3640 = vmatpush.bf16.msra.mxu0 %v2848
        %3641 = vmatpush.bf16.msra.mxu0 %v2847
        %3642 = vmatpush.bf16.msra.mxu0 %v2846
        %3643 = vmatmul.bf16.gmra.mxu0 %v581
        %v3644 = vpop.f32.mrf.mxu0
        %v3645 = vadd.f32 %v3632, %v3644
        %v3646 = vpop.f32.mrf.mxu0
        %3647 = vdwg.mxu0
        %3648 = vmatpush.bf16.msra.mxu0 %v2861
        %3649 = vmatpush.bf16.msra.mxu0 %v2860
        %3650 = vmatpush.bf16.msra.mxu0 %v2859
        %3651 = vmatpush.bf16.msra.mxu0 %v2858
        %3652 = vmatpush.bf16.msra.mxu0 %v2857
        %3653 = vmatpush.bf16.msra.mxu0 %v2856
        %3654 = vmatpush.bf16.msra.mxu0 %v2855
        %3655 = vmatpush.bf16.msra.mxu0 %v2854
        %3656 = vmatmul.bf16.gmra.mxu0 %v582
        %v3657 = vpop.f32.mrf.mxu0
        %v3658 = vadd.f32 %v3645, %v3657
        %v3659 = vpop.f32.mrf.mxu0
        %3660 = vdwg.mxu0
        %3661 = vmatpush.bf16.msra.mxu0 %v2869
        %3662 = vmatpush.bf16.msra.mxu0 %v2868
        %3663 = vmatpush.bf16.msra.mxu0 %v2867
        %3664 = vmatpush.bf16.msra.mxu0 %v2866
        %3665 = vmatpush.bf16.msra.mxu0 %v2865
        %3666 = vmatpush.bf16.msra.mxu0 %v2864
        %3667 = vmatpush.bf16.msra.mxu0 %v2863
        %3668 = vmatpush.bf16.msra.mxu0 %v2862
        %3669 = vmatmul.bf16.gmra.mxu0 %v583
        %v3670 = vpop.f32.mrf.mxu0
        %v3671 = vadd.f32 %v3658, %v3670
        %v3672 = vpop.f32.mrf.mxu0
        %3673 = vdwg.mxu0
        %3674 = vmatpush.bf16.msra.mxu0 %v2877
        %3675 = vmatpush.bf16.msra.mxu0 %v2876
        %3676 = vmatpush.bf16.msra.mxu0 %v2875
        %3677 = vmatpush.bf16.msra.mxu0 %v2874
        %3678 = vmatpush.bf16.msra.mxu0 %v2873
        %3679 = vmatpush.bf16.msra.mxu0 %v2872
        %3680 = vmatpush.bf16.msra.mxu0 %v2871
        %3681 = vmatpush.bf16.msra.mxu0 %v2870
        %3682 = vmatmul.bf16.gmra.mxu0 %v584
        %v3683 = vpop.f32.mrf.mxu0
        %v3684 = vadd.f32 %v3671, %v3683
        %v3685 = vpop.f32.mrf.mxu0
        %3686 = vdwg.mxu0
        %3687 = vmatpush.bf16.msra.mxu0 %v2885
        %3688 = vmatpush.bf16.msra.mxu0 %v2884
        %3689 = vmatpush.bf16.msra.mxu0 %v2883
        %3690 = vmatpush.bf16.msra.mxu0 %v2882
        %3691 = vmatpush.bf16.msra.mxu0 %v2881
        %3692 = vmatpush.bf16.msra.mxu0 %v2880
        %3693 = vmatpush.bf16.msra.mxu0 %v2879
        %3694 = vmatpush.bf16.msra.mxu0 %v2878
        %3695 = vmatmul.bf16.gmra.mxu0 %v585
        %v3696 = vpop.f32.mrf.mxu0
        %v3697 = vadd.f32 %v3684, %v3696
        %v3698 = vpop.f32.mrf.mxu0
        %3699 = vdwg.mxu0
        %3700 = vmatpush.bf16.msra.mxu0 %v2893
        %3701 = vmatpush.bf16.msra.mxu0 %v2892
        %3702 = vmatpush.bf16.msra.mxu0 %v2891
        %3703 = vmatpush.bf16.msra.mxu0 %v2890
        %3704 = vmatpush.bf16.msra.mxu0 %v2889
        %3705 = vmatpush.bf16.msra.mxu0 %v2888
        %3706 = vmatpush.bf16.msra.mxu0 %v2887
        %3707 = vmatpush.bf16.msra.mxu0 %v2886
        %3708 = vmatmul.bf16.gmra.mxu0 %v586
        %v3709 = vpop.f32.mrf.mxu0
        %v3710 = vadd.f32 %v3697, %v3709
        %v3711 = vpop.f32.mrf.mxu0
        %3712 = vdwg.mxu0
        %3713 = vmatpush.bf16.msra.mxu0 %v2901
        %3714 = vmatpush.bf16.msra.mxu0 %v2900
        %3715 = vmatpush.bf16.msra.mxu0 %v2899
        %3716 = vmatpush.bf16.msra.mxu0 %v2898
        %3717 = vmatpush.bf16.msra.mxu0 %v2897
        %3718 = vmatpush.bf16.msra.mxu0 %v2896
        %3719 = vmatpush.bf16.msra.mxu0 %v2895
        %3720 = vmatpush.bf16.msra.mxu0 %v2894
        %3721 = vmatmul.bf16.gmra.mxu0 %v587
        %v3722 = vpop.f32.mrf.mxu0
        %v3723 = vadd.f32 %v3710, %v3722
        %v3724 = vpop.f32.mrf.mxu0
        %3725 = vdwg.mxu0
        %3726 = vmatpush.bf16.msra.mxu0 %v2909
        %3727 = vmatpush.bf16.msra.mxu0 %v2908
        %3728 = vmatpush.bf16.msra.mxu0 %v2907
        %3729 = vmatpush.bf16.msra.mxu0 %v2906
        %3730 = vmatpush.bf16.msra.mxu0 %v2905
        %3731 = vmatpush.bf16.msra.mxu0 %v2904
        %3732 = vmatpush.bf16.msra.mxu0 %v2903
        %3733 = vmatpush.bf16.msra.mxu0 %v2902
        %3734 = vmatmul.bf16.gmra.mxu0 %v588
        %v3735 = vpop.f32.mrf.mxu0
        %v3736 = vadd.f32 %v3723, %v3735
        %v3737 = vpop.f32.mrf.mxu0
        %3738 = vdwg.mxu0
        %3739 = vmatpush.bf16.msra.mxu0 %v2917
        %3740 = vmatpush.bf16.msra.mxu0 %v2916
        %3741 = vmatpush.bf16.msra.mxu0 %v2915
        %3742 = vmatpush.bf16.msra.mxu0 %v2914
        %3743 = vmatpush.bf16.msra.mxu0 %v2913
        %3744 = vmatpush.bf16.msra.mxu0 %v2912
        %3745 = vmatpush.bf16.msra.mxu0 %v2911
        %3746 = vmatpush.bf16.msra.mxu0 %v2910
        %3747 = vmatmul.bf16.gmra.mxu0 %v589
        %v3748 = vpop.f32.mrf.mxu0
        %v3749 = vadd.f32 %v3736, %v3748
        %v3750 = vpop.f32.mrf.mxu0
        %3751 = vdwg.mxu0
        %3752 = vmatpush.bf16.msra.mxu0 %v2925
        %3753 = vmatpush.bf16.msra.mxu0 %v2924
        %3754 = vmatpush.bf16.msra.mxu0 %v2923
        %3755 = vmatpush.bf16.msra.mxu0 %v2922
        %3756 = vmatpush.bf16.msra.mxu0 %v2921
        %3757 = vmatpush.bf16.msra.mxu0 %v2920
        %3758 = vmatpush.bf16.msra.mxu0 %v2919
        %3759 = vmatpush.bf16.msra.mxu0 %v2918
        %3760 = vmatmul.bf16.gmra.mxu0 %v590
        %v3761 = vpop.f32.mrf.mxu0
        %v3762 = vadd.f32 %v3749, %v3761
        %v3763 = vpop.f32.mrf.mxu0
        %3764 = vdwg.mxu0
        %3765 = vmatpush.bf16.msra.mxu0 %v2933
        %3766 = vmatpush.bf16.msra.mxu0 %v2932
        %3767 = vmatpush.bf16.msra.mxu0 %v2931
        %3768 = vmatpush.bf16.msra.mxu0 %v2930
        %3769 = vmatpush.bf16.msra.mxu0 %v2929
        %3770 = vmatpush.bf16.msra.mxu0 %v2928
        %3771 = vmatpush.bf16.msra.mxu0 %v2927
        %3772 = vmatpush.bf16.msra.mxu0 %v2926
        %3773 = vmatmul.bf16.gmra.mxu0 %v591
        %v3774 = vpop.f32.mrf.mxu0
        %v3775 = vadd.f32 %v3762, %v3774
        %v3776 = vpop.f32.mrf.mxu0
        %3777 = vdwg.mxu0
        %3778 = vmatpush.bf16.msra.mxu0 %v2941
        %3779 = vmatpush.bf16.msra.mxu0 %v2940
        %3780 = vmatpush.bf16.msra.mxu0 %v2939
        %3781 = vmatpush.bf16.msra.mxu0 %v2938
        %3782 = vmatpush.bf16.msra.mxu0 %v2937
        %3783 = vmatpush.bf16.msra.mxu0 %v2936
        %3784 = vmatpush.bf16.msra.mxu0 %v2935
        %3785 = vmatpush.bf16.msra.mxu0 %v2934
        %3786 = vmatmul.bf16.gmra.mxu0 %v592
        %v3787 = vpop.f32.mrf.mxu0
        %v3788 = vadd.f32 %v3775, %v3787
        %v3789 = vpop.f32.mrf.mxu0
        %3790 = vdwg.mxu0
        %3791 = vmatpush.bf16.msra.mxu0 %v2949
        %3792 = vmatpush.bf16.msra.mxu0 %v2948
        %3793 = vmatpush.bf16.msra.mxu0 %v2947
        %3794 = vmatpush.bf16.msra.mxu0 %v2946
        %3795 = vmatpush.bf16.msra.mxu0 %v2945
        %3796 = vmatpush.bf16.msra.mxu0 %v2944
        %3797 = vmatpush.bf16.msra.mxu0 %v2943
        %3798 = vmatpush.bf16.msra.mxu0 %v2942
        %3799 = vmatmul.bf16.gmra.mxu0 %v593
        %v3800 = vpop.f32.mrf.mxu0
        %v3801 = vadd.f32 %v3788, %v3800
        %v3802 = vpop.f32.mrf.mxu0
        %3803 = vdwg.mxu0
        %3804 = vmatpush.bf16.msra.mxu0 %v2957
        %3805 = vmatpush.bf16.msra.mxu0 %v2956
        %3806 = vmatpush.bf16.msra.mxu0 %v2955
        %3807 = vmatpush.bf16.msra.mxu0 %v2954
        %3808 = vmatpush.bf16.msra.mxu0 %v2953
        %3809 = vmatpush.bf16.msra.mxu0 %v2952
        %3810 = vmatpush.bf16.msra.mxu0 %v2951
        %3811 = vmatpush.bf16.msra.mxu0 %v2950
        %3812 = vmatmul.bf16.gmra.mxu0 %v594
        %v3813 = vpop.f32.mrf.mxu0
        %v3814 = vadd.f32 %v3801, %v3813
        %v3815 = vpop.f32.mrf.mxu0
        %3816 = vdwg.mxu0
        %3817 = vmatpush.bf16.msra.mxu0 %v2965
        %3818 = vmatpush.bf16.msra.mxu0 %v2964
        %3819 = vmatpush.bf16.msra.mxu0 %v2963
        %3820 = vmatpush.bf16.msra.mxu0 %v2962
        %3821 = vmatpush.bf16.msra.mxu0 %v2961
        %3822 = vmatpush.bf16.msra.mxu0 %v2960
        %3823 = vmatpush.bf16.msra.mxu0 %v2959
        %3824 = vmatpush.bf16.msra.mxu0 %v2958
        %3825 = vmatmul.bf16.gmra.mxu0 %v595
        %v3826 = vpop.f32.mrf.mxu0
        %v3827 = vadd.f32 %v3814, %v3826
        %v3828 = vpop.f32.mrf.mxu0
        %3829 = vdwg.mxu0
        %3830 = vmatpush.bf16.msra.mxu0 %v2973
        %3831 = vmatpush.bf16.msra.mxu0 %v2972
        %3832 = vmatpush.bf16.msra.mxu0 %v2971
        %3833 = vmatpush.bf16.msra.mxu0 %v2970
        %3834 = vmatpush.bf16.msra.mxu0 %v2969
        %3835 = vmatpush.bf16.msra.mxu0 %v2968
        %3836 = vmatpush.bf16.msra.mxu0 %v2967
        %3837 = vmatpush.bf16.msra.mxu0 %v2966
        %3838 = vmatmul.bf16.gmra.mxu0 %v596
        %v3839 = vpop.f32.mrf.mxu0
        %v3840 = vadd.f32 %v3827, %v3839
        %v3841 = vpop.f32.mrf.mxu0
        %3842 = vdwg.mxu0
        %3843 = vmatpush.bf16.msra.mxu0 %v2981
        %3844 = vmatpush.bf16.msra.mxu0 %v2980
        %3845 = vmatpush.bf16.msra.mxu0 %v2979
        %3846 = vmatpush.bf16.msra.mxu0 %v2978
        %3847 = vmatpush.bf16.msra.mxu0 %v2977
        %3848 = vmatpush.bf16.msra.mxu0 %v2976
        %3849 = vmatpush.bf16.msra.mxu0 %v2975
        %3850 = vmatpush.bf16.msra.mxu0 %v2974
        %3851 = vmatmul.bf16.gmra.mxu0 %v597
        %v3852 = vpop.f32.mrf.mxu0
        %v3853 = vadd.f32 %v3840, %v3852
        %v3854 = vpop.f32.mrf.mxu0
        %3855 = vdwg.mxu0
        %3856 = vmatpush.bf16.msra.mxu0 %v2989
        %3857 = vmatpush.bf16.msra.mxu0 %v2988
        %3858 = vmatpush.bf16.msra.mxu0 %v2987
        %3859 = vmatpush.bf16.msra.mxu0 %v2986
        %3860 = vmatpush.bf16.msra.mxu0 %v2985
        %3861 = vmatpush.bf16.msra.mxu0 %v2984
        %3862 = vmatpush.bf16.msra.mxu0 %v2983
        %3863 = vmatpush.bf16.msra.mxu0 %v2982
        %3864 = vmatmul.bf16.gmra.mxu0 %v598
        %v3865 = vpop.f32.mrf.mxu0
        %v3866 = vadd.f32 %v3853, %v3865
        %v3867 = vpop.f32.mrf.mxu0
        %3868 = vdwg.mxu0
        %3869 = vmatpush.bf16.msra.mxu0 %v2997
        %3870 = vmatpush.bf16.msra.mxu0 %v2996
        %3871 = vmatpush.bf16.msra.mxu0 %v2995
        %3872 = vmatpush.bf16.msra.mxu0 %v2994
        %3873 = vmatpush.bf16.msra.mxu0 %v2993
        %3874 = vmatpush.bf16.msra.mxu0 %v2992
        %3875 = vmatpush.bf16.msra.mxu0 %v2991
        %3876 = vmatpush.bf16.msra.mxu0 %v2990
        %3877 = vmatmul.bf16.gmra.mxu0 %v599
        %v3878 = vpop.f32.mrf.mxu0
        %v3879 = vadd.f32 %v3866, %v3878
        %v3880 = vpop.f32.mrf.mxu0
        %3881 = vdwg.mxu0
        %3882 = vmatpush.bf16.msra.mxu0 %v3005
        %3883 = vmatpush.bf16.msra.mxu0 %v3004
        %3884 = vmatpush.bf16.msra.mxu0 %v3003
        %3885 = vmatpush.bf16.msra.mxu0 %v3002
        %3886 = vmatpush.bf16.msra.mxu0 %v3001
        %3887 = vmatpush.bf16.msra.mxu0 %v3000
        %3888 = vmatpush.bf16.msra.mxu0 %v2999
        %3889 = vmatpush.bf16.msra.mxu0 %v2998
        %3890 = vmatmul.bf16.gmra.mxu0 %v600
        %v3891 = vpop.f32.mrf.mxu0
        %v3892 = vadd.f32 %v3879, %v3891
        %v3893 = vpop.f32.mrf.mxu0
        %3894 = vdwg.mxu0
        %3895 = vmatpush.bf16.msra.mxu0 %v3013
        %3896 = vmatpush.bf16.msra.mxu0 %v3012
        %3897 = vmatpush.bf16.msra.mxu0 %v3011
        %3898 = vmatpush.bf16.msra.mxu0 %v3010
        %3899 = vmatpush.bf16.msra.mxu0 %v3009
        %3900 = vmatpush.bf16.msra.mxu0 %v3008
        %3901 = vmatpush.bf16.msra.mxu0 %v3007
        %3902 = vmatpush.bf16.msra.mxu0 %v3006
        %3903 = vmatmul.bf16.gmra.mxu0 %v601
        %v3904 = vpop.f32.mrf.mxu0
        %v3905 = vadd.f32 %v3892, %v3904
        %v3906 = vpop.f32.mrf.mxu0
        %3907 = vdwg.mxu0
        %3908 = vmatpush.bf16.msra.mxu0 %v3021
        %3909 = vmatpush.bf16.msra.mxu0 %v3020
        %3910 = vmatpush.bf16.msra.mxu0 %v3019
        %3911 = vmatpush.bf16.msra.mxu0 %v3018
        %3912 = vmatpush.bf16.msra.mxu0 %v3017
        %3913 = vmatpush.bf16.msra.mxu0 %v3016
        %3914 = vmatpush.bf16.msra.mxu0 %v3015
        %3915 = vmatpush.bf16.msra.mxu0 %v3014
        %3916 = vmatmul.bf16.gmra.mxu0 %v602
        %v3917 = vpop.f32.mrf.mxu0
        %v3918 = vadd.f32 %v3905, %v3917
        %v3919 = vpop.f32.mrf.mxu0
        %3920 = vdwg.mxu0
        %3921 = vmatpush.bf16.msra.mxu0 %v3029
        %3922 = vmatpush.bf16.msra.mxu0 %v3028
        %3923 = vmatpush.bf16.msra.mxu0 %v3027
        %3924 = vmatpush.bf16.msra.mxu0 %v3026
        %3925 = vmatpush.bf16.msra.mxu0 %v3025
        %3926 = vmatpush.bf16.msra.mxu0 %v3024
        %3927 = vmatpush.bf16.msra.mxu0 %v3023
        %3928 = vmatpush.bf16.msra.mxu0 %v3022
        %3929 = vmatmul.bf16.gmra.mxu0 %v603
        %v3930 = vpop.f32.mrf.mxu0
        %v3931 = vadd.f32 %v3918, %v3930
        %v3932 = vpop.f32.mrf.mxu0
        %3933 = vdwg.mxu0
        %3934 = vmatpush.bf16.msra.mxu0 %v3037
        %3935 = vmatpush.bf16.msra.mxu0 %v3036
        %3936 = vmatpush.bf16.msra.mxu0 %v3035
        %3937 = vmatpush.bf16.msra.mxu0 %v3034
        %3938 = vmatpush.bf16.msra.mxu0 %v3033
        %3939 = vmatpush.bf16.msra.mxu0 %v3032
        %3940 = vmatpush.bf16.msra.mxu0 %v3031
        %3941 = vmatpush.bf16.msra.mxu0 %v3030
        %3942 = vmatmul.bf16.gmra.mxu0 %v604
        %v3943 = vpop.f32.mrf.mxu0
        %v3944 = vadd.f32 %v3931, %v3943
        %v3945 = vpop.f32.mrf.mxu0
        %3946 = vdwg.mxu0
        %3947 = vmatpush.bf16.msra.mxu0 %v3045
        %3948 = vmatpush.bf16.msra.mxu0 %v3044
        %3949 = vmatpush.bf16.msra.mxu0 %v3043
        %3950 = vmatpush.bf16.msra.mxu0 %v3042
        %3951 = vmatpush.bf16.msra.mxu0 %v3041
        %3952 = vmatpush.bf16.msra.mxu0 %v3040
        %3953 = vmatpush.bf16.msra.mxu0 %v3039
        %3954 = vmatpush.bf16.msra.mxu0 %v3038
        %3955 = vmatmul.bf16.gmra.mxu0 %v605
        %v3956 = vpop.f32.mrf.mxu0
        %v3957 = vadd.f32 %v3944, %v3956
        %v3958 = vpop.f32.mrf.mxu0
        %3959 = vdwg.mxu0
        %3960 = vmatpush.bf16.msra.mxu0 %v3053
        %3961 = vmatpush.bf16.msra.mxu0 %v3052
        %3962 = vmatpush.bf16.msra.mxu0 %v3051
        %3963 = vmatpush.bf16.msra.mxu0 %v3050
        %3964 = vmatpush.bf16.msra.mxu0 %v3049
        %3965 = vmatpush.bf16.msra.mxu0 %v3048
        %3966 = vmatpush.bf16.msra.mxu0 %v3047
        %3967 = vmatpush.bf16.msra.mxu0 %v3046
        %3968 = vmatmul.bf16.gmra.mxu0 %v606
        %v3969 = vpop.f32.mrf.mxu0
        %v3970 = vadd.f32 %v3957, %v3969
        %v3971 = vpop.f32.mrf.mxu0
        %3972 = vdwg.mxu0
        %3973 = vmatpush.bf16.msra.mxu0 %v3061
        %3974 = vmatpush.bf16.msra.mxu0 %v3060
        %3975 = vmatpush.bf16.msra.mxu0 %v3059
        %3976 = vmatpush.bf16.msra.mxu0 %v3058
        %3977 = vmatpush.bf16.msra.mxu0 %v3057
        %3978 = vmatpush.bf16.msra.mxu0 %v3056
        %3979 = vmatpush.bf16.msra.mxu0 %v3055
        %3980 = vmatpush.bf16.msra.mxu0 %v3054
        %3981 = vmatmul.bf16.gmra.mxu0 %v607
        %v3982 = vpop.f32.mrf.mxu0
        %v3983 = vadd.f32 %v3970, %v3982
        %v3984 = vpop.f32.mrf.mxu0
        %3985 = vdwg.mxu0
        %3986 = vmatpush.bf16.msra.mxu0 %v3069
        %3987 = vmatpush.bf16.msra.mxu0 %v3068
        %3988 = vmatpush.bf16.msra.mxu0 %v3067
        %3989 = vmatpush.bf16.msra.mxu0 %v3066
        %3990 = vmatpush.bf16.msra.mxu0 %v3065
        %3991 = vmatpush.bf16.msra.mxu0 %v3064
        %3992 = vmatpush.bf16.msra.mxu0 %v3063
        %3993 = vmatpush.bf16.msra.mxu0 %v3062
        %3994 = vmatmul.bf16.gmra.mxu0 %v608
        %v3995 = vpop.f32.mrf.mxu0
        %v3996 = vadd.f32 %v3983, %v3995
        %v3997 = vpop.f32.mrf.mxu0
        %3998 = vdwg.mxu0
        %3999 = vmatpush.bf16.msra.mxu0 %v3438
        %4000 = vmatpush.bf16.msra.mxu0 %v3076
        %4001 = vmatpush.bf16.msra.mxu0 %v3075
        %4002 = vmatpush.bf16.msra.mxu0 %v3074
        %4003 = vmatpush.bf16.msra.mxu0 %v3073
        %4004 = vmatpush.bf16.msra.mxu0 %v3072
        %4005 = vmatpush.bf16.msra.mxu0 %v3071
        %4006 = vmatpush.bf16.msra.mxu0 %v3070
        %4007 = vmatmul.bf16.gmra.mxu0 %v3431
        %v4008 = vpop.f32.mrf.mxu0
        %v4009 = vadd.f32 %v3996, %v4008
        %v4010 = vpop.f32.mrf.mxu0
        %4011 = vdwg.mxu0
        %v4012 = vmax.f32 %v4009, 0.0
        %v4013 = vld [vmem:[%s4] sm:$0xff]
        %v4014 = vld [vmem:[%s4 + $0x8] sm:$0xff]
        %v4015 = vld [vmem:[%s4 + $0x10] sm:$0xff]
        %v4016 = vld [vmem:[%s4 + $0x18] sm:$0xff]
        %v4017 = vld [vmem:[%s4 + $0x20] sm:$0xff]
        %v4018 = vld [vmem:[%s4 + $0x28] sm:$0xff]
        %v4019 = vld [vmem:[%s4 + $0x30] sm:$0xff]
        %v4020 = vld [vmem:[%s4 + $0x38] sm:$0xff]
        %v4021 = vld [vmem:[%s5] sm:$0x1]
        %v4023 = vperm.slane %v4021, 0
        %vm4025 = vcmask 523264
        %v4027 = vsel %vm4025, %v4012, 0
        %4029 = vmatpush.msra.mxu0 0.0
        %4030 = vmatpush.msra.mxu0 0.0
        %4031 = vmatpush.msra.mxu0 0.0
        %4032 = vmatpush.msra.mxu0 0.0
        %4033 = vmatpush.msra.mxu0 0.0
        %4034 = vmatpush.msra.mxu0 0.0
        %4035 = vmatpush.msra.mxu0 0.0
        %4036 = vmatpush.msra.mxu0 0.0
        %4037 = vmatpush.msra.mxu0 %v4020
        %4038 = vmatpush.msra.mxu0 %v4019
        %4039 = vmatpush.msra.mxu0 %v4018
        %4040 = vmatpush.msra.mxu0 %v4017
        %4041 = vmatpush.msra.mxu0 %v4016
        %4042 = vmatpush.msra.mxu0 %v4015
        %4043 = vmatpush.msra.mxu0 %v4014
        %4044 = vmatpush.msra.mxu0 %v4013
        %4045 = vmatmul.f32.gmra.mxu0 %v4027
        %v4046 = vpop.f32.mrf.mxu0
        %v4047 = vadd.f32 %v4023, %v4046
        %4048 = vdwg.mxu0
        %v4049 = vmax.f32 %v4047, 0.0
        %v4050 = vld [vmem:[%s6] sm:$0xff]
        %v4051 = vld [vmem:[%s6 + $0x8] sm:$0xff]
        %v4052 = vld [vmem:[%s6 + $0x10] sm:$0xff]
        %v4053 = vld [vmem:[%s6 + $0x18] sm:$0xff]
        %v4054 = vld [vmem:[%s7] sm:$0x1]
        %v4056 = vperm.slane %v4054, 0
        %vm4058 = vcmask 261120
        %v4060 = vsel %vm4058, %v4049, 0
        %4062 = vmatpush.msra.mxu0 0.0
        %4063 = vmatpush.msra.mxu0 0.0
        %4064 = vmatpush.msra.mxu0 0.0
        %4065 = vmatpush.msra.mxu0 0.0
        %4066 = vmatpush.msra.mxu0 0.0
        %4067 = vmatpush.msra.mxu0 0.0
        %4068 = vmatpush.msra.mxu0 0.0
        %4069 = vmatpush.msra.mxu0 0.0
        %4070 = vmatpush.msra.mxu0 0.0
        %4071 = vmatpush.msra.mxu0 0.0
        %4072 = vmatpush.msra.mxu0 0.0
        %4073 = vmatpush.msra.mxu0 0.0
        %4074 = vmatpush.msra.mxu0 %v4053
        %4075 = vmatpush.msra.mxu0 %v4052
        %4076 = vmatpush.msra.mxu0 %v4051
        %4077 = vmatpush.msra.mxu0 %v4050
        %4078 = vmatmul.f32.gmra.mxu0 %v4060
        %v4079 = vpop.f32.mrf.mxu0
        %v4080 = vadd.f32 %v4056, %v4079
        %4081 = vdwg.mxu0
        %vm4082 = vcmask 130048
        %4083 = vst.msk [vmem:[%s520] sm:$0xff] %vm4082, %v4080
        %v4084 = vld [vmem:[%s516] sm:$0xff]
        %v4085 = vmul.f32 %v4080, 0.5
        %v4086 = vmul.f32 %v4085, 1.442695
        %v4087 = vpow.pop %v4086
        %4089 = vrot.lane.b32.xlu0 %v4087, 120
        %v4090 = vpop.permute.xlu0 %4089
        %v4092 = vmul.f32 %v4084, %v4090
        %v4093 = vadd.f32 %v4092, %v4080
        %v4094 = vld [vmem:[%s8] sm:$0xff]
        %v4095 = vld [vmem:[%s9] sm:$0x1]
        %v4097 = vperm.slane %v4095, 0
        %vm4099 = vcmask 64512
        %v4101 = vsel %vm4099, %v4093, 0
        %4103 = vmatpush.msra.mxu0 0.0
        %4104 = vmatpush.msra.mxu0 0.0
        %4105 = vmatpush.msra.mxu0 0.0
        %4106 = vmatpush.msra.mxu0 0.0
        %4107 = vmatpush.msra.mxu0 0.0
        %4108 = vmatpush.msra.mxu0 0.0
        %4109 = vmatpush.msra.mxu0 0.0
        %4110 = vmatpush.msra.mxu0 0.0
        %4111 = vmatpush.msra.mxu0 0.0
        %4112 = vmatpush.msra.mxu0 0.0
        %4113 = vmatpush.msra.mxu0 0.0
        %4114 = vmatpush.msra.mxu0 0.0
        %4115 = vmatpush.msra.mxu0 0.0
        %4116 = vmatpush.msra.mxu0 0.0
        %4117 = vmatpush.msra.mxu0 0.0
        %4118 = vmatpush.msra.mxu0 %v4094
        %4119 = vmatmul.f32.gmra.mxu0 %v4101
        %v4120 = vpop.f32.mrf.mxu0
        %v4121 = vadd.f32 %v4097, %v4120
        %4122 = vdwg.mxu0
        %v4123 = vmax.f32 %v4121, 0.0
        %v4124 = vld [vmem:[%s10] sm:$0xff]
        %v4125 = vld [vmem:[%s10 + $0x8] sm:$0xff]
        %v4126 = vld [vmem:[%s10 + $0x10] sm:$0xff]
        %v4127 = vld [vmem:[%s10 + $0x18] sm:$0xff]
        %v4128 = vld [vmem:[%s11] sm:$0x1]
        %v4130 = vperm.slane %v4128, 0
        %v4133 = vsel %vm4058, %v4123, 0
        %4135 = vmatpush.msra.mxu0 0.0
        %4136 = vmatpush.msra.mxu0 0.0
        %4137 = vmatpush.msra.mxu0 0.0
        %4138 = vmatpush.msra.mxu0 0.0
        %4139 = vmatpush.msra.mxu0 0.0
        %4140 = vmatpush.msra.mxu0 0.0
        %4141 = vmatpush.msra.mxu0 0.0
        %4142 = vmatpush.msra.mxu0 0.0
        %4143 = vmatpush.msra.mxu0 0.0
        %4144 = vmatpush.msra.mxu0 0.0
        %4145 = vmatpush.msra.mxu0 0.0
        %4146 = vmatpush.msra.mxu0 0.0
        %4147 = vmatpush.msra.mxu0 %v4127
        %4148 = vmatpush.msra.mxu0 %v4126
        %4149 = vmatpush.msra.mxu0 %v4125
        %4150 = vmatpush.msra.mxu0 %v4124
        %4151 = vmatmul.f32.gmra.mxu0 %v4133
        %v4152 = vpop.f32.mrf.mxu0
        %v4153 = vadd.f32 %v4130, %v4152
        %4154 = vdwg.mxu0
        %v4155 = vmax.f32 %v4153, 0.0
        %v4156 = vpack.c.bf16 %v4155, %v4155
        %v4157 = vld [vmem:[%s12] sm:$0xff]
        %v4158 = vld [vmem:[%s12 + $0x8] sm:$0xff]
        %v4159 = vld [vmem:[%s12 + $0x10] sm:$0xff]
        %v4160 = vld [vmem:[%s12 + $0x18] sm:$0xff]
        %v4161 = vld [vmem:[%s12 + $0x20] sm:$0xff]
        %v4162 = vld [vmem:[%s12 + $0x28] sm:$0xff]
        %v4163 = vld [vmem:[%s12 + $0x30] sm:$0xff]
        %v4164 = vld [vmem:[%s12 + $0x38] sm:$0xf]
        %v4165 = vld [vmem:[%s12 + $0xb4] sm:$0xff]
        %v4166 = vld [vmem:[%s12 + $0xbc] sm:$0xff]
        %v4167 = vld [vmem:[%s12 + $0xc4] sm:$0xff]
        %v4168 = vld [vmem:[%s12 + $0xcc] sm:$0xff]
        %v4169 = vld [vmem:[%s12 + $0xd4] sm:$0xff]
        %v4170 = vld [vmem:[%s12 + $0xdc] sm:$0xff]
        %v4171 = vld [vmem:[%s12 + $0xe4] sm:$0xff]
        %v4172 = vld [vmem:[%s12 + $0xec] sm:$0xf]
        %v4173 = vld [vmem:[%s12 + $0x168] sm:$0xff]
        %v4174 = vld [vmem:[%s12 + $0x170] sm:$0xff]
        %v4175 = vld [vmem:[%s12 + $0x178] sm:$0xff]
        %v4176 = vld [vmem:[%s12 + $0x180] sm:$0xff]
        %v4177 = vld [vmem:[%s12 + $0x188] sm:$0xff]
        %v4178 = vld [vmem:[%s12 + $0x190] sm:$0xff]
        %v4179 = vld [vmem:[%s12 + $0x198] sm:$0xff]
        %v4180 = vld [vmem:[%s12 + $0x1a0] sm:$0xf]
        %v4181 = vld [vmem:[%s12 + $0x21c] sm:$0xff]
        %v4182 = vld [vmem:[%s12 + $0x224] sm:$0xff]
        %v4183 = vld [vmem:[%s12 + $0x22c] sm:$0xff]
        %v4184 = vld [vmem:[%s12 + $0x234] sm:$0xff]
        %v4185 = vld [vmem:[%s12 + $0x23c] sm:$0xff]
        %v4186 = vld [vmem:[%s12 + $0x244] sm:$0xff]
        %v4187 = vld [vmem:[%s12 + $0x24c] sm:$0xff]
        %v4188 = vld [vmem:[%s12 + $0x254] sm:$0xf]
        %v4189 = vld [vmem:[%s12 + $0x2d0] sm:$0xff]
        %v4190 = vld [vmem:[%s12 + $0x2d8] sm:$0xff]
        %v4191 = vld [vmem:[%s12 + $0x2e0] sm:$0xff]
        %v4192 = vld [vmem:[%s12 + $0x2e8] sm:$0xff]
        %v4193 = vld [vmem:[%s12 + $0x2f0] sm:$0xff]
        %v4194 = vld [vmem:[%s12 + $0x2f8] sm:$0xff]
        %v4195 = vld [vmem:[%s12 + $0x300] sm:$0xff]
        %v4196 = vld [vmem:[%s12 + $0x308] sm:$0xf]
        %v4197 = vld [vmem:[%s12 + $0x384] sm:$0xff]
        %v4198 = vld [vmem:[%s12 + $0x38c] sm:$0xff]
        %v4199 = vld [vmem:[%s12 + $0x394] sm:$0xff]
        %v4200 = vld [vmem:[%s12 + $0x39c] sm:$0xff]
        %v4201 = vld [vmem:[%s12 + $0x3a4] sm:$0xff]
        %v4202 = vld [vmem:[%s12 + $0x3ac] sm:$0xff]
        %v4203 = vld [vmem:[%s12 + $0x3b4] sm:$0xff]
        %v4204 = vld [vmem:[%s12 + $0x3bc] sm:$0xf]
        %v4205 = vld [vmem:[%s12 + $0x438] sm:$0xff]
        %v4206 = vld [vmem:[%s12 + $0x440] sm:$0xff]
        %v4207 = vld [vmem:[%s12 + $0x448] sm:$0xff]
        %v4208 = vld [vmem:[%s12 + $0x450] sm:$0xff]
        %v4209 = vld [vmem:[%s12 + $0x458] sm:$0xff]
        %v4210 = vld [vmem:[%s12 + $0x460] sm:$0xff]
        %v4211 = vld [vmem:[%s12 + $0x468] sm:$0xff]
        %v4212 = vld [vmem:[%s12 + $0x470] sm:$0xf]
        %v4213 = vld [vmem:[%s12 + $0x4ec] sm:$0xff]
        %v4214 = vld [vmem:[%s12 + $0x4f4] sm:$0xff]
        %v4215 = vld [vmem:[%s12 + $0x4fc] sm:$0xff]
        %v4216 = vld [vmem:[%s12 + $0x504] sm:$0xff]
        %v4217 = vld [vmem:[%s12 + $0x50c] sm:$0xff]
        %v4218 = vld [vmem:[%s12 + $0x514] sm:$0xff]
        %v4219 = vld [vmem:[%s12 + $0x51c] sm:$0xff]
        %v4220 = vld [vmem:[%s12 + $0x524] sm:$0xf]
        %v4221 = vld [vmem:[%s13] sm:$0xff]
        %v4222 = vld [vmem:[%s13 + $0x8] sm:$0xff]
        %v4225 = vperm.slane %v4221, 0
        %v4226 = vperm.slane %v4221, 1
        %v4227 = vperm.slane %v4221, 2
        %v4228 = vperm.slane %v4221, 3
        %v4229 = vperm.slane %v4221, 4
        %v4230 = vperm.slane %v4221, 5
        %v4231 = vperm.slane %v4221, 6
        %v4232 = vperm.slane %v4221, 7
        %v4233 = vperm.slane %v4222, 0
        %v4234 = vperm.slane %v4222, 1
        %v4235 = vperm.slane %v4222, 2
        %v4236 = vperm.slane %v4222, 3
        %v4237 = vperm.slane %v4222, 4
        %v4238 = vperm.slane %v4222, 5
        %v4239 = vperm.slane %v4222, 6
        %v4319 = vunpack.c.l.b16 %v4157
        %v4320 = vunpack.c.h.b16 %v4157
        %v4321 = vunpack.c.l.b16 %v4158
        %v4322 = vunpack.c.h.b16 %v4158
        %v4323 = vunpack.c.l.b16 %v4159
        %v4324 = vunpack.c.h.b16 %v4159
        %v4325 = vunpack.c.l.b16 %v4160
        %v4326 = vunpack.c.h.b16 %v4160
        %v4327 = vunpack.c.l.b16 %v4161
        %v4328 = vunpack.c.h.b16 %v4161
        %v4329 = vunpack.c.l.b16 %v4162
        %v4330 = vunpack.c.h.b16 %v4162
        %v4331 = vunpack.c.l.b16 %v4163
        %v4332 = vunpack.c.h.b16 %v4163
        %v4333 = vunpack.c.l.b16 %v4164
        %v4334 = vunpack.c.l.b16 %v4165
        %v4335 = vunpack.c.h.b16 %v4165
        %v4336 = vunpack.c.l.b16 %v4166
        %v4337 = vunpack.c.h.b16 %v4166
        %v4338 = vunpack.c.l.b16 %v4167
        %v4339 = vunpack.c.h.b16 %v4167
        %v4340 = vunpack.c.l.b16 %v4168
        %v4341 = vunpack.c.h.b16 %v4168
        %v4342 = vunpack.c.l.b16 %v4169
        %v4343 = vunpack.c.h.b16 %v4169
        %v4344 = vunpack.c.l.b16 %v4170
        %v4345 = vunpack.c.h.b16 %v4170
        %v4346 = vunpack.c.l.b16 %v4171
        %v4347 = vunpack.c.h.b16 %v4171
        %v4348 = vunpack.c.l.b16 %v4172
        %v4349 = vunpack.c.l.b16 %v4173
        %v4350 = vunpack.c.h.b16 %v4173
        %v4351 = vunpack.c.l.b16 %v4174
        %v4352 = vunpack.c.h.b16 %v4174
        %v4353 = vunpack.c.l.b16 %v4175
        %v4354 = vunpack.c.h.b16 %v4175
        %v4355 = vunpack.c.l.b16 %v4176
        %v4356 = vunpack.c.h.b16 %v4176
        %v4357 = vunpack.c.l.b16 %v4177
        %v4358 = vunpack.c.h.b16 %v4177
        %v4359 = vunpack.c.l.b16 %v4178
        %v4360 = vunpack.c.h.b16 %v4178
        %v4361 = vunpack.c.l.b16 %v4179
        %v4362 = vunpack.c.h.b16 %v4179
        %v4363 = vunpack.c.l.b16 %v4180
        %v4364 = vunpack.c.l.b16 %v4181
        %v4365 = vunpack.c.h.b16 %v4181
        %v4366 = vunpack.c.l.b16 %v4182
        %v4367 = vunpack.c.h.b16 %v4182
        %v4368 = vunpack.c.l.b16 %v4183
        %v4369 = vunpack.c.h.b16 %v4183
        %v4370 = vunpack.c.l.b16 %v4184
        %v4371 = vunpack.c.h.b16 %v4184
        %v4372 = vunpack.c.l.b16 %v4185
        %v4373 = vunpack.c.h.b16 %v4185
        %v4374 = vunpack.c.l.b16 %v4186
        %v4375 = vunpack.c.h.b16 %v4186
        %v4376 = vunpack.c.l.b16 %v4187
        %v4377 = vunpack.c.h.b16 %v4187
        %v4378 = vunpack.c.l.b16 %v4188
        %v4379 = vunpack.c.l.b16 %v4189
        %v4380 = vunpack.c.h.b16 %v4189
        %v4381 = vunpack.c.l.b16 %v4190
        %v4382 = vunpack.c.h.b16 %v4190
        %v4383 = vunpack.c.l.b16 %v4191
        %v4384 = vunpack.c.h.b16 %v4191
        %v4385 = vunpack.c.l.b16 %v4192
        %v4386 = vunpack.c.h.b16 %v4192
        %v4387 = vunpack.c.l.b16 %v4193
        %v4388 = vunpack.c.h.b16 %v4193
        %v4389 = vunpack.c.l.b16 %v4194
        %v4390 = vunpack.c.h.b16 %v4194
        %v4391 = vunpack.c.l.b16 %v4195
        %v4392 = vunpack.c.h.b16 %v4195
        %v4393 = vunpack.c.l.b16 %v4196
        %v4394 = vunpack.c.l.b16 %v4197
        %v4395 = vunpack.c.h.b16 %v4197
        %v4396 = vunpack.c.l.b16 %v4198
        %v4397 = vunpack.c.h.b16 %v4198
        %v4398 = vunpack.c.l.b16 %v4199
        %v4399 = vunpack.c.h.b16 %v4199
        %v4400 = vunpack.c.l.b16 %v4200
        %v4401 = vunpack.c.h.b16 %v4200
        %v4402 = vunpack.c.l.b16 %v4201
        %v4403 = vunpack.c.h.b16 %v4201
        %v4404 = vunpack.c.l.b16 %v4202
        %v4405 = vunpack.c.h.b16 %v4202
        %v4406 = vunpack.c.l.b16 %v4203
        %v4407 = vunpack.c.h.b16 %v4203
        %v4408 = vunpack.c.l.b16 %v4204
        %v4409 = vunpack.c.l.b16 %v4205
        %v4410 = vunpack.c.h.b16 %v4205
        %v4411 = vunpack.c.l.b16 %v4206
        %v4412 = vunpack.c.h.b16 %v4206
        %v4413 = vunpack.c.l.b16 %v4207
        %v4414 = vunpack.c.h.b16 %v4207
        %v4415 = vunpack.c.l.b16 %v4208
        %v4416 = vunpack.c.h.b16 %v4208
        %v4417 = vunpack.c.l.b16 %v4209
        %v4418 = vunpack.c.h.b16 %v4209
        %v4419 = vunpack.c.l.b16 %v4210
        %v4420 = vunpack.c.h.b16 %v4210
        %v4421 = vunpack.c.l.b16 %v4211
        %v4422 = vunpack.c.h.b16 %v4211
        %v4423 = vunpack.c.l.b16 %v4212
        %v4424 = vunpack.c.l.b16 %v4213
        %v4425 = vunpack.c.h.b16 %v4213
        %v4426 = vunpack.c.l.b16 %v4214
        %v4427 = vunpack.c.h.b16 %v4214
        %v4428 = vunpack.c.l.b16 %v4215
        %v4429 = vunpack.c.h.b16 %v4215
        %v4430 = vunpack.c.l.b16 %v4216
        %v4431 = vunpack.c.h.b16 %v4216
        %v4432 = vunpack.c.l.b16 %v4217
        %v4433 = vunpack.c.h.b16 %v4217
        %v4434 = vunpack.c.l.b16 %v4218
        %v4435 = vunpack.c.h.b16 %v4218
        %v4436 = vunpack.c.l.b16 %v4219
        %v4437 = vunpack.c.h.b16 %v4219
        %v4438 = vunpack.c.l.b16 %v4220
        %v4439 = vpack.c.b16 %v4334, %v4319
        %v4440 = vpack.c.b16 %v4335, %v4320
        %v4441 = vpack.c.b16 %v4336, %v4321
        %v4442 = vpack.c.b16 %v4337, %v4322
        %v4443 = vpack.c.b16 %v4338, %v4323
        %v4444 = vpack.c.b16 %v4339, %v4324
        %v4445 = vpack.c.b16 %v4340, %v4325
        %v4446 = vpack.c.b16 %v4341, %v4326
        %v4447 = vpack.c.b16 %v4342, %v4327
        %v4448 = vpack.c.b16 %v4343, %v4328
        %v4449 = vpack.c.b16 %v4344, %v4329
        %v4450 = vpack.c.b16 %v4345, %v4330
        %v4451 = vpack.c.b16 %v4346, %v4331
        %v4452 = vpack.c.b16 %v4347, %v4332
        %v4453 = vpack.c.b16 %v4348, %v4333
        %v4454 = vpack.c.b16 %v4364, %v4349
        %v4455 = vpack.c.b16 %v4365, %v4350
        %v4456 = vpack.c.b16 %v4366, %v4351
        %v4457 = vpack.c.b16 %v4367, %v4352
        %v4458 = vpack.c.b16 %v4368, %v4353
        %v4459 = vpack.c.b16 %v4369, %v4354
        %v4460 = vpack.c.b16 %v4370, %v4355
        %v4461 = vpack.c.b16 %v4371, %v4356
        %v4462 = vpack.c.b16 %v4372, %v4357
        %v4463 = vpack.c.b16 %v4373, %v4358
        %v4464 = vpack.c.b16 %v4374, %v4359
        %v4465 = vpack.c.b16 %v4375, %v4360
        %v4466 = vpack.c.b16 %v4376, %v4361
        %v4467 = vpack.c.b16 %v4377, %v4362
        %v4468 = vpack.c.b16 %v4378, %v4363
        %v4469 = vpack.c.b16 %v4394, %v4379
        %v4470 = vpack.c.b16 %v4395, %v4380
        %v4471 = vpack.c.b16 %v4396, %v4381
        %v4472 = vpack.c.b16 %v4397, %v4382
        %v4473 = vpack.c.b16 %v4398, %v4383
        %v4474 = vpack.c.b16 %v4399, %v4384
        %v4475 = vpack.c.b16 %v4400, %v4385
        %v4476 = vpack.c.b16 %v4401, %v4386
        %v4477 = vpack.c.b16 %v4402, %v4387
        %v4478 = vpack.c.b16 %v4403, %v4388
        %v4479 = vpack.c.b16 %v4404, %v4389
        %v4480 = vpack.c.b16 %v4405, %v4390
        %v4481 = vpack.c.b16 %v4406, %v4391
        %v4482 = vpack.c.b16 %v4407, %v4392
        %v4483 = vpack.c.b16 %v4408, %v4393
        %v4484 = vpack.c.b16 %v4424, %v4409
        %v4485 = vpack.c.b16 %v4425, %v4410
        %v4486 = vpack.c.b16 %v4426, %v4411
        %v4487 = vpack.c.b16 %v4427, %v4412
        %v4488 = vpack.c.b16 %v4428, %v4413
        %v4489 = vpack.c.b16 %v4429, %v4414
        %v4490 = vpack.c.b16 %v4430, %v4415
        %v4491 = vpack.c.b16 %v4431, %v4416
        %v4492 = vpack.c.b16 %v4432, %v4417
        %v4493 = vpack.c.b16 %v4433, %v4418
        %v4494 = vpack.c.b16 %v4434, %v4419
        %v4495 = vpack.c.b16 %v4435, %v4420
        %v4496 = vpack.c.b16 %v4436, %v4421
        %v4497 = vpack.c.b16 %v4437, %v4422
        %v4498 = vpack.c.b16 %v4438, %v4423
        %v4560 = vsel %vm4025, %v4156, 0
        %4562 = vmatpush.bf16.msra.mxu0 0
        %4563 = vmatpush.bf16.msra.mxu0 0
        %4564 = vmatpush.bf16.msra.mxu0 0
        %4565 = vmatpush.bf16.msra.mxu0 0
        %4566 = vmatpush.bf16.msra.mxu0 %v4484
        %4567 = vmatpush.bf16.msra.mxu0 %v4469
        %4568 = vmatpush.bf16.msra.mxu0 %v4454
        %4569 = vmatpush.bf16.msra.mxu0 %v4439
        %4570 = vmatmul.bf16.gmra.mxu0 %v4560
        %v4571 = vpop.f32.mrf.mxu0
        %v4572 = vadd.f32 %v4225, %v4571
        %v4573 = vpop.f32.mrf.mxu0
        %4574 = vdwg.mxu0
        %4575 = vmatpush.bf16.msra.mxu0 0
        %4576 = vmatpush.bf16.msra.mxu0 0
        %4577 = vmatpush.bf16.msra.mxu0 0
        %4578 = vmatpush.bf16.msra.mxu0 0
        %4579 = vmatpush.bf16.msra.mxu0 %v4485
        %4580 = vmatpush.bf16.msra.mxu0 %v4470
        %4581 = vmatpush.bf16.msra.mxu0 %v4455
        %4582 = vmatpush.bf16.msra.mxu0 %v4440
        %4583 = vmatmul.bf16.gmra.mxu0 %v4560
        %v4584 = vpop.f32.mrf.mxu0
        %v4585 = vadd.f32 %v4226, %v4584
        %v4586 = vpop.f32.mrf.mxu0
        %4587 = vdwg.mxu0
        %4588 = vmatpush.bf16.msra.mxu0 0
        %4589 = vmatpush.bf16.msra.mxu0 0
        %4590 = vmatpush.bf16.msra.mxu0 0
        %4591 = vmatpush.bf16.msra.mxu0 0
        %4592 = vmatpush.bf16.msra.mxu0 %v4486
        %4593 = vmatpush.bf16.msra.mxu0 %v4471
        %4594 = vmatpush.bf16.msra.mxu0 %v4456
        %4595 = vmatpush.bf16.msra.mxu0 %v4441
        %4596 = vmatmul.bf16.gmra.mxu0 %v4560
        %v4597 = vpop.f32.mrf.mxu0
        %v4598 = vadd.f32 %v4227, %v4597
        %v4599 = vpop.f32.mrf.mxu0
        %4600 = vdwg.mxu0
        %4601 = vmatpush.bf16.msra.mxu0 0
        %4602 = vmatpush.bf16.msra.mxu0 0
        %4603 = vmatpush.bf16.msra.mxu0 0
        %4604 = vmatpush.bf16.msra.mxu0 0
        %4605 = vmatpush.bf16.msra.mxu0 %v4487
        %4606 = vmatpush.bf16.msra.mxu0 %v4472
        %4607 = vmatpush.bf16.msra.mxu0 %v4457
        %4608 = vmatpush.bf16.msra.mxu0 %v4442
        %4609 = vmatmul.bf16.gmra.mxu0 %v4560
        %v4610 = vpop.f32.mrf.mxu0
        %v4611 = vadd.f32 %v4228, %v4610
        %v4612 = vpop.f32.mrf.mxu0
        %4613 = vdwg.mxu0
        %4614 = vmatpush.bf16.msra.mxu0 0
        %4615 = vmatpush.bf16.msra.mxu0 0
        %4616 = vmatpush.bf16.msra.mxu0 0
        %4617 = vmatpush.bf16.msra.mxu0 0
        %4618 = vmatpush.bf16.msra.mxu0 %v4488
        %4619 = vmatpush.bf16.msra.mxu0 %v4473
        %4620 = vmatpush.bf16.msra.mxu0 %v4458
        %4621 = vmatpush.bf16.msra.mxu0 %v4443
        %4622 = vmatmul.bf16.gmra.mxu0 %v4560
        %v4623 = vpop.f32.mrf.mxu0
        %v4624 = vadd.f32 %v4229, %v4623
        %v4625 = vpop.f32.mrf.mxu0
        %4626 = vdwg.mxu0
        %4627 = vmatpush.bf16.msra.mxu0 0
        %4628 = vmatpush.bf16.msra.mxu0 0
        %4629 = vmatpush.bf16.msra.mxu0 0
        %4630 = vmatpush.bf16.msra.mxu0 0
        %4631 = vmatpush.bf16.msra.mxu0 %v4489
        %4632 = vmatpush.bf16.msra.mxu0 %v4474
        %4633 = vmatpush.bf16.msra.mxu0 %v4459
        %4634 = vmatpush.bf16.msra.mxu0 %v4444
        %4635 = vmatmul.bf16.gmra.mxu0 %v4560
        %v4636 = vpop.f32.mrf.mxu0
        %v4637 = vadd.f32 %v4230, %v4636
        %v4638 = vpop.f32.mrf.mxu0
        %4639 = vdwg.mxu0
        %4640 = vmatpush.bf16.msra.mxu0 0
        %4641 = vmatpush.bf16.msra.mxu0 0
        %4642 = vmatpush.bf16.msra.mxu0 0
        %4643 = vmatpush.bf16.msra.mxu0 0
        %4644 = vmatpush.bf16.msra.mxu0 %v4490
        %4645 = vmatpush.bf16.msra.mxu0 %v4475
        %4646 = vmatpush.bf16.msra.mxu0 %v4460
        %4647 = vmatpush.bf16.msra.mxu0 %v4445
        %4648 = vmatmul.bf16.gmra.mxu0 %v4560
        %v4649 = vpop.f32.mrf.mxu0
        %v4650 = vadd.f32 %v4231, %v4649
        %v4651 = vpop.f32.mrf.mxu0
        %4652 = vdwg.mxu0
        %4653 = vmatpush.bf16.msra.mxu0 0
        %4654 = vmatpush.bf16.msra.mxu0 0
        %4655 = vmatpush.bf16.msra.mxu0 0
        %4656 = vmatpush.bf16.msra.mxu0 0
        %4657 = vmatpush.bf16.msra.mxu0 %v4491
        %4658 = vmatpush.bf16.msra.mxu0 %v4476
        %4659 = vmatpush.bf16.msra.mxu0 %v4461
        %4660 = vmatpush.bf16.msra.mxu0 %v4446
        %4661 = vmatmul.bf16.gmra.mxu0 %v4560
        %v4662 = vpop.f32.mrf.mxu0
        %v4663 = vadd.f32 %v4232, %v4662
        %v4664 = vpop.f32.mrf.mxu0
        %4665 = vdwg.mxu0
        %4666 = vmatpush.bf16.msra.mxu0 0
        %4667 = vmatpush.bf16.msra.mxu0 0
        %4668 = vmatpush.bf16.msra.mxu0 0
        %4669 = vmatpush.bf16.msra.mxu0 0
        %4670 = vmatpush.bf16.msra.mxu0 %v4492
        %4671 = vmatpush.bf16.msra.mxu0 %v4477
        %4672 = vmatpush.bf16.msra.mxu0 %v4462
        %4673 = vmatpush.bf16.msra.mxu0 %v4447
        %4674 = vmatmul.bf16.gmra.mxu0 %v4560
        %v4675 = vpop.f32.mrf.mxu0
        %v4676 = vadd.f32 %v4233, %v4675
        %v4677 = vpop.f32.mrf.mxu0
        %4678 = vdwg.mxu0
        %4679 = vmatpush.bf16.msra.mxu0 0
        %4680 = vmatpush.bf16.msra.mxu0 0
        %4681 = vmatpush.bf16.msra.mxu0 0
        %4682 = vmatpush.bf16.msra.mxu0 0
        %4683 = vmatpush.bf16.msra.mxu0 %v4493
        %4684 = vmatpush.bf16.msra.mxu0 %v4478
        %4685 = vmatpush.bf16.msra.mxu0 %v4463
        %4686 = vmatpush.bf16.msra.mxu0 %v4448
        %4687 = vmatmul.bf16.gmra.mxu0 %v4560
        %v4688 = vpop.f32.mrf.mxu0
        %v4689 = vadd.f32 %v4234, %v4688
        %v4690 = vpop.f32.mrf.mxu0
        %4691 = vdwg.mxu0
        %4692 = vmatpush.bf16.msra.mxu0 0
        %4693 = vmatpush.bf16.msra.mxu0 0
        %4694 = vmatpush.bf16.msra.mxu0 0
        %4695 = vmatpush.bf16.msra.mxu0 0
        %4696 = vmatpush.bf16.msra.mxu0 %v4494
        %4697 = vmatpush.bf16.msra.mxu0 %v4479
        %4698 = vmatpush.bf16.msra.mxu0 %v4464
        %4699 = vmatpush.bf16.msra.mxu0 %v4449
        %4700 = vmatmul.bf16.gmra.mxu0 %v4560
        %v4701 = vpop.f32.mrf.mxu0
        %v4702 = vadd.f32 %v4235, %v4701
        %v4703 = vpop.f32.mrf.mxu0
        %4704 = vdwg.mxu0
        %4705 = vmatpush.bf16.msra.mxu0 0
        %4706 = vmatpush.bf16.msra.mxu0 0
        %4707 = vmatpush.bf16.msra.mxu0 0
        %4708 = vmatpush.bf16.msra.mxu0 0
        %4709 = vmatpush.bf16.msra.mxu0 %v4495
        %4710 = vmatpush.bf16.msra.mxu0 %v4480
        %4711 = vmatpush.bf16.msra.mxu0 %v4465
        %4712 = vmatpush.bf16.msra.mxu0 %v4450
        %4713 = vmatmul.bf16.gmra.mxu0 %v4560
        %v4714 = vpop.f32.mrf.mxu0
        %v4715 = vadd.f32 %v4236, %v4714
        %v4716 = vpop.f32.mrf.mxu0
        %4717 = vdwg.mxu0
        %4718 = vmatpush.bf16.msra.mxu0 0
        %4719 = vmatpush.bf16.msra.mxu0 0
        %4720 = vmatpush.bf16.msra.mxu0 0
        %4721 = vmatpush.bf16.msra.mxu0 0
        %4722 = vmatpush.bf16.msra.mxu0 %v4496
        %4723 = vmatpush.bf16.msra.mxu0 %v4481
        %4724 = vmatpush.bf16.msra.mxu0 %v4466
        %4725 = vmatpush.bf16.msra.mxu0 %v4451
        %4726 = vmatmul.bf16.gmra.mxu0 %v4560
        %v4727 = vpop.f32.mrf.mxu0
        %v4728 = vadd.f32 %v4237, %v4727
        %v4729 = vpop.f32.mrf.mxu0
        %4730 = vdwg.mxu0
        %4731 = vmatpush.bf16.msra.mxu0 0
        %4732 = vmatpush.bf16.msra.mxu0 0
        %4733 = vmatpush.bf16.msra.mxu0 0
        %4734 = vmatpush.bf16.msra.mxu0 0
        %4735 = vmatpush.bf16.msra.mxu0 %v4497
        %4736 = vmatpush.bf16.msra.mxu0 %v4482
        %4737 = vmatpush.bf16.msra.mxu0 %v4467
        %4738 = vmatpush.bf16.msra.mxu0 %v4452
        %4739 = vmatmul.bf16.gmra.mxu0 %v4560
        %v4740 = vpop.f32.mrf.mxu0
        %v4741 = vadd.f32 %v4238, %v4740
        %v4742 = vpop.f32.mrf.mxu0
        %4743 = vdwg.mxu0
        %4744 = vmatpush.bf16.msra.mxu0 0
        %4745 = vmatpush.bf16.msra.mxu0 0
        %4746 = vmatpush.bf16.msra.mxu0 0
        %4747 = vmatpush.bf16.msra.mxu0 0
        %4748 = vmatpush.bf16.msra.mxu0 %v4498
        %4749 = vmatpush.bf16.msra.mxu0 %v4483
        %4750 = vmatpush.bf16.msra.mxu0 %v4468
        %4751 = vmatpush.bf16.msra.mxu0 %v4453
        %4752 = vmatmul.bf16.gmra.mxu0 %v4560
        %v4753 = vpop.f32.mrf.mxu0
        %v4754 = vadd.f32 %v4239, %v4753
        %v4755 = vpop.f32.mrf.mxu0
        %4756 = vdwg.mxu0
        %4757 = vst [vmem:[#allocation2] sm:$0xff] %v4572
        %4758 = vst [vmem:[#allocation2 + $0x8] sm:$0xff] %v4585
        %4759 = vst [vmem:[#allocation2 + $0x10] sm:$0xff] %v4598
        %4760 = vst [vmem:[#allocation2 + $0x18] sm:$0xff] %v4611
        %4761 = vst [vmem:[#allocation2 + $0x20] sm:$0xff] %v4624
        %4762 = vst [vmem:[#allocation2 + $0x28] sm:$0xff] %v4637
        %4763 = vst [vmem:[#allocation2 + $0x30] sm:$0xff] %v4650
        %4764 = vst [vmem:[#allocation2 + $0x38] sm:$0xff] %v4663
        %4765 = vst [vmem:[#allocation2 + $0x40] sm:$0xff] %v4676
        %4766 = vst [vmem:[#allocation2 + $0x48] sm:$0xff] %v4689
        %4767 = vst [vmem:[#allocation2 + $0x50] sm:$0xff] %v4702
        %4768 = vst [vmem:[#allocation2 + $0x58] sm:$0xff] %v4715
        %4769 = vst [vmem:[#allocation2 + $0x60] sm:$0xff] %v4728
        %4770 = vst [vmem:[#allocation2 + $0x68] sm:$0xff] %v4741
        %4771 = vst [vmem:[#allocation2 + $0x70] sm:$0xff] %v4754
        %v4772 = vmax.f32 %v4572, %v4637
        %v4773 = vmax.f32 %v4585, %v4650
        %v4774 = vmax.f32 %v4598, %v4663
        %v4775 = vmax.f32 %v4611, %v4676
        %v4776 = vmax.f32 %v4624, %v4689
        %v4777 = vmax.f32 %v4772, %v4702
        %v4778 = vmax.f32 %v4773, %v4715
        %v4779 = vmax.f32 %v4774, %v4728
        %v4780 = vmax.f32 %v4775, %v4741
        %v4781 = vmax.f32 %v4776, %v4754
        %v4782 = vld [vmem:[%s12 + $0x3c] sm:$0xff]
        %v4783 = vld [vmem:[%s12 + $0x44] sm:$0xff]
        %v4784 = vld [vmem:[%s12 + $0x4c] sm:$0xff]
        %v4785 = vld [vmem:[%s12 + $0x54] sm:$0xff]
        %v4786 = vld [vmem:[%s12 + $0x5c] sm:$0xff]
        %v4787 = vld [vmem:[%s12 + $0x64] sm:$0xff]
        %v4788 = vld [vmem:[%s12 + $0x6c] sm:$0xff]
        %v4789 = vld [vmem:[%s12 + $0x74] sm:$0xf]
        %v4790 = vld [vmem:[%s12 + $0xf0] sm:$0xff]
        %v4791 = vld [vmem:[%s12 + $0xf8] sm:$0xff]
        %v4792 = vld [vmem:[%s12 + $0x100] sm:$0xff]
        %v4793 = vld [vmem:[%s12 + $0x108] sm:$0xff]
        %v4794 = vld [vmem:[%s12 + $0x110] sm:$0xff]
        %v4795 = vld [vmem:[%s12 + $0x118] sm:$0xff]
        %v4796 = vld [vmem:[%s12 + $0x120] sm:$0xff]
        %v4797 = vld [vmem:[%s12 + $0x128] sm:$0xf]
        %v4798 = vld [vmem:[%s12 + $0x1a4] sm:$0xff]
        %v4799 = vld [vmem:[%s12 + $0x1ac] sm:$0xff]
        %v4800 = vld [vmem:[%s12 + $0x1b4] sm:$0xff]
        %v4801 = vld [vmem:[%s12 + $0x1bc] sm:$0xff]
        %v4802 = vld [vmem:[%s12 + $0x1c4] sm:$0xff]
        %v4803 = vld [vmem:[%s12 + $0x1cc] sm:$0xff]
        %v4804 = vld [vmem:[%s12 + $0x1d4] sm:$0xff]
        %v4805 = vld [vmem:[%s12 + $0x1dc] sm:$0xf]
        %v4806 = vld [vmem:[%s12 + $0x258] sm:$0xff]
        %v4807 = vld [vmem:[%s12 + $0x260] sm:$0xff]
        %v4808 = vld [vmem:[%s12 + $0x268] sm:$0xff]
        %v4809 = vld [vmem:[%s12 + $0x270] sm:$0xff]
        %v4810 = vld [vmem:[%s12 + $0x278] sm:$0xff]
        %v4811 = vld [vmem:[%s12 + $0x280] sm:$0xff]
        %v4812 = vld [vmem:[%s12 + $0x288] sm:$0xff]
        %v4813 = vld [vmem:[%s12 + $0x290] sm:$0xf]
        %v4814 = vld [vmem:[%s12 + $0x30c] sm:$0xff]
        %v4815 = vld [vmem:[%s12 + $0x314] sm:$0xff]
        %v4816 = vld [vmem:[%s12 + $0x31c] sm:$0xff]
        %v4817 = vld [vmem:[%s12 + $0x324] sm:$0xff]
        %v4818 = vld [vmem:[%s12 + $0x32c] sm:$0xff]
        %v4819 = vld [vmem:[%s12 + $0x334] sm:$0xff]
        %v4820 = vld [vmem:[%s12 + $0x33c] sm:$0xff]
        %v4821 = vld [vmem:[%s12 + $0x344] sm:$0xf]
        %v4822 = vld [vmem:[%s12 + $0x3c0] sm:$0xff]
        %v4823 = vld [vmem:[%s12 + $0x3c8] sm:$0xff]
        %v4824 = vld [vmem:[%s12 + $0x3d0] sm:$0xff]
        %v4825 = vld [vmem:[%s12 + $0x3d8] sm:$0xff]
        %v4826 = vld [vmem:[%s12 + $0x3e0] sm:$0xff]
        %v4827 = vld [vmem:[%s12 + $0x3e8] sm:$0xff]
        %v4828 = vld [vmem:[%s12 + $0x3f0] sm:$0xff]
        %v4829 = vld [vmem:[%s12 + $0x3f8] sm:$0xf]
        %v4830 = vld [vmem:[%s12 + $0x474] sm:$0xff]
        %v4831 = vld [vmem:[%s12 + $0x47c] sm:$0xff]
        %v4832 = vld [vmem:[%s12 + $0x484] sm:$0xff]
        %v4833 = vld [vmem:[%s12 + $0x48c] sm:$0xff]
        %v4834 = vld [vmem:[%s12 + $0x494] sm:$0xff]
        %v4835 = vld [vmem:[%s12 + $0x49c] sm:$0xff]
        %v4836 = vld [vmem:[%s12 + $0x4a4] sm:$0xff]
        %v4837 = vld [vmem:[%s12 + $0x4ac] sm:$0xf]
        %v4838 = vld [vmem:[%s12 + $0x528] sm:$0xff]
        %v4839 = vld [vmem:[%s12 + $0x530] sm:$0xff]
        %v4840 = vld [vmem:[%s12 + $0x538] sm:$0xff]
        %v4841 = vld [vmem:[%s12 + $0x540] sm:$0xff]
        %v4842 = vld [vmem:[%s12 + $0x548] sm:$0xff]
        %v4843 = vld [vmem:[%s12 + $0x550] sm:$0xff]
        %v4844 = vld [vmem:[%s12 + $0x558] sm:$0xff]
        %v4845 = vld [vmem:[%s12 + $0x560] sm:$0xf]
        %v4846 = vld [vmem:[%s13 + $0xf] sm:$0xff]
        %v4847 = vld [vmem:[%s13 + $0x17] sm:$0xff]
        %v4850 = vperm.slane %v4846, 0
        %v4851 = vperm.slane %v4846, 1
        %v4852 = vperm.slane %v4846, 2
        %v4853 = vperm.slane %v4846, 3
        %v4854 = vperm.slane %v4846, 4
        %v4855 = vperm.slane %v4846, 5
        %v4856 = vperm.slane %v4846, 6
        %v4857 = vperm.slane %v4846, 7
        %v4858 = vperm.slane %v4847, 0
        %v4859 = vperm.slane %v4847, 1
        %v4860 = vperm.slane %v4847, 2
        %v4861 = vperm.slane %v4847, 3
        %v4862 = vperm.slane %v4847, 4
        %v4863 = vperm.slane %v4847, 5
        %v4864 = vperm.slane %v4847, 6
        %v4944 = vunpack.c.l.b16 %v4782
        %v4945 = vunpack.c.h.b16 %v4782
        %v4946 = vunpack.c.l.b16 %v4783
        %v4947 = vunpack.c.h.b16 %v4783
        %v4948 = vunpack.c.l.b16 %v4784
        %v4949 = vunpack.c.h.b16 %v4784
        %v4950 = vunpack.c.l.b16 %v4785
        %v4951 = vunpack.c.h.b16 %v4785
        %v4952 = vunpack.c.l.b16 %v4786
        %v4953 = vunpack.c.h.b16 %v4786
        %v4954 = vunpack.c.l.b16 %v4787
        %v4955 = vunpack.c.h.b16 %v4787
        %v4956 = vunpack.c.l.b16 %v4788
        %v4957 = vunpack.c.h.b16 %v4788
        %v4958 = vunpack.c.l.b16 %v4789
        %v4959 = vunpack.c.l.b16 %v4790
        %v4960 = vunpack.c.h.b16 %v4790
        %v4961 = vunpack.c.l.b16 %v4791
        %v4962 = vunpack.c.h.b16 %v4791
        %v4963 = vunpack.c.l.b16 %v4792
        %v4964 = vunpack.c.h.b16 %v4792
        %v4965 = vunpack.c.l.b16 %v4793
        %v4966 = vunpack.c.h.b16 %v4793
        %v4967 = vunpack.c.l.b16 %v4794
        %v4968 = vunpack.c.h.b16 %v4794
        %v4969 = vunpack.c.l.b16 %v4795
        %v4970 = vunpack.c.h.b16 %v4795
        %v4971 = vunpack.c.l.b16 %v4796
        %v4972 = vunpack.c.h.b16 %v4796
        %v4973 = vunpack.c.l.b16 %v4797
        %v4974 = vunpack.c.l.b16 %v4798
        %v4975 = vunpack.c.h.b16 %v4798
        %v4976 = vunpack.c.l.b16 %v4799
        %v4977 = vunpack.c.h.b16 %v4799
        %v4978 = vunpack.c.l.b16 %v4800
        %v4979 = vunpack.c.h.b16 %v4800
        %v4980 = vunpack.c.l.b16 %v4801
        %v4981 = vunpack.c.h.b16 %v4801
        %v4982 = vunpack.c.l.b16 %v4802
        %v4983 = vunpack.c.h.b16 %v4802
        %v4984 = vunpack.c.l.b16 %v4803
        %v4985 = vunpack.c.h.b16 %v4803
        %v4986 = vunpack.c.l.b16 %v4804
        %v4987 = vunpack.c.h.b16 %v4804
        %v4988 = vunpack.c.l.b16 %v4805
        %v4989 = vunpack.c.l.b16 %v4806
        %v4990 = vunpack.c.h.b16 %v4806
        %v4991 = vunpack.c.l.b16 %v4807
        %v4992 = vunpack.c.h.b16 %v4807
        %v4993 = vunpack.c.l.b16 %v4808
        %v4994 = vunpack.c.h.b16 %v4808
        %v4995 = vunpack.c.l.b16 %v4809
        %v4996 = vunpack.c.h.b16 %v4809
        %v4997 = vunpack.c.l.b16 %v4810
        %v4998 = vunpack.c.h.b16 %v4810
        %v4999 = vunpack.c.l.b16 %v4811
        %v5000 = vunpack.c.h.b16 %v4811
        %v5001 = vunpack.c.l.b16 %v4812
        %v5002 = vunpack.c.h.b16 %v4812
        %v5003 = vunpack.c.l.b16 %v4813
        %v5004 = vunpack.c.l.b16 %v4814
        %v5005 = vunpack.c.h.b16 %v4814
        %v5006 = vunpack.c.l.b16 %v4815
        %v5007 = vunpack.c.h.b16 %v4815
        %v5008 = vunpack.c.l.b16 %v4816
        %v5009 = vunpack.c.h.b16 %v4816
        %v5010 = vunpack.c.l.b16 %v4817
        %v5011 = vunpack.c.h.b16 %v4817
        %v5012 = vunpack.c.l.b16 %v4818
        %v5013 = vunpack.c.h.b16 %v4818
        %v5014 = vunpack.c.l.b16 %v4819
        %v5015 = vunpack.c.h.b16 %v4819
        %v5016 = vunpack.c.l.b16 %v4820
        %v5017 = vunpack.c.h.b16 %v4820
        %v5018 = vunpack.c.l.b16 %v4821
        %v5019 = vunpack.c.l.b16 %v4822
        %v5020 = vunpack.c.h.b16 %v4822
        %v5021 = vunpack.c.l.b16 %v4823
        %v5022 = vunpack.c.h.b16 %v4823
        %v5023 = vunpack.c.l.b16 %v4824
        %v5024 = vunpack.c.h.b16 %v4824
        %v5025 = vunpack.c.l.b16 %v4825
        %v5026 = vunpack.c.h.b16 %v4825
        %v5027 = vunpack.c.l.b16 %v4826
        %v5028 = vunpack.c.h.b16 %v4826
        %v5029 = vunpack.c.l.b16 %v4827
        %v5030 = vunpack.c.h.b16 %v4827
        %v5031 = vunpack.c.l.b16 %v4828
        %v5032 = vunpack.c.h.b16 %v4828
        %v5033 = vunpack.c.l.b16 %v4829
        %v5034 = vunpack.c.l.b16 %v4830
        %v5035 = vunpack.c.h.b16 %v4830
        %v5036 = vunpack.c.l.b16 %v4831
        %v5037 = vunpack.c.h.b16 %v4831
        %v5038 = vunpack.c.l.b16 %v4832
        %v5039 = vunpack.c.h.b16 %v4832
        %v5040 = vunpack.c.l.b16 %v4833
        %v5041 = vunpack.c.h.b16 %v4833
        %v5042 = vunpack.c.l.b16 %v4834
        %v5043 = vunpack.c.h.b16 %v4834
        %v5044 = vunpack.c.l.b16 %v4835
        %v5045 = vunpack.c.h.b16 %v4835
        %v5046 = vunpack.c.l.b16 %v4836
        %v5047 = vunpack.c.h.b16 %v4836
        %v5048 = vunpack.c.l.b16 %v4837
        %v5049 = vunpack.c.l.b16 %v4838
        %v5050 = vunpack.c.h.b16 %v4838
        %v5051 = vunpack.c.l.b16 %v4839
        %v5052 = vunpack.c.h.b16 %v4839
        %v5053 = vunpack.c.l.b16 %v4840
        %v5054 = vunpack.c.h.b16 %v4840
        %v5055 = vunpack.c.l.b16 %v4841
        %v5056 = vunpack.c.h.b16 %v4841
        %v5057 = vunpack.c.l.b16 %v4842
        %v5058 = vunpack.c.h.b16 %v4842
        %v5059 = vunpack.c.l.b16 %v4843
        %v5060 = vunpack.c.h.b16 %v4843
        %v5061 = vunpack.c.l.b16 %v4844
        %v5062 = vunpack.c.h.b16 %v4844
        %v5063 = vunpack.c.l.b16 %v4845
        %v5064 = vpack.c.b16 %v4959, %v4944
        %v5065 = vpack.c.b16 %v4960, %v4945
        %v5066 = vpack.c.b16 %v4961, %v4946
        %v5067 = vpack.c.b16 %v4962, %v4947
        %v5068 = vpack.c.b16 %v4963, %v4948
        %v5069 = vpack.c.b16 %v4964, %v4949
        %v5070 = vpack.c.b16 %v4965, %v4950
        %v5071 = vpack.c.b16 %v4966, %v4951
        %v5072 = vpack.c.b16 %v4967, %v4952
        %v5073 = vpack.c.b16 %v4968, %v4953
        %v5074 = vpack.c.b16 %v4969, %v4954
        %v5075 = vpack.c.b16 %v4970, %v4955
        %v5076 = vpack.c.b16 %v4971, %v4956
        %v5077 = vpack.c.b16 %v4972, %v4957
        %v5078 = vpack.c.b16 %v4973, %v4958
        %v5079 = vpack.c.b16 %v4989, %v4974
        %v5080 = vpack.c.b16 %v4990, %v4975
        %v5081 = vpack.c.b16 %v4991, %v4976
        %v5082 = vpack.c.b16 %v4992, %v4977
        %v5083 = vpack.c.b16 %v4993, %v4978
        %v5084 = vpack.c.b16 %v4994, %v4979
        %v5085 = vpack.c.b16 %v4995, %v4980
        %v5086 = vpack.c.b16 %v4996, %v4981
        %v5087 = vpack.c.b16 %v4997, %v4982
        %v5088 = vpack.c.b16 %v4998, %v4983
        %v5089 = vpack.c.b16 %v4999, %v4984
        %v5090 = vpack.c.b16 %v5000, %v4985
        %v5091 = vpack.c.b16 %v5001, %v4986
        %v5092 = vpack.c.b16 %v5002, %v4987
        %v5093 = vpack.c.b16 %v5003, %v4988
        %v5094 = vpack.c.b16 %v5019, %v5004
        %v5095 = vpack.c.b16 %v5020, %v5005
        %v5096 = vpack.c.b16 %v5021, %v5006
        %v5097 = vpack.c.b16 %v5022, %v5007
        %v5098 = vpack.c.b16 %v5023, %v5008
        %v5099 = vpack.c.b16 %v5024, %v5009
        %v5100 = vpack.c.b16 %v5025, %v5010
        %v5101 = vpack.c.b16 %v5026, %v5011
        %v5102 = vpack.c.b16 %v5027, %v5012
        %v5103 = vpack.c.b16 %v5028, %v5013
        %v5104 = vpack.c.b16 %v5029, %v5014
        %v5105 = vpack.c.b16 %v5030, %v5015
        %v5106 = vpack.c.b16 %v5031, %v5016
        %v5107 = vpack.c.b16 %v5032, %v5017
        %v5108 = vpack.c.b16 %v5033, %v5018
        %v5109 = vpack.c.b16 %v5049, %v5034
        %v5110 = vpack.c.b16 %v5050, %v5035
        %v5111 = vpack.c.b16 %v5051, %v5036
        %v5112 = vpack.c.b16 %v5052, %v5037
        %v5113 = vpack.c.b16 %v5053, %v5038
        %v5114 = vpack.c.b16 %v5054, %v5039
        %v5115 = vpack.c.b16 %v5055, %v5040
        %v5116 = vpack.c.b16 %v5056, %v5041
        %v5117 = vpack.c.b16 %v5057, %v5042
        %v5118 = vpack.c.b16 %v5058, %v5043
        %v5119 = vpack.c.b16 %v5059, %v5044
        %v5120 = vpack.c.b16 %v5060, %v5045
        %v5121 = vpack.c.b16 %v5061, %v5046
        %v5122 = vpack.c.b16 %v5062, %v5047
        %v5123 = vpack.c.b16 %v5063, %v5048
        %5184 = vmatpush.bf16.msra.mxu0 0
        %5185 = vmatpush.bf16.msra.mxu0 0
        %5186 = vmatpush.bf16.msra.mxu0 0
        %5187 = vmatpush.bf16.msra.mxu0 0
        %5188 = vmatpush.bf16.msra.mxu0 %v5109
        %5189 = vmatpush.bf16.msra.mxu0 %v5094
        %5190 = vmatpush.bf16.msra.mxu0 %v5079
        %5191 = vmatpush.bf16.msra.mxu0 %v5064
        %5192 = vmatmul.bf16.gmra.mxu0 %v4560
        %v5193 = vpop.f32.mrf.mxu0
        %v5194 = vadd.f32 %v4850, %v5193
        %v5195 = vpop.f32.mrf.mxu0
        %5196 = vdwg.mxu0
        %5197 = vmatpush.bf16.msra.mxu0 0
        %5198 = vmatpush.bf16.msra.mxu0 0
        %5199 = vmatpush.bf16.msra.mxu0 0
        %5200 = vmatpush.bf16.msra.mxu0 0
        %5201 = vmatpush.bf16.msra.mxu0 %v5110
        %5202 = vmatpush.bf16.msra.mxu0 %v5095
        %5203 = vmatpush.bf16.msra.mxu0 %v5080
        %5204 = vmatpush.bf16.msra.mxu0 %v5065
        %5205 = vmatmul.bf16.gmra.mxu0 %v4560
        %v5206 = vpop.f32.mrf.mxu0
        %v5207 = vadd.f32 %v4851, %v5206
        %v5208 = vpop.f32.mrf.mxu0
        %5209 = vdwg.mxu0
        %5210 = vmatpush.bf16.msra.mxu0 0
        %5211 = vmatpush.bf16.msra.mxu0 0
        %5212 = vmatpush.bf16.msra.mxu0 0
        %5213 = vmatpush.bf16.msra.mxu0 0
        %5214 = vmatpush.bf16.msra.mxu0 %v5111
        %5215 = vmatpush.bf16.msra.mxu0 %v5096
        %5216 = vmatpush.bf16.msra.mxu0 %v5081
        %5217 = vmatpush.bf16.msra.mxu0 %v5066
        %5218 = vmatmul.bf16.gmra.mxu0 %v4560
        %v5219 = vpop.f32.mrf.mxu0
        %v5220 = vadd.f32 %v4852, %v5219
        %v5221 = vpop.f32.mrf.mxu0
        %5222 = vdwg.mxu0
        %5223 = vmatpush.bf16.msra.mxu0 0
        %5224 = vmatpush.bf16.msra.mxu0 0
        %5225 = vmatpush.bf16.msra.mxu0 0
        %5226 = vmatpush.bf16.msra.mxu0 0
        %5227 = vmatpush.bf16.msra.mxu0 %v5112
        %5228 = vmatpush.bf16.msra.mxu0 %v5097
        %5229 = vmatpush.bf16.msra.mxu0 %v5082
        %5230 = vmatpush.bf16.msra.mxu0 %v5067
        %5231 = vmatmul.bf16.gmra.mxu0 %v4560
        %v5232 = vpop.f32.mrf.mxu0
        %v5233 = vadd.f32 %v4853, %v5232
        %v5234 = vpop.f32.mrf.mxu0
        %5235 = vdwg.mxu0
        %5236 = vmatpush.bf16.msra.mxu0 0
        %5237 = vmatpush.bf16.msra.mxu0 0
        %5238 = vmatpush.bf16.msra.mxu0 0
        %5239 = vmatpush.bf16.msra.mxu0 0
        %5240 = vmatpush.bf16.msra.mxu0 %v5113
        %5241 = vmatpush.bf16.msra.mxu0 %v5098
        %5242 = vmatpush.bf16.msra.mxu0 %v5083
        %5243 = vmatpush.bf16.msra.mxu0 %v5068
        %5244 = vmatmul.bf16.gmra.mxu0 %v4560
        %v5245 = vpop.f32.mrf.mxu0
        %v5246 = vadd.f32 %v4854, %v5245
        %v5247 = vpop.f32.mrf.mxu0
        %5248 = vdwg.mxu0
        %5249 = vmatpush.bf16.msra.mxu0 0
        %5250 = vmatpush.bf16.msra.mxu0 0
        %5251 = vmatpush.bf16.msra.mxu0 0
        %5252 = vmatpush.bf16.msra.mxu0 0
        %5253 = vmatpush.bf16.msra.mxu0 %v5114
        %5254 = vmatpush.bf16.msra.mxu0 %v5099
        %5255 = vmatpush.bf16.msra.mxu0 %v5084
        %5256 = vmatpush.bf16.msra.mxu0 %v5069
        %5257 = vmatmul.bf16.gmra.mxu0 %v4560
        %v5258 = vpop.f32.mrf.mxu0
        %v5259 = vadd.f32 %v4855, %v5258
        %v5260 = vpop.f32.mrf.mxu0
        %5261 = vdwg.mxu0
        %5262 = vmatpush.bf16.msra.mxu0 0
        %5263 = vmatpush.bf16.msra.mxu0 0
        %5264 = vmatpush.bf16.msra.mxu0 0
        %5265 = vmatpush.bf16.msra.mxu0 0
        %5266 = vmatpush.bf16.msra.mxu0 %v5115
        %5267 = vmatpush.bf16.msra.mxu0 %v5100
        %5268 = vmatpush.bf16.msra.mxu0 %v5085
        %5269 = vmatpush.bf16.msra.mxu0 %v5070
        %5270 = vmatmul.bf16.gmra.mxu0 %v4560
        %v5271 = vpop.f32.mrf.mxu0
        %v5272 = vadd.f32 %v4856, %v5271
        %v5273 = vpop.f32.mrf.mxu0
        %5274 = vdwg.mxu0
        %5275 = vmatpush.bf16.msra.mxu0 0
        %5276 = vmatpush.bf16.msra.mxu0 0
        %5277 = vmatpush.bf16.msra.mxu0 0
        %5278 = vmatpush.bf16.msra.mxu0 0
        %5279 = vmatpush.bf16.msra.mxu0 %v5116
        %5280 = vmatpush.bf16.msra.mxu0 %v5101
        %5281 = vmatpush.bf16.msra.mxu0 %v5086
        %5282 = vmatpush.bf16.msra.mxu0 %v5071
        %5283 = vmatmul.bf16.gmra.mxu0 %v4560
        %v5284 = vpop.f32.mrf.mxu0
        %v5285 = vadd.f32 %v4857, %v5284
        %v5286 = vpop.f32.mrf.mxu0
        %5287 = vdwg.mxu0
        %5288 = vmatpush.bf16.msra.mxu0 0
        %5289 = vmatpush.bf16.msra.mxu0 0
        %5290 = vmatpush.bf16.msra.mxu0 0
        %5291 = vmatpush.bf16.msra.mxu0 0
        %5292 = vmatpush.bf16.msra.mxu0 %v5117
        %5293 = vmatpush.bf16.msra.mxu0 %v5102
        %5294 = vmatpush.bf16.msra.mxu0 %v5087
        %5295 = vmatpush.bf16.msra.mxu0 %v5072
        %5296 = vmatmul.bf16.gmra.mxu0 %v4560
        %v5297 = vpop.f32.mrf.mxu0
        %v5298 = vadd.f32 %v4858, %v5297
        %v5299 = vpop.f32.mrf.mxu0
        %5300 = vdwg.mxu0
        %5301 = vmatpush.bf16.msra.mxu0 0
        %5302 = vmatpush.bf16.msra.mxu0 0
        %5303 = vmatpush.bf16.msra.mxu0 0
        %5304 = vmatpush.bf16.msra.mxu0 0
        %5305 = vmatpush.bf16.msra.mxu0 %v5118
        %5306 = vmatpush.bf16.msra.mxu0 %v5103
        %5307 = vmatpush.bf16.msra.mxu0 %v5088
        %5308 = vmatpush.bf16.msra.mxu0 %v5073
        %5309 = vmatmul.bf16.gmra.mxu0 %v4560
        %v5310 = vpop.f32.mrf.mxu0
        %v5311 = vadd.f32 %v4859, %v5310
        %v5312 = vpop.f32.mrf.mxu0
        %5313 = vdwg.mxu0
        %5314 = vmatpush.bf16.msra.mxu0 0
        %5315 = vmatpush.bf16.msra.mxu0 0
        %5316 = vmatpush.bf16.msra.mxu0 0
        %5317 = vmatpush.bf16.msra.mxu0 0
        %5318 = vmatpush.bf16.msra.mxu0 %v5119
        %5319 = vmatpush.bf16.msra.mxu0 %v5104
        %5320 = vmatpush.bf16.msra.mxu0 %v5089
        %5321 = vmatpush.bf16.msra.mxu0 %v5074
        %5322 = vmatmul.bf16.gmra.mxu0 %v4560
        %v5323 = vpop.f32.mrf.mxu0
        %v5324 = vadd.f32 %v4860, %v5323
        %v5325 = vpop.f32.mrf.mxu0
        %5326 = vdwg.mxu0
        %5327 = vmatpush.bf16.msra.mxu0 0
        %5328 = vmatpush.bf16.msra.mxu0 0
        %5329 = vmatpush.bf16.msra.mxu0 0
        %5330 = vmatpush.bf16.msra.mxu0 0
        %5331 = vmatpush.bf16.msra.mxu0 %v5120
        %5332 = vmatpush.bf16.msra.mxu0 %v5105
        %5333 = vmatpush.bf16.msra.mxu0 %v5090
        %5334 = vmatpush.bf16.msra.mxu0 %v5075
        %5335 = vmatmul.bf16.gmra.mxu0 %v4560
        %v5336 = vpop.f32.mrf.mxu0
        %v5337 = vadd.f32 %v4861, %v5336
        %v5338 = vpop.f32.mrf.mxu0
        %5339 = vdwg.mxu0
        %5340 = vmatpush.bf16.msra.mxu0 0
        %5341 = vmatpush.bf16.msra.mxu0 0
        %5342 = vmatpush.bf16.msra.mxu0 0
        %5343 = vmatpush.bf16.msra.mxu0 0
        %5344 = vmatpush.bf16.msra.mxu0 %v5121
        %5345 = vmatpush.bf16.msra.mxu0 %v5106
        %5346 = vmatpush.bf16.msra.mxu0 %v5091
        %5347 = vmatpush.bf16.msra.mxu0 %v5076
        %5348 = vmatmul.bf16.gmra.mxu0 %v4560
        %v5349 = vpop.f32.mrf.mxu0
        %v5350 = vadd.f32 %v4862, %v5349
        %v5351 = vpop.f32.mrf.mxu0
        %5352 = vdwg.mxu0
        %5353 = vmatpush.bf16.msra.mxu0 0
        %5354 = vmatpush.bf16.msra.mxu0 0
        %5355 = vmatpush.bf16.msra.mxu0 0
        %5356 = vmatpush.bf16.msra.mxu0 0
        %5357 = vmatpush.bf16.msra.mxu0 %v5122
        %5358 = vmatpush.bf16.msra.mxu0 %v5107
        %5359 = vmatpush.bf16.msra.mxu0 %v5092
        %5360 = vmatpush.bf16.msra.mxu0 %v5077
        %5361 = vmatmul.bf16.gmra.mxu0 %v4560
        %v5362 = vpop.f32.mrf.mxu0
        %v5363 = vadd.f32 %v4863, %v5362
        %v5364 = vpop.f32.mrf.mxu0
        %5365 = vdwg.mxu0
        %5366 = vmatpush.bf16.msra.mxu0 0
        %5367 = vmatpush.bf16.msra.mxu0 0
        %5368 = vmatpush.bf16.msra.mxu0 0
        %5369 = vmatpush.bf16.msra.mxu0 0
        %5370 = vmatpush.bf16.msra.mxu0 %v5123
        %5371 = vmatpush.bf16.msra.mxu0 %v5108
        %5372 = vmatpush.bf16.msra.mxu0 %v5093
        %5373 = vmatpush.bf16.msra.mxu0 %v5078
        %5374 = vmatmul.bf16.gmra.mxu0 %v4560
        %v5375 = vpop.f32.mrf.mxu0
        %v5376 = vadd.f32 %v4864, %v5375
        %v5377 = vpop.f32.mrf.mxu0
        %5378 = vdwg.mxu0
        %5379 = vst [vmem:[#allocation2 + $0x78] sm:$0xff] %v5194
        %5380 = vst [vmem:[#allocation2 + $0x80] sm:$0xff] %v5207
        %5381 = vst [vmem:[#allocation2 + $0x88] sm:$0xff] %v5220
        %5382 = vst [vmem:[#allocation2 + $0x90] sm:$0xff] %v5233
        %5383 = vst [vmem:[#allocation2 + $0x98] sm:$0xff] %v5246
        %5384 = vst [vmem:[#allocation2 + $0xa0] sm:$0xff] %v5259
        %5385 = vst [vmem:[#allocation2 + $0xa8] sm:$0xff] %v5272
        %5386 = vst [vmem:[#allocation2 + $0xb0] sm:$0xff] %v5285
        %5387 = vst [vmem:[#allocation2 + $0xb8] sm:$0xff] %v5298
        %5388 = vst [vmem:[#allocation2 + $0xc0] sm:$0xff] %v5311
        %5389 = vst [vmem:[#allocation2 + $0xc8] sm:$0xff] %v5324
        %5390 = vst [vmem:[#allocation2 + $0xd0] sm:$0xff] %v5337
        %5391 = vst [vmem:[#allocation2 + $0xd8] sm:$0xff] %v5350
        %5392 = vst [vmem:[#allocation2 + $0xe0] sm:$0xff] %v5363
        %5393 = vst [vmem:[#allocation2 + $0xe8] sm:$0xff] %v5376
        %v5394 = vmax.f32 %v4777, %v5194
        %v5395 = vmax.f32 %v4778, %v5207
        %v5396 = vmax.f32 %v4779, %v5220
        %v5397 = vmax.f32 %v4780, %v5233
        %v5398 = vmax.f32 %v4781, %v5246
        %v5399 = vmax.f32 %v5394, %v5259
        %v5400 = vmax.f32 %v5395, %v5272
        %v5401 = vmax.f32 %v5396, %v5285
        %v5402 = vmax.f32 %v5397, %v5298
        %v5403 = vmax.f32 %v5398, %v5311
        %v5404 = vmax.f32 %v5399, %v5324
        %v5405 = vmax.f32 %v5400, %v5337
        %v5406 = vmax.f32 %v5401, %v5350
        %v5407 = vmax.f32 %v5402, %v5363
        %v5408 = vmax.f32 %v5403, %v5376
        %v5409 = vld [vmem:[%s12 + $0x78] sm:$0xff]
        %v5410 = vld [vmem:[%s12 + $0x80] sm:$0xff]
        %v5411 = vld [vmem:[%s12 + $0x88] sm:$0xff]
        %v5412 = vld [vmem:[%s12 + $0x90] sm:$0xff]
        %v5413 = vld [vmem:[%s12 + $0x98] sm:$0xff]
        %v5414 = vld [vmem:[%s12 + $0xa0] sm:$0xff]
        %v5415 = vld [vmem:[%s12 + $0xa8] sm:$0xff]
        %v5416 = vld [vmem:[%s12 + $0xb0] sm:$0xf]
        %v5417 = vld [vmem:[%s12 + $0x12c] sm:$0xff]
        %v5418 = vld [vmem:[%s12 + $0x134] sm:$0xff]
        %v5419 = vld [vmem:[%s12 + $0x13c] sm:$0xff]
        %v5420 = vld [vmem:[%s12 + $0x144] sm:$0xff]
        %v5421 = vld [vmem:[%s12 + $0x14c] sm:$0xff]
        %v5422 = vld [vmem:[%s12 + $0x154] sm:$0xff]
        %v5423 = vld [vmem:[%s12 + $0x15c] sm:$0xff]
        %v5424 = vld [vmem:[%s12 + $0x164] sm:$0xf]
        %v5425 = vld [vmem:[%s12 + $0x1e0] sm:$0xff]
        %v5426 = vld [vmem:[%s12 + $0x1e8] sm:$0xff]
        %v5427 = vld [vmem:[%s12 + $0x1f0] sm:$0xff]
        %v5428 = vld [vmem:[%s12 + $0x1f8] sm:$0xff]
        %v5429 = vld [vmem:[%s12 + $0x200] sm:$0xff]
        %v5430 = vld [vmem:[%s12 + $0x208] sm:$0xff]
        %v5431 = vld [vmem:[%s12 + $0x210] sm:$0xff]
        %v5432 = vld [vmem:[%s12 + $0x218] sm:$0xf]
        %v5433 = vld [vmem:[%s12 + $0x294] sm:$0xff]
        %v5434 = vld [vmem:[%s12 + $0x29c] sm:$0xff]
        %v5435 = vld [vmem:[%s12 + $0x2a4] sm:$0xff]
        %v5436 = vld [vmem:[%s12 + $0x2ac] sm:$0xff]
        %v5437 = vld [vmem:[%s12 + $0x2b4] sm:$0xff]
        %v5438 = vld [vmem:[%s12 + $0x2bc] sm:$0xff]
        %v5439 = vld [vmem:[%s12 + $0x2c4] sm:$0xff]
        %v5440 = vld [vmem:[%s12 + $0x2cc] sm:$0xf]
        %v5441 = vld [vmem:[%s12 + $0x348] sm:$0xff]
        %v5442 = vld [vmem:[%s12 + $0x350] sm:$0xff]
        %v5443 = vld [vmem:[%s12 + $0x358] sm:$0xff]
        %v5444 = vld [vmem:[%s12 + $0x360] sm:$0xff]
        %v5445 = vld [vmem:[%s12 + $0x368] sm:$0xff]
        %v5446 = vld [vmem:[%s12 + $0x370] sm:$0xff]
        %v5447 = vld [vmem:[%s12 + $0x378] sm:$0xff]
        %v5448 = vld [vmem:[%s12 + $0x380] sm:$0xf]
        %v5449 = vld [vmem:[%s12 + $0x3fc] sm:$0xff]
        %v5450 = vld [vmem:[%s12 + $0x404] sm:$0xff]
        %v5451 = vld [vmem:[%s12 + $0x40c] sm:$0xff]
        %v5452 = vld [vmem:[%s12 + $0x414] sm:$0xff]
        %v5453 = vld [vmem:[%s12 + $0x41c] sm:$0xff]
        %v5454 = vld [vmem:[%s12 + $0x424] sm:$0xff]
        %v5455 = vld [vmem:[%s12 + $0x42c] sm:$0xff]
        %v5456 = vld [vmem:[%s12 + $0x434] sm:$0xf]
        %v5457 = vld [vmem:[%s12 + $0x4b0] sm:$0xff]
        %v5458 = vld [vmem:[%s12 + $0x4b8] sm:$0xff]
        %v5459 = vld [vmem:[%s12 + $0x4c0] sm:$0xff]
        %v5460 = vld [vmem:[%s12 + $0x4c8] sm:$0xff]
        %v5461 = vld [vmem:[%s12 + $0x4d0] sm:$0xff]
        %v5462 = vld [vmem:[%s12 + $0x4d8] sm:$0xff]
        %v5463 = vld [vmem:[%s12 + $0x4e0] sm:$0xff]
        %v5464 = vld [vmem:[%s12 + $0x4e8] sm:$0xf]
        %v5465 = vld [vmem:[%s12 + $0x564] sm:$0xff]
        %v5466 = vld [vmem:[%s12 + $0x56c] sm:$0xff]
        %v5467 = vld [vmem:[%s12 + $0x574] sm:$0xff]
        %v5468 = vld [vmem:[%s12 + $0x57c] sm:$0xff]
        %v5469 = vld [vmem:[%s12 + $0x584] sm:$0xff]
        %v5470 = vld [vmem:[%s12 + $0x58c] sm:$0xff]
        %v5471 = vld [vmem:[%s12 + $0x594] sm:$0xff]
        %v5472 = vld [vmem:[%s12 + $0x59c] sm:$0xf]
        %v5473 = vld [vmem:[%s13 + $0x1e] sm:$0xff]
        %v5474 = vld [vmem:[%s13 + $0x26] sm:$0xff]
        %v5477 = vperm.slane %v5473, 0
        %v5478 = vperm.slane %v5473, 1
        %v5479 = vperm.slane %v5473, 2
        %v5480 = vperm.slane %v5473, 3
        %v5481 = vperm.slane %v5473, 4
        %v5482 = vperm.slane %v5473, 5
        %v5483 = vperm.slane %v5473, 6
        %v5484 = vperm.slane %v5473, 7
        %v5485 = vperm.slane %v5474, 0
        %v5486 = vperm.slane %v5474, 1
        %v5487 = vperm.slane %v5474, 2
        %v5488 = vperm.slane %v5474, 3
        %v5489 = vperm.slane %v5474, 4
        %v5490 = vperm.slane %v5474, 5
        %v5491 = vperm.slane %v5474, 6
        %v5571 = vunpack.c.l.b16 %v5409
        %v5572 = vunpack.c.h.b16 %v5409
        %v5573 = vunpack.c.l.b16 %v5410
        %v5574 = vunpack.c.h.b16 %v5410
        %v5575 = vunpack.c.l.b16 %v5411
        %v5576 = vunpack.c.h.b16 %v5411
        %v5577 = vunpack.c.l.b16 %v5412
        %v5578 = vunpack.c.h.b16 %v5412
        %v5579 = vunpack.c.l.b16 %v5413
        %v5580 = vunpack.c.h.b16 %v5413
        %v5581 = vunpack.c.l.b16 %v5414
        %v5582 = vunpack.c.h.b16 %v5414
        %v5583 = vunpack.c.l.b16 %v5415
        %v5584 = vunpack.c.h.b16 %v5415
        %v5585 = vunpack.c.l.b16 %v5416
        %v5586 = vunpack.c.l.b16 %v5417
        %v5587 = vunpack.c.h.b16 %v5417
        %v5588 = vunpack.c.l.b16 %v5418
        %v5589 = vunpack.c.h.b16 %v5418
        %v5590 = vunpack.c.l.b16 %v5419
        %v5591 = vunpack.c.h.b16 %v5419
        %v5592 = vunpack.c.l.b16 %v5420
        %v5593 = vunpack.c.h.b16 %v5420
        %v5594 = vunpack.c.l.b16 %v5421
        %v5595 = vunpack.c.h.b16 %v5421
        %v5596 = vunpack.c.l.b16 %v5422
        %v5597 = vunpack.c.h.b16 %v5422
        %v5598 = vunpack.c.l.b16 %v5423
        %v5599 = vunpack.c.h.b16 %v5423
        %v5600 = vunpack.c.l.b16 %v5424
        %v5601 = vunpack.c.l.b16 %v5425
        %v5602 = vunpack.c.h.b16 %v5425
        %v5603 = vunpack.c.l.b16 %v5426
        %v5604 = vunpack.c.h.b16 %v5426
        %v5605 = vunpack.c.l.b16 %v5427
        %v5606 = vunpack.c.h.b16 %v5427
        %v5607 = vunpack.c.l.b16 %v5428
        %v5608 = vunpack.c.h.b16 %v5428
        %v5609 = vunpack.c.l.b16 %v5429
        %v5610 = vunpack.c.h.b16 %v5429
        %v5611 = vunpack.c.l.b16 %v5430
        %v5612 = vunpack.c.h.b16 %v5430
        %v5613 = vunpack.c.l.b16 %v5431
        %v5614 = vunpack.c.h.b16 %v5431
        %v5615 = vunpack.c.l.b16 %v5432
        %v5616 = vunpack.c.l.b16 %v5433
        %v5617 = vunpack.c.h.b16 %v5433
        %v5618 = vunpack.c.l.b16 %v5434
        %v5619 = vunpack.c.h.b16 %v5434
        %v5620 = vunpack.c.l.b16 %v5435
        %v5621 = vunpack.c.h.b16 %v5435
        %v5622 = vunpack.c.l.b16 %v5436
        %v5623 = vunpack.c.h.b16 %v5436
        %v5624 = vunpack.c.l.b16 %v5437
        %v5625 = vunpack.c.h.b16 %v5437
        %v5626 = vunpack.c.l.b16 %v5438
        %v5627 = vunpack.c.h.b16 %v5438
        %v5628 = vunpack.c.l.b16 %v5439
        %v5629 = vunpack.c.h.b16 %v5439
        %v5630 = vunpack.c.l.b16 %v5440
        %v5631 = vunpack.c.l.b16 %v5441
        %v5632 = vunpack.c.h.b16 %v5441
        %v5633 = vunpack.c.l.b16 %v5442
        %v5634 = vunpack.c.h.b16 %v5442
        %v5635 = vunpack.c.l.b16 %v5443
        %v5636 = vunpack.c.h.b16 %v5443
        %v5637 = vunpack.c.l.b16 %v5444
        %v5638 = vunpack.c.h.b16 %v5444
        %v5639 = vunpack.c.l.b16 %v5445
        %v5640 = vunpack.c.h.b16 %v5445
        %v5641 = vunpack.c.l.b16 %v5446
        %v5642 = vunpack.c.h.b16 %v5446
        %v5643 = vunpack.c.l.b16 %v5447
        %v5644 = vunpack.c.h.b16 %v5447
        %v5645 = vunpack.c.l.b16 %v5448
        %v5646 = vunpack.c.l.b16 %v5449
        %v5647 = vunpack.c.h.b16 %v5449
        %v5648 = vunpack.c.l.b16 %v5450
        %v5649 = vunpack.c.h.b16 %v5450
        %v5650 = vunpack.c.l.b16 %v5451
        %v5651 = vunpack.c.h.b16 %v5451
        %v5652 = vunpack.c.l.b16 %v5452
        %v5653 = vunpack.c.h.b16 %v5452
        %v5654 = vunpack.c.l.b16 %v5453
        %v5655 = vunpack.c.h.b16 %v5453
        %v5656 = vunpack.c.l.b16 %v5454
        %v5657 = vunpack.c.h.b16 %v5454
        %v5658 = vunpack.c.l.b16 %v5455
        %v5659 = vunpack.c.h.b16 %v5455
        %v5660 = vunpack.c.l.b16 %v5456
        %v5661 = vunpack.c.l.b16 %v5457
        %v5662 = vunpack.c.h.b16 %v5457
        %v5663 = vunpack.c.l.b16 %v5458
        %v5664 = vunpack.c.h.b16 %v5458
        %v5665 = vunpack.c.l.b16 %v5459
        %v5666 = vunpack.c.h.b16 %v5459
        %v5667 = vunpack.c.l.b16 %v5460
        %v5668 = vunpack.c.h.b16 %v5460
        %v5669 = vunpack.c.l.b16 %v5461
        %v5670 = vunpack.c.h.b16 %v5461
        %v5671 = vunpack.c.l.b16 %v5462
        %v5672 = vunpack.c.h.b16 %v5462
        %v5673 = vunpack.c.l.b16 %v5463
        %v5674 = vunpack.c.h.b16 %v5463
        %v5675 = vunpack.c.l.b16 %v5464
        %v5676 = vunpack.c.l.b16 %v5465
        %v5677 = vunpack.c.h.b16 %v5465
        %v5678 = vunpack.c.l.b16 %v5466
        %v5679 = vunpack.c.h.b16 %v5466
        %v5680 = vunpack.c.l.b16 %v5467
        %v5681 = vunpack.c.h.b16 %v5467
        %v5682 = vunpack.c.l.b16 %v5468
        %v5683 = vunpack.c.h.b16 %v5468
        %v5684 = vunpack.c.l.b16 %v5469
        %v5685 = vunpack.c.h.b16 %v5469
        %v5686 = vunpack.c.l.b16 %v5470
        %v5687 = vunpack.c.h.b16 %v5470
        %v5688 = vunpack.c.l.b16 %v5471
        %v5689 = vunpack.c.h.b16 %v5471
        %v5690 = vunpack.c.l.b16 %v5472
        %v5691 = vpack.c.b16 %v5586, %v5571
        %v5692 = vpack.c.b16 %v5587, %v5572
        %v5693 = vpack.c.b16 %v5588, %v5573
        %v5694 = vpack.c.b16 %v5589, %v5574
        %v5695 = vpack.c.b16 %v5590, %v5575
        %v5696 = vpack.c.b16 %v5591, %v5576
        %v5697 = vpack.c.b16 %v5592, %v5577
        %v5698 = vpack.c.b16 %v5593, %v5578
        %v5699 = vpack.c.b16 %v5594, %v5579
        %v5700 = vpack.c.b16 %v5595, %v5580
        %v5701 = vpack.c.b16 %v5596, %v5581
        %v5702 = vpack.c.b16 %v5597, %v5582
        %v5703 = vpack.c.b16 %v5598, %v5583
        %v5704 = vpack.c.b16 %v5599, %v5584
        %v5705 = vpack.c.b16 %v5600, %v5585
        %v5706 = vpack.c.b16 %v5616, %v5601
        %v5707 = vpack.c.b16 %v5617, %v5602
        %v5708 = vpack.c.b16 %v5618, %v5603
        %v5709 = vpack.c.b16 %v5619, %v5604
        %v5710 = vpack.c.b16 %v5620, %v5605
        %v5711 = vpack.c.b16 %v5621, %v5606
        %v5712 = vpack.c.b16 %v5622, %v5607
        %v5713 = vpack.c.b16 %v5623, %v5608
        %v5714 = vpack.c.b16 %v5624, %v5609
        %v5715 = vpack.c.b16 %v5625, %v5610
        %v5716 = vpack.c.b16 %v5626, %v5611
        %v5717 = vpack.c.b16 %v5627, %v5612
        %v5718 = vpack.c.b16 %v5628, %v5613
        %v5719 = vpack.c.b16 %v5629, %v5614
        %v5720 = vpack.c.b16 %v5630, %v5615
        %v5721 = vpack.c.b16 %v5646, %v5631
        %v5722 = vpack.c.b16 %v5647, %v5632
        %v5723 = vpack.c.b16 %v5648, %v5633
        %v5724 = vpack.c.b16 %v5649, %v5634
        %v5725 = vpack.c.b16 %v5650, %v5635
        %v5726 = vpack.c.b16 %v5651, %v5636
        %v5727 = vpack.c.b16 %v5652, %v5637
        %v5728 = vpack.c.b16 %v5653, %v5638
        %v5729 = vpack.c.b16 %v5654, %v5639
        %v5730 = vpack.c.b16 %v5655, %v5640
        %v5731 = vpack.c.b16 %v5656, %v5641
        %v5732 = vpack.c.b16 %v5657, %v5642
        %v5733 = vpack.c.b16 %v5658, %v5643
        %v5734 = vpack.c.b16 %v5659, %v5644
        %v5735 = vpack.c.b16 %v5660, %v5645
        %v5736 = vpack.c.b16 %v5676, %v5661
        %v5737 = vpack.c.b16 %v5677, %v5662
        %v5738 = vpack.c.b16 %v5678, %v5663
        %v5739 = vpack.c.b16 %v5679, %v5664
        %v5740 = vpack.c.b16 %v5680, %v5665
        %v5741 = vpack.c.b16 %v5681, %v5666
        %v5742 = vpack.c.b16 %v5682, %v5667
        %v5743 = vpack.c.b16 %v5683, %v5668
        %v5744 = vpack.c.b16 %v5684, %v5669
        %v5745 = vpack.c.b16 %v5685, %v5670
        %v5746 = vpack.c.b16 %v5686, %v5671
        %v5747 = vpack.c.b16 %v5687, %v5672
        %v5748 = vpack.c.b16 %v5688, %v5673
        %v5749 = vpack.c.b16 %v5689, %v5674
        %v5750 = vpack.c.b16 %v5690, %v5675
        %5811 = vmatpush.bf16.msra.mxu0 0
        %5812 = vmatpush.bf16.msra.mxu0 0
        %5813 = vmatpush.bf16.msra.mxu0 0
        %5814 = vmatpush.bf16.msra.mxu0 0
        %5815 = vmatpush.bf16.msra.mxu0 %v5736
        %5816 = vmatpush.bf16.msra.mxu0 %v5721
        %5817 = vmatpush.bf16.msra.mxu0 %v5706
        %5818 = vmatpush.bf16.msra.mxu0 %v5691
        %5819 = vmatmul.bf16.gmra.mxu0 %v4560
        %v5820 = vpop.f32.mrf.mxu0
        %v5821 = vadd.f32 %v5477, %v5820
        %v5822 = vpop.f32.mrf.mxu0
        %5823 = vdwg.mxu0
        %5824 = vmatpush.bf16.msra.mxu0 0
        %5825 = vmatpush.bf16.msra.mxu0 0
        %5826 = vmatpush.bf16.msra.mxu0 0
        %5827 = vmatpush.bf16.msra.mxu0 0
        %5828 = vmatpush.bf16.msra.mxu0 %v5737
        %5829 = vmatpush.bf16.msra.mxu0 %v5722
        %5830 = vmatpush.bf16.msra.mxu0 %v5707
        %5831 = vmatpush.bf16.msra.mxu0 %v5692
        %5832 = vmatmul.bf16.gmra.mxu0 %v4560
        %v5833 = vpop.f32.mrf.mxu0
        %v5834 = vadd.f32 %v5478, %v5833
        %v5835 = vpop.f32.mrf.mxu0
        %5836 = vdwg.mxu0
        %5837 = vmatpush.bf16.msra.mxu0 0
        %5838 = vmatpush.bf16.msra.mxu0 0
        %5839 = vmatpush.bf16.msra.mxu0 0
        %5840 = vmatpush.bf16.msra.mxu0 0
        %5841 = vmatpush.bf16.msra.mxu0 %v5738
        %5842 = vmatpush.bf16.msra.mxu0 %v5723
        %5843 = vmatpush.bf16.msra.mxu0 %v5708
        %5844 = vmatpush.bf16.msra.mxu0 %v5693
        %5845 = vmatmul.bf16.gmra.mxu0 %v4560
        %v5846 = vpop.f32.mrf.mxu0
        %v5847 = vadd.f32 %v5479, %v5846
        %v5848 = vpop.f32.mrf.mxu0
        %5849 = vdwg.mxu0
        %5850 = vmatpush.bf16.msra.mxu0 0
        %5851 = vmatpush.bf16.msra.mxu0 0
        %5852 = vmatpush.bf16.msra.mxu0 0
        %5853 = vmatpush.bf16.msra.mxu0 0
        %5854 = vmatpush.bf16.msra.mxu0 %v5739
        %5855 = vmatpush.bf16.msra.mxu0 %v5724
        %5856 = vmatpush.bf16.msra.mxu0 %v5709
        %5857 = vmatpush.bf16.msra.mxu0 %v5694
        %5858 = vmatmul.bf16.gmra.mxu0 %v4560
        %v5859 = vpop.f32.mrf.mxu0
        %v5860 = vadd.f32 %v5480, %v5859
        %v5861 = vpop.f32.mrf.mxu0
        %5862 = vdwg.mxu0
        %5863 = vmatpush.bf16.msra.mxu0 0
        %5864 = vmatpush.bf16.msra.mxu0 0
        %5865 = vmatpush.bf16.msra.mxu0 0
        %5866 = vmatpush.bf16.msra.mxu0 0
        %5867 = vmatpush.bf16.msra.mxu0 %v5740
        %5868 = vmatpush.bf16.msra.mxu0 %v5725
        %5869 = vmatpush.bf16.msra.mxu0 %v5710
        %5870 = vmatpush.bf16.msra.mxu0 %v5695
        %5871 = vmatmul.bf16.gmra.mxu0 %v4560
        %v5872 = vpop.f32.mrf.mxu0
        %v5873 = vadd.f32 %v5481, %v5872
        %v5874 = vpop.f32.mrf.mxu0
        %5875 = vdwg.mxu0
        %5876 = vmatpush.bf16.msra.mxu0 0
        %5877 = vmatpush.bf16.msra.mxu0 0
        %5878 = vmatpush.bf16.msra.mxu0 0
        %5879 = vmatpush.bf16.msra.mxu0 0
        %5880 = vmatpush.bf16.msra.mxu0 %v5741
        %5881 = vmatpush.bf16.msra.mxu0 %v5726
        %5882 = vmatpush.bf16.msra.mxu0 %v5711
        %5883 = vmatpush.bf16.msra.mxu0 %v5696
        %5884 = vmatmul.bf16.gmra.mxu0 %v4560
        %v5885 = vpop.f32.mrf.mxu0
        %v5886 = vadd.f32 %v5482, %v5885
        %v5887 = vpop.f32.mrf.mxu0
        %5888 = vdwg.mxu0
        %5889 = vmatpush.bf16.msra.mxu0 0
        %5890 = vmatpush.bf16.msra.mxu0 0
        %5891 = vmatpush.bf16.msra.mxu0 0
        %5892 = vmatpush.bf16.msra.mxu0 0
        %5893 = vmatpush.bf16.msra.mxu0 %v5742
        %5894 = vmatpush.bf16.msra.mxu0 %v5727
        %5895 = vmatpush.bf16.msra.mxu0 %v5712
        %5896 = vmatpush.bf16.msra.mxu0 %v5697
        %5897 = vmatmul.bf16.gmra.mxu0 %v4560
        %v5898 = vpop.f32.mrf.mxu0
        %v5899 = vadd.f32 %v5483, %v5898
        %v5900 = vpop.f32.mrf.mxu0
        %5901 = vdwg.mxu0
        %5902 = vmatpush.bf16.msra.mxu0 0
        %5903 = vmatpush.bf16.msra.mxu0 0
        %5904 = vmatpush.bf16.msra.mxu0 0
        %5905 = vmatpush.bf16.msra.mxu0 0
        %5906 = vmatpush.bf16.msra.mxu0 %v5743
        %5907 = vmatpush.bf16.msra.mxu0 %v5728
        %5908 = vmatpush.bf16.msra.mxu0 %v5713
        %5909 = vmatpush.bf16.msra.mxu0 %v5698
        %5910 = vmatmul.bf16.gmra.mxu0 %v4560
        %v5911 = vpop.f32.mrf.mxu0
        %v5912 = vadd.f32 %v5484, %v5911
        %v5913 = vpop.f32.mrf.mxu0
        %5914 = vdwg.mxu0
        %5915 = vmatpush.bf16.msra.mxu0 0
        %5916 = vmatpush.bf16.msra.mxu0 0
        %5917 = vmatpush.bf16.msra.mxu0 0
        %5918 = vmatpush.bf16.msra.mxu0 0
        %5919 = vmatpush.bf16.msra.mxu0 %v5744
        %5920 = vmatpush.bf16.msra.mxu0 %v5729
        %5921 = vmatpush.bf16.msra.mxu0 %v5714
        %5922 = vmatpush.bf16.msra.mxu0 %v5699
        %5923 = vmatmul.bf16.gmra.mxu0 %v4560
        %v5924 = vpop.f32.mrf.mxu0
        %v5925 = vadd.f32 %v5485, %v5924
        %v5926 = vpop.f32.mrf.mxu0
        %5927 = vdwg.mxu0
        %5928 = vmatpush.bf16.msra.mxu0 0
        %5929 = vmatpush.bf16.msra.mxu0 0
        %5930 = vmatpush.bf16.msra.mxu0 0
        %5931 = vmatpush.bf16.msra.mxu0 0
        %5932 = vmatpush.bf16.msra.mxu0 %v5745
        %5933 = vmatpush.bf16.msra.mxu0 %v5730
        %5934 = vmatpush.bf16.msra.mxu0 %v5715
        %5935 = vmatpush.bf16.msra.mxu0 %v5700
        %5936 = vmatmul.bf16.gmra.mxu0 %v4560
        %v5937 = vpop.f32.mrf.mxu0
        %v5938 = vadd.f32 %v5486, %v5937
        %v5939 = vpop.f32.mrf.mxu0
        %5940 = vdwg.mxu0
        %5941 = vmatpush.bf16.msra.mxu0 0
        %5942 = vmatpush.bf16.msra.mxu0 0
        %5943 = vmatpush.bf16.msra.mxu0 0
        %5944 = vmatpush.bf16.msra.mxu0 0
        %5945 = vmatpush.bf16.msra.mxu0 %v5746
        %5946 = vmatpush.bf16.msra.mxu0 %v5731
        %5947 = vmatpush.bf16.msra.mxu0 %v5716
        %5948 = vmatpush.bf16.msra.mxu0 %v5701
        %5949 = vmatmul.bf16.gmra.mxu0 %v4560
        %v5950 = vpop.f32.mrf.mxu0
        %v5951 = vadd.f32 %v5487, %v5950
        %v5952 = vpop.f32.mrf.mxu0
        %5953 = vdwg.mxu0
        %5954 = vmatpush.bf16.msra.mxu0 0
        %5955 = vmatpush.bf16.msra.mxu0 0
        %5956 = vmatpush.bf16.msra.mxu0 0
        %5957 = vmatpush.bf16.msra.mxu0 0
        %5958 = vmatpush.bf16.msra.mxu0 %v5747
        %5959 = vmatpush.bf16.msra.mxu0 %v5732
        %5960 = vmatpush.bf16.msra.mxu0 %v5717
        %5961 = vmatpush.bf16.msra.mxu0 %v5702
        %5962 = vmatmul.bf16.gmra.mxu0 %v4560
        %v5963 = vpop.f32.mrf.mxu0
        %v5964 = vadd.f32 %v5488, %v5963
        %v5965 = vpop.f32.mrf.mxu0
        %5966 = vdwg.mxu0
        %5967 = vmatpush.bf16.msra.mxu0 0
        %5968 = vmatpush.bf16.msra.mxu0 0
        %5969 = vmatpush.bf16.msra.mxu0 0
        %5970 = vmatpush.bf16.msra.mxu0 0
        %5971 = vmatpush.bf16.msra.mxu0 %v5748
        %5972 = vmatpush.bf16.msra.mxu0 %v5733
        %5973 = vmatpush.bf16.msra.mxu0 %v5718
        %5974 = vmatpush.bf16.msra.mxu0 %v5703
        %5975 = vmatmul.bf16.gmra.mxu0 %v4560
        %v5976 = vpop.f32.mrf.mxu0
        %v5977 = vadd.f32 %v5489, %v5976
        %v5978 = vpop.f32.mrf.mxu0
        %5979 = vdwg.mxu0
        %5980 = vmatpush.bf16.msra.mxu0 0
        %5981 = vmatpush.bf16.msra.mxu0 0
        %5982 = vmatpush.bf16.msra.mxu0 0
        %5983 = vmatpush.bf16.msra.mxu0 0
        %5984 = vmatpush.bf16.msra.mxu0 %v5749
        %5985 = vmatpush.bf16.msra.mxu0 %v5734
        %5986 = vmatpush.bf16.msra.mxu0 %v5719
        %5987 = vmatpush.bf16.msra.mxu0 %v5704
        %5988 = vmatmul.bf16.gmra.mxu0 %v4560
        %v5989 = vpop.f32.mrf.mxu0
        %v5990 = vadd.f32 %v5490, %v5989
        %v5991 = vpop.f32.mrf.mxu0
        %5992 = vdwg.mxu0
        %5993 = vmatpush.bf16.msra.mxu0 0
        %5994 = vmatpush.bf16.msra.mxu0 0
        %5995 = vmatpush.bf16.msra.mxu0 0
        %5996 = vmatpush.bf16.msra.mxu0 0
        %5997 = vmatpush.bf16.msra.mxu0 %v5750
        %5998 = vmatpush.bf16.msra.mxu0 %v5735
        %5999 = vmatpush.bf16.msra.mxu0 %v5720
        %6000 = vmatpush.bf16.msra.mxu0 %v5705
        %6001 = vmatmul.bf16.gmra.mxu0 %v4560
        %v6002 = vpop.f32.mrf.mxu0
        %v6003 = vadd.f32 %v5491, %v6002
        %v6004 = vpop.f32.mrf.mxu0
        %6005 = vdwg.mxu0
        %6006 = vst [vmem:[#allocation2 + $0xf0] sm:$0xff] %v5821
        %6007 = vst [vmem:[#allocation2 + $0xf8] sm:$0xff] %v5834
        %6008 = vst [vmem:[#allocation2 + $0x100] sm:$0xff] %v5847
        %6009 = vst [vmem:[#allocation2 + $0x108] sm:$0xff] %v5860
        %6010 = vst [vmem:[#allocation2 + $0x110] sm:$0xff] %v5873
        %6011 = vst [vmem:[#allocation2 + $0x118] sm:$0xff] %v5886
        %6012 = vst [vmem:[#allocation2 + $0x120] sm:$0xff] %v5899
        %6013 = vst [vmem:[#allocation2 + $0x128] sm:$0xff] %v5912
        %6014 = vst [vmem:[#allocation2 + $0x130] sm:$0xff] %v5925
        %6015 = vst [vmem:[#allocation2 + $0x138] sm:$0xff] %v5938
        %6016 = vst [vmem:[#allocation2 + $0x140] sm:$0xff] %v5951
        %6017 = vst [vmem:[#allocation2 + $0x148] sm:$0xff] %v5964
        %6018 = vst [vmem:[#allocation2 + $0x150] sm:$0xff] %v5977
        %6019 = vst [vmem:[#allocation2 + $0x158] sm:$0xff] %v5990
        %6020 = vst [vmem:[#allocation2 + $0x160] sm:$0xff] %v6003
        %v6021 = vmax.f32 %v5404, %v5821
        %v6022 = vmax.f32 %v5405, %v5834
        %v6023 = vmax.f32 %v5406, %v5847
        %v6024 = vmax.f32 %v5407, %v5860
        %v6025 = vmax.f32 %v5408, %v5873
        %v6026 = vmax.f32 %v6021, %v5886
        %v6027 = vmax.f32 %v6022, %v5899
        %v6028 = vmax.f32 %v6023, %v5912
        %v6029 = vmax.f32 %v6024, %v5925
        %v6030 = vmax.f32 %v6025, %v5938
        %v6031 = vmax.f32 %v6026, %v5951
        %v6032 = vmax.f32 %v6027, %v5964
        %v6033 = vmax.f32 %v6028, %v5977
        %v6034 = vmax.f32 %v6029, %v5990
        %v6035 = vmax.f32 %v6030, %v6003
        %v6036 = vld [vmem:[#allocation2] sm:$0xff]
        %v6037 = vld [vmem:[#allocation2 + $0x8] sm:$0xff]
        %v6038 = vld [vmem:[#allocation2 + $0x10] sm:$0xff]
        %v6039 = vld [vmem:[#allocation2 + $0x18] sm:$0xff]
        %v6040 = vld [vmem:[#allocation2 + $0x20] sm:$0xff]
        %v6041 = vsub.f32 %v6036, %v6031
        %v6042 = vsub.f32 %v6037, %v6032
        %v6043 = vsub.f32 %v6038, %v6033
        %v6044 = vsub.f32 %v6039, %v6034
        %v6045 = vsub.f32 %v6040, %v6035
        %v6046 = vmul.f32 %v6041, 1.442695
        %v6047 = vpow.pop %v6046
        %v6048 = vmul.f32 %v6042, 1.442695
        %v6049 = vpow.pop %v6048
        %v6050 = vmul.f32 %v6043, 1.442695
        %v6051 = vpow.pop %v6050
        %v6052 = vmul.f32 %v6044, 1.442695
        %v6053 = vpow.pop %v6052
        %v6054 = vmul.f32 %v6045, 1.442695
        %v6055 = vpow.pop %v6054
        %6056 = vst [vmem:[#allocation2] sm:$0xff] %v6047
        %6057 = vst [vmem:[#allocation2 + $0x8] sm:$0xff] %v6049
        %6058 = vst [vmem:[#allocation2 + $0x10] sm:$0xff] %v6051
        %6059 = vst [vmem:[#allocation2 + $0x18] sm:$0xff] %v6053
        %6060 = vst [vmem:[#allocation2 + $0x20] sm:$0xff] %v6055
        %v6061 = vadd.f32 %v6047, 0.0
        %v6062 = vadd.f32 %v6049, 0.0
        %v6063 = vadd.f32 %v6051, 0.0
        %v6064 = vadd.f32 %v6053, 0.0
        %v6065 = vadd.f32 %v6055, 0.0
        %v6066 = vld [vmem:[#allocation2 + $0x28] sm:$0xff]
        %v6067 = vld [vmem:[#allocation2 + $0x30] sm:$0xff]
        %v6068 = vld [vmem:[#allocation2 + $0x38] sm:$0xff]
        %v6069 = vld [vmem:[#allocation2 + $0x40] sm:$0xff]
        %v6070 = vld [vmem:[#allocation2 + $0x48] sm:$0xff]
        %v6071 = vsub.f32 %v6066, %v6031
        %v6072 = vsub.f32 %v6067, %v6032
        %v6073 = vsub.f32 %v6068, %v6033
        %v6074 = vsub.f32 %v6069, %v6034
        %v6075 = vsub.f32 %v6070, %v6035
        %v6076 = vmul.f32 %v6071, 1.442695
        %v6077 = vpow.pop %v6076
        %v6078 = vmul.f32 %v6072, 1.442695
        %v6079 = vpow.pop %v6078
        %v6080 = vmul.f32 %v6073, 1.442695
        %v6081 = vpow.pop %v6080
        %v6082 = vmul.f32 %v6074, 1.442695
        %v6083 = vpow.pop %v6082
        %v6084 = vmul.f32 %v6075, 1.442695
        %v6085 = vpow.pop %v6084
        %6086 = vst [vmem:[#allocation2 + $0x28] sm:$0xff] %v6077
        %6087 = vst [vmem:[#allocation2 + $0x30] sm:$0xff] %v6079
        %6088 = vst [vmem:[#allocation2 + $0x38] sm:$0xff] %v6081
        %6089 = vst [vmem:[#allocation2 + $0x40] sm:$0xff] %v6083
        %6090 = vst [vmem:[#allocation2 + $0x48] sm:$0xff] %v6085
        %v6091 = vadd.f32 %v6061, %v6077
        %v6092 = vadd.f32 %v6062, %v6079
        %v6093 = vadd.f32 %v6063, %v6081
        %v6094 = vadd.f32 %v6064, %v6083
        %v6095 = vadd.f32 %v6065, %v6085
        %v6096 = vld [vmem:[#allocation2 + $0x50] sm:$0xff]
        %v6097 = vld [vmem:[#allocation2 + $0x58] sm:$0xff]
        %v6098 = vld [vmem:[#allocation2 + $0x60] sm:$0xff]
        %v6099 = vld [vmem:[#allocation2 + $0x68] sm:$0xff]
        %v6100 = vld [vmem:[#allocation2 + $0x70] sm:$0xff]
        %v6101 = vsub.f32 %v6096, %v6031
        %v6102 = vsub.f32 %v6097, %v6032
        %v6103 = vsub.f32 %v6098, %v6033
        %v6104 = vsub.f32 %v6099, %v6034
        %v6105 = vsub.f32 %v6100, %v6035
        %v6106 = vmul.f32 %v6101, 1.442695
        %v6107 = vpow.pop %v6106
        %v6108 = vmul.f32 %v6102, 1.442695
        %v6109 = vpow.pop %v6108
        %v6110 = vmul.f32 %v6103, 1.442695
        %v6111 = vpow.pop %v6110
        %v6112 = vmul.f32 %v6104, 1.442695
        %v6113 = vpow.pop %v6112
        %v6114 = vmul.f32 %v6105, 1.442695
        %v6115 = vpow.pop %v6114
        %6116 = vst [vmem:[#allocation2 + $0x50] sm:$0xff] %v6107
        %6117 = vst [vmem:[#allocation2 + $0x58] sm:$0xff] %v6109
        %6118 = vst [vmem:[#allocation2 + $0x60] sm:$0xff] %v6111
        %6119 = vst [vmem:[#allocation2 + $0x68] sm:$0xff] %v6113
        %6120 = vst [vmem:[#allocation2 + $0x70] sm:$0xff] %v6115
        %v6121 = vadd.f32 %v6091, %v6107
        %v6122 = vadd.f32 %v6092, %v6109
        %v6123 = vadd.f32 %v6093, %v6111
        %v6124 = vadd.f32 %v6094, %v6113
        %v6125 = vadd.f32 %v6095, %v6115
        %v6126 = vld [vmem:[#allocation2 + $0x78] sm:$0xff]
        %v6127 = vld [vmem:[#allocation2 + $0x80] sm:$0xff]
        %v6128 = vld [vmem:[#allocation2 + $0x88] sm:$0xff]
        %v6129 = vld [vmem:[#allocation2 + $0x90] sm:$0xff]
        %v6130 = vld [vmem:[#allocation2 + $0x98] sm:$0xff]
        %v6131 = vsub.f32 %v6126, %v6031
        %v6132 = vsub.f32 %v6127, %v6032
        %v6133 = vsub.f32 %v6128, %v6033
        %v6134 = vsub.f32 %v6129, %v6034
        %v6135 = vsub.f32 %v6130, %v6035
        %v6136 = vmul.f32 %v6131, 1.442695
        %v6137 = vpow.pop %v6136
        %v6138 = vmul.f32 %v6132, 1.442695
        %v6139 = vpow.pop %v6138
        %v6140 = vmul.f32 %v6133, 1.442695
        %v6141 = vpow.pop %v6140
        %v6142 = vmul.f32 %v6134, 1.442695
        %v6143 = vpow.pop %v6142
        %v6144 = vmul.f32 %v6135, 1.442695
        %v6145 = vpow.pop %v6144
        %6146 = vst [vmem:[#allocation2 + $0x78] sm:$0xff] %v6137
        %6147 = vst [vmem:[#allocation2 + $0x80] sm:$0xff] %v6139
        %6148 = vst [vmem:[#allocation2 + $0x88] sm:$0xff] %v6141
        %6149 = vst [vmem:[#allocation2 + $0x90] sm:$0xff] %v6143
        %6150 = vst [vmem:[#allocation2 + $0x98] sm:$0xff] %v6145
        %v6151 = vadd.f32 %v6121, %v6137
        %v6152 = vadd.f32 %v6122, %v6139
        %v6153 = vadd.f32 %v6123, %v6141
        %v6154 = vadd.f32 %v6124, %v6143
        %v6155 = vadd.f32 %v6125, %v6145
        %v6156 = vld [vmem:[#allocation2 + $0xa0] sm:$0xff]
        %v6157 = vld [vmem:[#allocation2 + $0xa8] sm:$0xff]
        %v6158 = vld [vmem:[#allocation2 + $0xb0] sm:$0xff]
        %v6159 = vld [vmem:[#allocation2 + $0xb8] sm:$0xff]
        %v6160 = vld [vmem:[#allocation2 + $0xc0] sm:$0xff]
        %v6161 = vsub.f32 %v6156, %v6031
        %v6162 = vsub.f32 %v6157, %v6032
        %v6163 = vsub.f32 %v6158, %v6033
        %v6164 = vsub.f32 %v6159, %v6034
        %v6165 = vsub.f32 %v6160, %v6035
        %v6166 = vmul.f32 %v6161, 1.442695
        %v6167 = vpow.pop %v6166
        %v6168 = vmul.f32 %v6162, 1.442695
        %v6169 = vpow.pop %v6168
        %v6170 = vmul.f32 %v6163, 1.442695
        %v6171 = vpow.pop %v6170
        %v6172 = vmul.f32 %v6164, 1.442695
        %v6173 = vpow.pop %v6172
        %v6174 = vmul.f32 %v6165, 1.442695
        %v6175 = vpow.pop %v6174
        %6176 = vst [vmem:[#allocation2 + $0xa0] sm:$0xff] %v6167
        %6177 = vst [vmem:[#allocation2 + $0xa8] sm:$0xff] %v6169
        %6178 = vst [vmem:[#allocation2 + $0xb0] sm:$0xff] %v6171
        %6179 = vst [vmem:[#allocation2 + $0xb8] sm:$0xff] %v6173
        %6180 = vst [vmem:[#allocation2 + $0xc0] sm:$0xff] %v6175
        %v6181 = vadd.f32 %v6151, %v6167
        %v6182 = vadd.f32 %v6152, %v6169
        %v6183 = vadd.f32 %v6153, %v6171
        %v6184 = vadd.f32 %v6154, %v6173
        %v6185 = vadd.f32 %v6155, %v6175
        %v6186 = vld [vmem:[#allocation2 + $0xc8] sm:$0xff]
        %v6187 = vld [vmem:[#allocation2 + $0xd0] sm:$0xff]
        %v6188 = vld [vmem:[#allocation2 + $0xd8] sm:$0xff]
        %v6189 = vld [vmem:[#allocation2 + $0xe0] sm:$0xff]
        %v6190 = vld [vmem:[#allocation2 + $0xe8] sm:$0xff]
        %v6191 = vsub.f32 %v6186, %v6031
        %v6192 = vsub.f32 %v6187, %v6032
        %v6193 = vsub.f32 %v6188, %v6033
        %v6194 = vsub.f32 %v6189, %v6034
        %v6195 = vsub.f32 %v6190, %v6035
        %v6196 = vmul.f32 %v6191, 1.442695
        %v6197 = vpow.pop %v6196
        %v6198 = vmul.f32 %v6192, 1.442695
        %v6199 = vpow.pop %v6198
        %v6200 = vmul.f32 %v6193, 1.442695
        %v6201 = vpow.pop %v6200
        %v6202 = vmul.f32 %v6194, 1.442695
        %v6203 = vpow.pop %v6202
        %v6204 = vmul.f32 %v6195, 1.442695
        %v6205 = vpow.pop %v6204
        %6206 = vst [vmem:[#allocation2 + $0xc8] sm:$0xff] %v6197
        %6207 = vst [vmem:[#allocation2 + $0xd0] sm:$0xff] %v6199
        %6208 = vst [vmem:[#allocation2 + $0xd8] sm:$0xff] %v6201
        %6209 = vst [vmem:[#allocation2 + $0xe0] sm:$0xff] %v6203
        %6210 = vst [vmem:[#allocation2 + $0xe8] sm:$0xff] %v6205
        %v6211 = vadd.f32 %v6181, %v6197
        %v6212 = vadd.f32 %v6182, %v6199
        %v6213 = vadd.f32 %v6183, %v6201
        %v6214 = vadd.f32 %v6184, %v6203
        %v6215 = vadd.f32 %v6185, %v6205
        %v6216 = vld [vmem:[#allocation2 + $0xf0] sm:$0xff]
        %v6217 = vld [vmem:[#allocation2 + $0xf8] sm:$0xff]
        %v6218 = vld [vmem:[#allocation2 + $0x100] sm:$0xff]
        %v6219 = vld [vmem:[#allocation2 + $0x108] sm:$0xff]
        %v6220 = vld [vmem:[#allocation2 + $0x110] sm:$0xff]
        %v6221 = vsub.f32 %v6216, %v6031
        %v6222 = vsub.f32 %v6217, %v6032
        %v6223 = vsub.f32 %v6218, %v6033
        %v6224 = vsub.f32 %v6219, %v6034
        %v6225 = vsub.f32 %v6220, %v6035
        %v6226 = vmul.f32 %v6221, 1.442695
        %v6227 = vpow.pop %v6226
        %v6228 = vmul.f32 %v6222, 1.442695
        %v6229 = vpow.pop %v6228
        %v6230 = vmul.f32 %v6223, 1.442695
        %v6231 = vpow.pop %v6230
        %v6232 = vmul.f32 %v6224, 1.442695
        %v6233 = vpow.pop %v6232
        %v6234 = vmul.f32 %v6225, 1.442695
        %v6235 = vpow.pop %v6234
        %6236 = vst [vmem:[#allocation2 + $0xf0] sm:$0xff] %v6227
        %6237 = vst [vmem:[#allocation2 + $0xf8] sm:$0xff] %v6229
        %6238 = vst [vmem:[#allocation2 + $0x100] sm:$0xff] %v6231
        %6239 = vst [vmem:[#allocation2 + $0x108] sm:$0xff] %v6233
        %6240 = vst [vmem:[#allocation2 + $0x110] sm:$0xff] %v6235
        %v6241 = vadd.f32 %v6211, %v6227
        %v6242 = vadd.f32 %v6212, %v6229
        %v6243 = vadd.f32 %v6213, %v6231
        %v6244 = vadd.f32 %v6214, %v6233
        %v6245 = vadd.f32 %v6215, %v6235
        %v6246 = vld [vmem:[#allocation2 + $0x118] sm:$0xff]
        %v6247 = vld [vmem:[#allocation2 + $0x120] sm:$0xff]
        %v6248 = vld [vmem:[#allocation2 + $0x128] sm:$0xff]
        %v6249 = vld [vmem:[#allocation2 + $0x130] sm:$0xff]
        %v6250 = vld [vmem:[#allocation2 + $0x138] sm:$0xff]
        %v6251 = vsub.f32 %v6246, %v6031
        %v6252 = vsub.f32 %v6247, %v6032
        %v6253 = vsub.f32 %v6248, %v6033
        %v6254 = vsub.f32 %v6249, %v6034
        %v6255 = vsub.f32 %v6250, %v6035
        %v6256 = vmul.f32 %v6251, 1.442695
        %v6257 = vpow.pop %v6256
        %v6258 = vmul.f32 %v6252, 1.442695
        %v6259 = vpow.pop %v6258
        %v6260 = vmul.f32 %v6253, 1.442695
        %v6261 = vpow.pop %v6260
        %v6262 = vmul.f32 %v6254, 1.442695
        %v6263 = vpow.pop %v6262
        %v6264 = vmul.f32 %v6255, 1.442695
        %v6265 = vpow.pop %v6264
        %6266 = vst [vmem:[#allocation2 + $0x118] sm:$0xff] %v6257
        %6267 = vst [vmem:[#allocation2 + $0x120] sm:$0xff] %v6259
        %6268 = vst [vmem:[#allocation2 + $0x128] sm:$0xff] %v6261
        %6269 = vst [vmem:[#allocation2 + $0x130] sm:$0xff] %v6263
        %6270 = vst [vmem:[#allocation2 + $0x138] sm:$0xff] %v6265
        %v6271 = vadd.f32 %v6241, %v6257
        %v6272 = vadd.f32 %v6242, %v6259
        %v6273 = vadd.f32 %v6243, %v6261
        %v6274 = vadd.f32 %v6244, %v6263
        %v6275 = vadd.f32 %v6245, %v6265
        %v6276 = vld [vmem:[#allocation2 + $0x140] sm:$0xff]
        %v6277 = vld [vmem:[#allocation2 + $0x148] sm:$0xff]
        %v6278 = vld [vmem:[#allocation2 + $0x150] sm:$0xff]
        %v6279 = vld [vmem:[#allocation2 + $0x158] sm:$0xff]
        %v6280 = vld [vmem:[#allocation2 + $0x160] sm:$0xff]
        %v6281 = vsub.f32 %v6276, %v6031
        %v6282 = vsub.f32 %v6277, %v6032
        %v6283 = vsub.f32 %v6278, %v6033
        %v6284 = vsub.f32 %v6279, %v6034
        %v6285 = vsub.f32 %v6280, %v6035
        %v6286 = vmul.f32 %v6281, 1.442695
        %v6287 = vpow.pop %v6286
        %v6288 = vmul.f32 %v6282, 1.442695
        %v6289 = vpow.pop %v6288
        %v6290 = vmul.f32 %v6283, 1.442695
        %v6291 = vpow.pop %v6290
        %v6292 = vmul.f32 %v6284, 1.442695
        %v6293 = vpow.pop %v6292
        %v6294 = vmul.f32 %v6285, 1.442695
        %v6295 = vpow.pop %v6294
        %6296 = vst [vmem:[#allocation2 + $0x140] sm:$0xff] %v6287
        %6297 = vst [vmem:[#allocation2 + $0x148] sm:$0xff] %v6289
        %6298 = vst [vmem:[#allocation2 + $0x150] sm:$0xff] %v6291
        %6299 = vst [vmem:[#allocation2 + $0x158] sm:$0xff] %v6293
        %6300 = vst [vmem:[#allocation2 + $0x160] sm:$0xff] %v6295
        %v6301 = vadd.f32 %v6271, %v6287
        %v6302 = vadd.f32 %v6272, %v6289
        %v6303 = vadd.f32 %v6273, %v6291
        %v6304 = vadd.f32 %v6274, %v6293
        %v6305 = vadd.f32 %v6275, %v6295
        %v6306 = vrcp.pop %v6301
        %v6307 = vmul.f32 %v6301, %v6306
        %v6308 = vsub.f32 1.0, %v6307
        %v6309 = vmul.f32 %v6306, %v6308
        %v6310 = vadd.f32 %v6306, %v6309
        %vm6311 = vweird.f32 %v6301
        %vm6312 = vweird.f32 %v6306
        %vm6313 = vmor %vm6311, %vm6312
        %v6314 = vsel %vm6313, %v6306, %v6310
        %v6315 = vand.u32 2147483647, %v6301
        %vm6316 = vcmp.eq.f32.partialorder %v6315, 8.507059e+37
        %v6317 = vand.u32 %v6301, 2147483648
        %v6318 = vor.u32 1.1754944e-38, %v6317
        %v6319 = vsel %vm6316, %v6318, %v6314
        %v6320 = vmul.f32 1.0, %v6319
        %v6321 = vrcp.pop %v6302
        %v6322 = vmul.f32 %v6302, %v6321
        %v6323 = vsub.f32 1.0, %v6322
        %v6324 = vmul.f32 %v6321, %v6323
        %v6325 = vadd.f32 %v6321, %v6324
        %vm6326 = vweird.f32 %v6302
        %vm6327 = vweird.f32 %v6321
        %vm6328 = vmor %vm6326, %vm6327
        %v6329 = vsel %vm6328, %v6321, %v6325
        %v6330 = vand.u32 2147483647, %v6302
        %vm6331 = vcmp.eq.f32.partialorder %v6330, 8.507059e+37
        %v6332 = vand.u32 %v6302, 2147483648
        %v6333 = vor.u32 1.1754944e-38, %v6332
        %v6334 = vsel %vm6331, %v6333, %v6329
        %v6335 = vmul.f32 1.0, %v6334
        %v6336 = vrcp.pop %v6303
        %v6337 = vmul.f32 %v6303, %v6336
        %v6338 = vsub.f32 1.0, %v6337
        %v6339 = vmul.f32 %v6336, %v6338
        %v6340 = vadd.f32 %v6336, %v6339
        %vm6341 = vweird.f32 %v6303
        %vm6342 = vweird.f32 %v6336
        %vm6343 = vmor %vm6341, %vm6342
        %v6344 = vsel %vm6343, %v6336, %v6340
        %v6345 = vand.u32 2147483647, %v6303
        %vm6346 = vcmp.eq.f32.partialorder %v6345, 8.507059e+37
        %v6347 = vand.u32 %v6303, 2147483648
        %v6348 = vor.u32 1.1754944e-38, %v6347
        %v6349 = vsel %vm6346, %v6348, %v6344
        %v6350 = vmul.f32 1.0, %v6349
        %v6351 = vrcp.pop %v6304
        %v6352 = vmul.f32 %v6304, %v6351
        %v6353 = vsub.f32 1.0, %v6352
        %v6354 = vmul.f32 %v6351, %v6353
        %v6355 = vadd.f32 %v6351, %v6354
        %vm6356 = vweird.f32 %v6304
        %vm6357 = vweird.f32 %v6351
        %vm6358 = vmor %vm6356, %vm6357
        %v6359 = vsel %vm6358, %v6351, %v6355
        %v6360 = vand.u32 2147483647, %v6304
        %vm6361 = vcmp.eq.f32.partialorder %v6360, 8.507059e+37
        %v6362 = vand.u32 %v6304, 2147483648
        %v6363 = vor.u32 1.1754944e-38, %v6362
        %v6364 = vsel %vm6361, %v6363, %v6359
        %v6365 = vmul.f32 1.0, %v6364
        %v6366 = vrcp.pop %v6305
        %v6367 = vmul.f32 %v6305, %v6366
        %v6368 = vsub.f32 1.0, %v6367
        %v6369 = vmul.f32 %v6366, %v6368
        %v6370 = vadd.f32 %v6366, %v6369
        %vm6371 = vweird.f32 %v6305
        %vm6372 = vweird.f32 %v6366
        %vm6373 = vmor %vm6371, %vm6372
        %v6374 = vsel %vm6373, %v6366, %v6370
        %v6375 = vand.u32 2147483647, %v6305
        %vm6376 = vcmp.eq.f32.partialorder %v6375, 8.507059e+37
        %v6377 = vand.u32 %v6305, 2147483648
        %v6378 = vor.u32 1.1754944e-38, %v6377
        %v6379 = vsel %vm6376, %v6378, %v6374
        %v6380 = vmul.f32 1.0, %v6379
        %v6381 = vld [vmem:[#allocation2] sm:$0xff]
        %v6382 = vld [vmem:[#allocation2 + $0x8] sm:$0xff]
        %v6383 = vld [vmem:[#allocation2 + $0x10] sm:$0xff]
        %v6384 = vld [vmem:[#allocation2 + $0x18] sm:$0xff]
        %v6385 = vld [vmem:[#allocation2 + $0x20] sm:$0xff]
        %v6386 = vmul.f32 %v6381, %v6320
        %v6387 = vmul.f32 %v6382, %v6335
        %v6388 = vmul.f32 %v6383, %v6350
        %v6389 = vmul.f32 %v6384, %v6365
        %v6390 = vmul.f32 %v6385, %v6380
        %v6391 = vpack.c.bf16 %v6387, %v6386
        %v6392 = vpack.c.bf16 %v6389, %v6388
        %v6393 = vpack.c.bf16 %v6390, %v6390
        %6394 = vst [vmem:[%s501] sm:$0xff] %v6391
        %6395 = vst [vmem:[%s501 + $0x8] sm:$0xff] %v6392
        %6396 = vst [vmem:[%s501 + $0x10] sm:$0xf] %v6393
        %v6397 = vld [vmem:[#allocation2 + $0x28] sm:$0xff]
        %v6398 = vld [vmem:[#allocation2 + $0x30] sm:$0xff]
        %v6399 = vld [vmem:[#allocation2 + $0x38] sm:$0xff]
        %v6400 = vld [vmem:[#allocation2 + $0x40] sm:$0xff]
        %v6401 = vld [vmem:[#allocation2 + $0x48] sm:$0xff]
        %v6402 = vmul.f32 %v6397, %v6320
        %v6403 = vmul.f32 %v6398, %v6335
        %v6404 = vmul.f32 %v6399, %v6350
        %v6405 = vmul.f32 %v6400, %v6365
        %v6406 = vmul.f32 %v6401, %v6380
        %v6407 = vpack.c.bf16 %v6403, %v6402
        %v6408 = vpack.c.bf16 %v6405, %v6404
        %v6409 = vpack.c.bf16 %v6406, %v6406
        %6410 = vst [vmem:[%s501 + $0x14] sm:$0xff] %v6407
        %6411 = vst [vmem:[%s501 + $0x1c] sm:$0xff] %v6408
        %6412 = vst [vmem:[%s501 + $0x24] sm:$0xf] %v6409
        %v6413 = vld [vmem:[#allocation2 + $0x50] sm:$0xff]
        %v6414 = vld [vmem:[#allocation2 + $0x58] sm:$0xff]
        %v6415 = vld [vmem:[#allocation2 + $0x60] sm:$0xff]
        %v6416 = vld [vmem:[#allocation2 + $0x68] sm:$0xff]
        %v6417 = vld [vmem:[#allocation2 + $0x70] sm:$0xff]
        %v6418 = vmul.f32 %v6413, %v6320
        %v6419 = vmul.f32 %v6414, %v6335
        %v6420 = vmul.f32 %v6415, %v6350
        %v6421 = vmul.f32 %v6416, %v6365
        %v6422 = vmul.f32 %v6417, %v6380
        %v6423 = vpack.c.bf16 %v6419, %v6418
        %v6424 = vpack.c.bf16 %v6421, %v6420
        %v6425 = vpack.c.bf16 %v6422, %v6422
        %6426 = vst [vmem:[%s501 + $0x28] sm:$0xff] %v6423
        %6427 = vst [vmem:[%s501 + $0x30] sm:$0xff] %v6424
        %6428 = vst [vmem:[%s501 + $0x38] sm:$0xf] %v6425
        %v6429 = vld [vmem:[#allocation2 + $0x78] sm:$0xff]
        %v6430 = vld [vmem:[#allocation2 + $0x80] sm:$0xff]
        %v6431 = vld [vmem:[#allocation2 + $0x88] sm:$0xff]
        %v6432 = vld [vmem:[#allocation2 + $0x90] sm:$0xff]
        %v6433 = vld [vmem:[#allocation2 + $0x98] sm:$0xff]
        %v6434 = vmul.f32 %v6429, %v6320
        %v6435 = vmul.f32 %v6430, %v6335
        %v6436 = vmul.f32 %v6431, %v6350
        %v6437 = vmul.f32 %v6432, %v6365
        %v6438 = vmul.f32 %v6433, %v6380
        %v6439 = vpack.c.bf16 %v6435, %v6434
        %v6440 = vpack.c.bf16 %v6437, %v6436
        %v6441 = vpack.c.bf16 %v6438, %v6438
        %6442 = vst [vmem:[%s501 + $0x3c] sm:$0xff] %v6439
        %6443 = vst [vmem:[%s501 + $0x44] sm:$0xff] %v6440
        %6444 = vst [vmem:[%s501 + $0x4c] sm:$0xf] %v6441
        %v6445 = vld [vmem:[#allocation2 + $0xa0] sm:$0xff]
        %v6446 = vld [vmem:[#allocation2 + $0xa8] sm:$0xff]
        %v6447 = vld [vmem:[#allocation2 + $0xb0] sm:$0xff]
        %v6448 = vld [vmem:[#allocation2 + $0xb8] sm:$0xff]
        %v6449 = vld [vmem:[#allocation2 + $0xc0] sm:$0xff]
        %v6450 = vmul.f32 %v6445, %v6320
        %v6451 = vmul.f32 %v6446, %v6335
        %v6452 = vmul.f32 %v6447, %v6350
        %v6453 = vmul.f32 %v6448, %v6365
        %v6454 = vmul.f32 %v6449, %v6380
        %v6455 = vpack.c.bf16 %v6451, %v6450
        %v6456 = vpack.c.bf16 %v6453, %v6452
        %v6457 = vpack.c.bf16 %v6454, %v6454
        %6458 = vst [vmem:[%s501 + $0x50] sm:$0xff] %v6455
        %6459 = vst [vmem:[%s501 + $0x58] sm:$0xff] %v6456
        %6460 = vst [vmem:[%s501 + $0x60] sm:$0xf] %v6457
        %v6461 = vld [vmem:[#allocation2 + $0xc8] sm:$0xff]
        %v6462 = vld [vmem:[#allocation2 + $0xd0] sm:$0xff]
        %v6463 = vld [vmem:[#allocation2 + $0xd8] sm:$0xff]
        %v6464 = vld [vmem:[#allocation2 + $0xe0] sm:$0xff]
        %v6465 = vld [vmem:[#allocation2 + $0xe8] sm:$0xff]
        %v6466 = vmul.f32 %v6461, %v6320
        %v6467 = vmul.f32 %v6462, %v6335
        %v6468 = vmul.f32 %v6463, %v6350
        %v6469 = vmul.f32 %v6464, %v6365
        %v6470 = vmul.f32 %v6465, %v6380
        %v6471 = vpack.c.bf16 %v6467, %v6466
        %v6472 = vpack.c.bf16 %v6469, %v6468
        %v6473 = vpack.c.bf16 %v6470, %v6470
        %6474 = vst [vmem:[%s501 + $0x64] sm:$0xff] %v6471
        %6475 = vst [vmem:[%s501 + $0x6c] sm:$0xff] %v6472
        %6476 = vst [vmem:[%s501 + $0x74] sm:$0xf] %v6473
        %v6477 = vld [vmem:[#allocation2 + $0xf0] sm:$0xff]
        %v6478 = vld [vmem:[#allocation2 + $0xf8] sm:$0xff]
        %v6479 = vld [vmem:[#allocation2 + $0x100] sm:$0xff]
        %v6480 = vld [vmem:[#allocation2 + $0x108] sm:$0xff]
        %v6481 = vld [vmem:[#allocation2 + $0x110] sm:$0xff]
        %v6482 = vmul.f32 %v6477, %v6320
        %v6483 = vmul.f32 %v6478, %v6335
        %v6484 = vmul.f32 %v6479, %v6350
        %v6485 = vmul.f32 %v6480, %v6365
        %v6486 = vmul.f32 %v6481, %v6380
        %v6487 = vpack.c.bf16 %v6483, %v6482
        %v6488 = vpack.c.bf16 %v6485, %v6484
        %v6489 = vpack.c.bf16 %v6486, %v6486
        %6490 = vst [vmem:[%s501 + $0x78] sm:$0xff] %v6487
        %6491 = vst [vmem:[%s501 + $0x80] sm:$0xff] %v6488
        %6492 = vst [vmem:[%s501 + $0x88] sm:$0xf] %v6489
        %v6493 = vld [vmem:[#allocation2 + $0x118] sm:$0xff]
        %v6494 = vld [vmem:[#allocation2 + $0x120] sm:$0xff]
        %v6495 = vld [vmem:[#allocation2 + $0x128] sm:$0xff]
        %v6496 = vld [vmem:[#allocation2 + $0x130] sm:$0xff]
        %v6497 = vld [vmem:[#allocation2 + $0x138] sm:$0xff]
        %v6498 = vmul.f32 %v6493, %v6320
        %v6499 = vmul.f32 %v6494, %v6335
        %v6500 = vmul.f32 %v6495, %v6350
        %v6501 = vmul.f32 %v6496, %v6365
        %v6502 = vmul.f32 %v6497, %v6380
        %v6503 = vpack.c.bf16 %v6499, %v6498
        %v6504 = vpack.c.bf16 %v6501, %v6500
        %v6505 = vpack.c.bf16 %v6502, %v6502
        %6506 = vst [vmem:[%s501 + $0x8c] sm:$0xff] %v6503
        %6507 = vst [vmem:[%s501 + $0x94] sm:$0xff] %v6504
        %6508 = vst [vmem:[%s501 + $0x9c] sm:$0xf] %v6505
        %v6509 = vld [vmem:[#allocation2 + $0x140] sm:$0xff]
        %v6510 = vld [vmem:[#allocation2 + $0x148] sm:$0xff]
        %v6511 = vld [vmem:[#allocation2 + $0x150] sm:$0xff]
        %v6512 = vld [vmem:[#allocation2 + $0x158] sm:$0xff]
        %v6513 = vld [vmem:[#allocation2 + $0x160] sm:$0xff]
        %v6514 = vmul.f32 %v6509, %v6320
        %v6515 = vmul.f32 %v6510, %v6335
        %v6516 = vmul.f32 %v6511, %v6350
        %v6517 = vmul.f32 %v6512, %v6365
        %v6518 = vmul.f32 %v6513, %v6380
        %v6519 = vpack.c.bf16 %v6515, %v6514
        %v6520 = vpack.c.bf16 %v6517, %v6516
        %v6521 = vpack.c.bf16 %v6518, %v6518
        %6522 = vst [vmem:[%s501 + $0xa0] sm:$0xff] %v6519
        %6523 = vst [vmem:[%s501 + $0xa8] sm:$0xff] %v6520
        %6524 = vst [vmem:[%s501 + $0xb0] sm:$0xf] %v6521
        %s6525 = sand.u32 %s342, 1
        %s6526 = scalar_lea.sflag [#allocation4], %s6525
        %s6527 = sand.u32 %s342, 1
        %s6528 = smul.addr %s6527, 180
        %s6529 = scalar_lea.vmem [#allocation3], %s6528
        %p6530 = scmp.lt.s32.totalorder %s30, 7
        %s6531 = scalar_select %p6530, %s30, 7
        %s6532 = smul.addr %s6531, 8
        %s6533 = scalar_lea.vmem %s15, %s6532
        // Predicated region
        $region77: #{tpu_custom_call.1} parent=75 // pred_check
          %p6534 = pneg %p352
        $region78: #{tpu_custom_call.1} parent=75 // pred_check_branch
          %6536 = sbr.rel (%p6534) target = $region80
        $region79: #{tpu_custom_call.1} parent=75 // pred_region
          %6538 = vsyncadd %s6526, 0
          %s6539 = smul.addr %s30, 45
          %s6540 = smul.addr %s6539, 4
          %s6541 = scalar_lea.hbm %s14, %s6540
          %s6543 = sshll.u32 %s6529, 4
          %s6544 = int_to_ptr.vmem [resolvable:$true] %s6543
          %s6545 = sshll.u32 %s6541, 4
          %s6546 = int_to_ptr.hbm [resolvable:$true] %s6545
          %6548 = dma.vmem_to_hbm [thread:$0]  %s6544, 2880, %s6546, %s6526
        $region80: #{tpu_custom_call.1} parent=75 // pred_fallthru
          _
        // Predicated region
        $region81: #{tpu_custom_call.1} parent=75 // pred_check
          %p6549 = pneg %p378
        $region82: #{tpu_custom_call.1} parent=75 // pred_check_branch
          %6551 = sbr.rel (%p6549) target = $region84
        $region83: #{tpu_custom_call.1} parent=75 // pred_region
          _
        $region84: #{tpu_custom_call.1} parent=75 // pred_fallthru
          _
      $region76: #{tpu_custom_call.1} parent=5 // pred_fallthru
        _
      %p6552 = scmp.le.s32.totalorder 2, %s25
      // Predicated region
      $region85: #{tpu_custom_call.1} parent=5 // pred_check
        %p6553 = pneg %p6552
      $region86: #{tpu_custom_call.1} parent=5 // pred_check_branch
        %6555 = sbr.rel (%p6553) target = $region88
      $region87: #{tpu_custom_call.1} parent=5 // pred_region
        %s6556 = ssub.s32 %s25, 2
        // Predicated region
        $region89: #{tpu_custom_call.1} parent=87 // pred_check
          %p6557 = pneg %p358
        $region90: #{tpu_custom_call.1} parent=87 // pred_check_branch
          %6559 = sbr.rel (%p6557) target = $region92
        $region91: #{tpu_custom_call.1} parent=87 // pred_region
          %s6560 = sand.u32 %s343, 1
          %s6561 = scalar_lea.sflag [#allocation4], %s6560
          %s6562 = sand.u32 %s343, 1
          %s6563 = smul.addr %s6562, 180
          %s6564 = scalar_lea.vmem [#allocation3], %s6563
          %6566 = dma.done %s6561, 2880
        $region92: #{tpu_custom_call.1} parent=87 // pred_fallthru
          _
        // Predicated region
        $region93: #{tpu_custom_call.1} parent=87 // pred_check
          %p6567 = pneg %p384
        $region94: #{tpu_custom_call.1} parent=87 // pred_check_branch
          %6569 = sbr.rel (%p6567) target = $region96
        $region95: #{tpu_custom_call.1} parent=87 // pred_region
          %p6570 = scmp.lt.s32.totalorder %s31, 7
          %s6571 = scalar_select %p6570, %s31, 7
          %s6572 = smul.addr %s6571, 8
          %s6573 = scalar_lea.vmem %s15, %s6572
        $region96: #{tpu_custom_call.1} parent=87 // pred_fallthru
          _
      $region88: #{tpu_custom_call.1} parent=5 // pred_fallthru
        _
    $region6: #{tpu_custom_call.1} parent=1 // loop_footer
      %s29 = sadd.s32 1, %s25
    $region7: #{tpu_custom_call.1} parent=1 // loop_footer_branch
      %24 = sbr.rel target = $region3
    $region8: #{tpu_custom_call.1} parent=1 // loop_exit
      _
    %6574 = vsyncpa [#allocation4], 1
    %s6575 = scalar_lea.sflag [#allocation4], 1
    %6576 = vsyncpa %s6575, 1

</llo_original>
